<compile_context>
chip_gen: v6e
topology: v6e:2x2x1
jax: 0.10.0
libtpu: 0.0.40
codegen_flags: <defaults>
</compile_context>

<pallas_src>
import functools

import numpy as np
import jax
import jax.numpy as jnp
from jax import lax
from jax.experimental import pallas as pl
from jax.experimental.pallas import tpu as pltpu

BN_EPS = 1e-5


# ----------------------------------------------------------------------------
# Parameter setup (glue, numpy): lattice Laplacian inverses, pre-stacked.
# ----------------------------------------------------------------------------
def lattice_edges(image_height, image_width):
    mat_is, mat_js = np.meshgrid(range(image_height), range(image_width))
    centers = np.vstack((mat_is.flatten(), mat_js.flatten())).T
    adjacency = np.array(((0, -1), (0, +1), (-1, 0), (+1, 0)))
    neighbors = (centers[:, None, :] + adjacency).reshape(-1, 2)
    i_valid = (
        (neighbors[:, 0] >= 0) * (neighbors[:, 0] < image_height)
        * (neighbors[:, 1] >= 0) * (neighbors[:, 1] < image_width)
    )
    edges_center = centers.repeat(len(adjacency), axis=0)[i_valid].dot((image_width, 1))
    edges_neighbor = neighbors[i_valid].dot((image_width, 1))
    return edges_center, edges_neighbor


def poisson_system_inverse(log_resistances):
    """float64 inv(zmat + 1), mirroring torch.linalg.solve in double precision."""
    H, W = log_resistances.shape
    ec, en = lattice_edges(H, W)
    g = np.exp(np.asarray(log_resistances, dtype=np.float64)).flatten()
    hw = H * W
    off = np.zeros((hw, hw), dtype=np.float64)
    off[ec, en] = g[ec] + g[en]
    zmat = np.diag(off.sum(axis=1)) - off
    # TODO(synk): the reference runs a float64 torch.linalg.solve per forward; the
    # system matrix is input-independent, so its inverse is precomputed once here and
    # applied in bf16/f32 inside the kernel (small drift, masked by the following BN).
    return np.linalg.inv(zmat + 1.0)


def init_multi_solver_params(key, in_planes, out_planes, image_height, image_width):
    """One MultiSolvePoissonTensor, pre-stacked for a single flattened matmul.

    Returns:
      m_stack:  (in_planes*HW, out_planes*HW) bfloat16; block (c, o) equals
                (weights[o, c] * inv(zmat_{o,c} + 1))^T so that h = x_flat @ m_stack.
      col_sums: (in_planes, out_planes*HW) float32; per-in-plane column sums of the f32
                stack, used to fold the per-channel mean subtraction into the matmul.
    """
    hw = image_height * image_width
    # SolvePoisson.log_resistances: uniform[0,1) per (out_plane, in_plane) pair.
    logr = np.asarray(
        jax.random.uniform(key, (out_planes, in_planes, image_height, image_width),
                           dtype=jnp.float32),
        dtype=np.float64)
    weights = np.ones((out_planes, in_planes), dtype=np.float64)  # SolvePoissonTensor.weights
    # SolvePoissonTensor.bias (init 0.0) is intentionally omitted: a constant
    # per-out-plane shift is exactly cancelled by the training-mode BatchNorm that
    # consumes the solver output inside PoissonBasicBlock.
    m_stack = np.zeros((in_planes * hw, out_planes * hw), dtype=np.float32)
    for o in range(out_planes):
        for c in range(in_planes):
            inv = poisson_system_inverse(logr[o, c])
            m_stack[c * hw:(c + 1) * hw, o * hw:(o + 1) * hw] = \
                (weights[o, c] * inv).T.astype(np.float32)
    col_sums = m_stack.reshape(in_planes, hw, out_planes * hw).sum(axis=1)
    return (jnp.asarray(m_stack, dtype=jnp.bfloat16),
            jnp.asarray(col_sums, dtype=jnp.float32))


# ----------------------------------------------------------------------------
# Fused Pallas kernel: the whole PoissonBasicBlock forward in one invocation.
# ----------------------------------------------------------------------------
def _poisson_block_kernel(x_ref, m1_ref, cs1_ref, m2_ref, cs2_ref, bn_ref,
                          o_ref, a_ref, *, hw):
    # x_ref : (N, C*HW) f32      m1_ref: (C*HW, O*HW) bf16   cs1_ref: (C, O*HW) f32
    # m2_ref: (O*HW, O*HW) bf16  cs2_ref: (O, O*HW) f32
    # bn_ref: (4, O) f32 SMEM  (rows: gamma1, beta1, gamma2, beta2)
    # o_ref : (N, O*HW) f32      a_ref: (N, O*HW) f32 VMEM scratch (post-bn1 act.)
    n, chw = x_ref.shape
    ohw = o_ref.shape[1]
    c_in, o_pl = chw // hw, ohw // hw
    pad = (o_pl - c_in) // 2
    inv_cnt = 1.0 / float(n * hw)

    x = x_ref[...]                                              # (N, C*HW) f32

    # --- solver1: single MXU matmul; per-in-channel mean centering folded in -------
    h1 = jnp.dot(x.astype(jnp.bfloat16), m1_ref[...],
                 preferred_element_type=jnp.float32)            # (N, O*HW) f32
    corr1 = jnp.zeros((1, ohw), jnp.float32)
    for c in range(c_in):
        mean_c = jnp.sum(x[:, c * hw:(c + 1) * hw], keepdims=True) * inv_cnt  # (1,1)
        corr1 = corr1 + mean_c * cs1_ref[c:c + 1, :]
    h1 = h1 - corr1

    # --- bn1 (training-mode batch stats) + ReLU per out-channel --------------------
    # a1 is stashed in VMEM scratch; the solver2 centering correction is accumulated
    # on the fly from the per-channel means of a1.
    # TODO(synk): BatchNorm running-mean/var buffer updates are training side effects
    # that are not part of the returned value; they are not modeled here.
    corr2 = jnp.zeros((1, ohw), jnp.float32)
    for o in range(o_pl):
        blk = h1[:, o * hw:(o + 1) * hw]
        mu = jnp.mean(blk, keepdims=True)                       # (1,1)
        var = jnp.mean(jnp.square(blk - mu), keepdims=True)     # (1,1), biased
        scale = bn_ref[0, o] * lax.rsqrt(var + BN_EPS)
        act = jnp.maximum((blk - mu) * scale + bn_ref[1, o], 0.0)
        a_ref[:, o * hw:(o + 1) * hw] = act
        corr2 = corr2 + (jnp.sum(act, keepdims=True) * inv_cnt) * cs2_ref[o:o + 1, :]

    # --- solver2: single MXU matmul with centering folded in -----------------------
    h2 = jnp.dot(a_ref[...].astype(jnp.bfloat16), m2_ref[...],
                 preferred_element_type=jnp.float32) - corr2

    # --- bn2 + channel-zero-padded shortcut + ReLU ----------------------------------
    for o in range(o_pl):
        blk = h2[:, o * hw:(o + 1) * hw]
        mu = jnp.mean(blk, keepdims=True)
        var = jnp.mean(jnp.square(blk - mu), keepdims=True)
        scale = bn_ref[2, o] * lax.rsqrt(var + BN_EPS)
        y = (blk - mu) * scale + bn_ref[3, o]
        if pad <= o < pad + c_in:              # shortcut channel o == input channel o-pad
            y = y + x[:, (o - pad) * hw:(o - pad + 1) * hw]
        o_ref[:, o * hw:(o + 1) * hw] = jnp.maximum(y, 0.0)


# ----------------------------------------------------------------------------
# Wrapper.
# ----------------------------------------------------------------------------
@jax.jit
def poisson_basic_block(x_nchw, params):
    """Forward pass of PoissonBasicBlock. x_nchw: (N, C_in, H, W) float32."""
    n, c_in, h, w = x_nchw.shape
    hw = h * w
    m1, cs1 = params["solver1"]
    m2, cs2 = params["solver2"]
    bn = params["bn"]                              # (4, O) f32
    out_planes = m1.shape[1] // hw

    if c_in > out_planes:
        raise ValueError("planes may only increase with layers")
    if (out_planes - c_in) % 2:
        raise ValueError("planes may vary by even numbers only")

    # NCHW -> (N, C*HW): free row-major reshape, no transpose.
    x_flat = x_nchw.reshape(n, c_in * hw).astype(jnp.float32)

    # Whole block in ONE pallas_call; everything (~3 MiB) is VMEM-resident, single
    # buffered (no grid), well under the default scoped VMEM limit on v5e/v6e/v7x.
    # TODO(synk): for much larger configs (weights scale as O*C*HW^2) switch to a
    # gridded, pl.Buffered() weight-streaming form, especially on v7x (64 MiB VMEM).
    vmem = pl.BlockSpec(memory_space=pltpu.MemorySpace.VMEM)
    smem = pl.BlockSpec(memory_space=pltpu.MemorySpace.SMEM)
    out_flat = pl.pallas_call(
        functools.partial(_poisson_block_kernel, hw=hw),
        out_shape=jax.ShapeDtypeStruct((n, out_planes * hw), jnp.float32),
        in_specs=[vmem, vmem, vmem, vmem, vmem, smem],
        out_specs=vmem,
        scratch_shapes=[pltpu.VMEM((n, out_planes * hw), jnp.float32)],
    )(x_flat, m1, cs1, m2, cs2, bn)

    return out_flat.reshape(n, out_planes, h, w)


# ----------------------------------------------------------------------------
# Main.
# ----------------------------------------------------------------------------
if __name__ == "__main__":
    N, IN_PLANES, H, W, OUT_PLANES = 2, 2, 16, 16, 4

    key = jax.random.PRNGKey(0)
    k_x, k_s1, k_s2 = jax.random.split(key, 3)

    x = jax.random.normal(k_x, (N, IN_PLANES, H, W), dtype=jnp.float32)

    M1, CS1 = init_multi_solver_params(k_s1, IN_PLANES, OUT_PLANES, H, W)
    M2, CS2 = init_multi_solver_params(k_s2, OUT_PLANES, OUT_PLANES, H, W)
    gamma = jnp.ones((1, OUT_PLANES), jnp.float32)
    beta = jnp.zeros((1, OUT_PLANES), jnp.float32)
    params = {
        "solver1": (M1, CS1),
        "solver2": (M2, CS2),
        "bn": jnp.concatenate([gamma, beta, gamma, beta], axis=0),  # g1, b1, g2, b2
    }

    out = poisson_basic_block(x, params)
    out = jax.block_until_ready(out)
    assert out.shape == (N, OUT_PLANES, H, W), out.shape
    assert out.dtype == jnp.float32
    assert bool(jnp.all(jnp.isfinite(out)))
    print("KERNEL_OK")
</pallas_src>

<mosaic_0001>
module attributes {stable_mosaic.version = 11 : i64} {
  func.func @_poisson_block_kernel(%arg0: memref<2x512xf32, #tpu.memory_space<vmem>>, %arg1: memref<512x1024xbf16, #tpu.memory_space<vmem>>, %arg2: memref<2x1024xf32, #tpu.memory_space<vmem>>, %arg3: memref<1024x1024xbf16, #tpu.memory_space<vmem>>, %arg4: memref<4x1024xf32, #tpu.memory_space<vmem>>, %arg5: memref<4x4xf32, #tpu.memory_space<smem>>, %arg6: memref<2x1024xf32, #tpu.memory_space<vmem>>, %arg7: memref<2x1024xf32, #tpu.memory_space<vmem>>) attributes {dimension_semantics = [], scalar_prefetch = 0 : i64, scratch_operands = 1 : i64, tpu.core_type = #tpu.core_type<tc>} {
    %c0 = arith.constant 0 : index
    %c0_0 = arith.constant 0 : index
    %0 = vector.load %arg0[%c0, %c0_0] : memref<2x512xf32, #tpu.memory_space<vmem>>, vector<2x512xf32>
    %1 = arith.truncf %0 : vector<2x512xf32> to vector<2x512xbf16>
    %c0_1 = arith.constant 0 : index
    %c0_2 = arith.constant 0 : index
    %2 = vector.load %arg1[%c0_1, %c0_2] : memref<512x1024xbf16, #tpu.memory_space<vmem>>, vector<512x1024xbf16>
    %cst = arith.constant dense<0.000000e+00> : vector<2x1024xf32>
    %3 = tpu.matmul %1, %2, %cst {dimension_numbers = #tpu.dot_dimension_numbers<[1], [0], [0], [1], [0, 0, 1, 1], [], []>} : vector<2x512xbf16>, vector<512x1024xbf16>, vector<2x1024xf32> -> vector<2x1024xf32>
    %cst_3 = arith.constant 0.000000e+00 : f32
    %4 = vector.broadcast %cst_3 : f32 to vector<1x1024xf32>
    %5 = vector.extract_strided_slice %0 {offsets = [0, 0], sizes = [2, 256], strides = [1, 1]} : vector<2x512xf32> to vector<2x256xf32>
    %6 = vector.shape_cast %5 : vector<2x256xf32> to vector<1x2x256xf32>
    %cst_4 = arith.constant dense<0.000000e+00> : vector<1xf32>
    %7 = vector.multi_reduction <add>, %6, %cst_4 [1, 2] : vector<1x2x256xf32> to vector<1xf32>
    %8 = vector.shape_cast %7 : vector<1xf32> to vector<1x1x1xf32>
    %9 = vector.extract %8[0, 0, 0] : f32 from vector<1x1x1xf32>
    %10 = vector.broadcast %9 : f32 to vector<1x1xf32>
    %cst_5 = arith.constant 0.001953125 : f32
    %11 = vector.broadcast %cst_5 : f32 to vector<1x1xf32>
    %12 = arith.mulf %10, %11 : vector<1x1xf32>
    %c0_6 = arith.constant 0 : index
    %c0_7 = arith.constant 0 : index
    %13 = vector.load %arg2[%c0_6, %c0_7] : memref<2x1024xf32, #tpu.memory_space<vmem>>, vector<1x1024xf32>
    %14 = vector.broadcast %12 : vector<1x1xf32> to vector<1x1024xf32>
    %15 = arith.mulf %14, %13 : vector<1x1024xf32>
    %16 = arith.addf %4, %15 : vector<1x1024xf32>
    %17 = vector.extract_strided_slice %0 {offsets = [0, 256], sizes = [2, 256], strides = [1, 1]} : vector<2x512xf32> to vector<2x256xf32>
    %18 = vector.shape_cast %17 : vector<2x256xf32> to vector<1x2x256xf32>
    %cst_8 = arith.constant dense<0.000000e+00> : vector<1xf32>
    %19 = vector.multi_reduction <add>, %18, %cst_8 [1, 2] : vector<1x2x256xf32> to vector<1xf32>
    %20 = vector.shape_cast %19 : vector<1xf32> to vector<1x1x1xf32>
    %21 = vector.extract %20[0, 0, 0] : f32 from vector<1x1x1xf32>
    %22 = vector.broadcast %21 : f32 to vector<1x1xf32>
    %cst_9 = arith.constant 0.001953125 : f32
    %23 = vector.broadcast %cst_9 : f32 to vector<1x1xf32>
    %24 = arith.mulf %22, %23 : vector<1x1xf32>
    %c1 = arith.constant 1 : index
    %c0_10 = arith.constant 0 : index
    %25 = vector.load %arg2[%c1, %c0_10] : memref<2x1024xf32, #tpu.memory_space<vmem>>, vector<1x1024xf32>
    %26 = vector.broadcast %24 : vector<1x1xf32> to vector<1x1024xf32>
    %27 = arith.mulf %26, %25 : vector<1x1024xf32>
    %28 = arith.addf %16, %27 : vector<1x1024xf32>
    %29 = vector.broadcast %28 : vector<1x1024xf32> to vector<2x1024xf32>
    %30 = arith.subf %3, %29 : vector<2x1024xf32>
    %cst_11 = arith.constant 0.000000e+00 : f32
    %31 = vector.broadcast %cst_11 : f32 to vector<1x1024xf32>
    %32 = vector.extract_strided_slice %30 {offsets = [0, 0], sizes = [2, 256], strides = [1, 1]} : vector<2x1024xf32> to vector<2x256xf32>
    %33 = vector.shape_cast %32 : vector<2x256xf32> to vector<1x2x256xf32>
    %cst_12 = arith.constant dense<0.000000e+00> : vector<1xf32>
    %34 = vector.multi_reduction <add>, %33, %cst_12 [1, 2] : vector<1x2x256xf32> to vector<1xf32>
    %35 = vector.shape_cast %34 : vector<1xf32> to vector<1x1x1xf32>
    %36 = vector.extract %35[0, 0, 0] : f32 from vector<1x1x1xf32>
    %37 = vector.broadcast %36 : f32 to vector<1x1xf32>
    %cst_13 = arith.constant 5.120000e+02 : f32
    %38 = vector.broadcast %cst_13 : f32 to vector<1x1xf32>
    %39 = arith.divf %37, %38 : vector<1x1xf32>
    %40 = vector.broadcast %39 : vector<1x1xf32> to vector<2x256xf32>
    %41 = arith.subf %32, %40 : vector<2x256xf32>
    %42 = arith.mulf %41, %41 : vector<2x256xf32>
    %43 = vector.shape_cast %42 : vector<2x256xf32> to vector<1x2x256xf32>
    %cst_14 = arith.constant dense<0.000000e+00> : vector<1xf32>
    %44 = vector.multi_reduction <add>, %43, %cst_14 [1, 2] : vector<1x2x256xf32> to vector<1xf32>
    %45 = vector.shape_cast %44 : vector<1xf32> to vector<1x1x1xf32>
    %46 = vector.extract %45[0, 0, 0] : f32 from vector<1x1x1xf32>
    %47 = vector.broadcast %46 : f32 to vector<1x1xf32>
    %cst_15 = arith.constant 5.120000e+02 : f32
    %48 = vector.broadcast %cst_15 : f32 to vector<1x1xf32>
    %49 = arith.divf %47, %48 : vector<1x1xf32>
    %c0_16 = arith.constant 0 : index
    %c0_17 = arith.constant 0 : index
    %50 = memref.load %arg5[%c0_16, %c0_17] : memref<4x4xf32, #tpu.memory_space<smem>>
    %cst_18 = arith.constant 9.99999974E-6 : f32
    %51 = vector.broadcast %cst_18 : f32 to vector<1x1xf32>
    %52 = arith.addf %49, %51 : vector<1x1xf32>
    %53 = math.rsqrt %52 : vector<1x1xf32>
    %54 = vector.broadcast %50 : f32 to vector<1x1xf32>
    %55 = arith.mulf %54, %53 : vector<1x1xf32>
    %56 = vector.broadcast %39 : vector<1x1xf32> to vector<2x256xf32>
    %57 = arith.subf %32, %56 : vector<2x256xf32>
    %58 = vector.broadcast %55 : vector<1x1xf32> to vector<2x256xf32>
    %59 = arith.mulf %57, %58 : vector<2x256xf32>
    %c1_19 = arith.constant 1 : index
    %c0_20 = arith.constant 0 : index
    %60 = memref.load %arg5[%c1_19, %c0_20] : memref<4x4xf32, #tpu.memory_space<smem>>
    %61 = vector.broadcast %60 : f32 to vector<2x256xf32>
    %62 = arith.addf %59, %61 : vector<2x256xf32>
    %cst_21 = arith.constant 0.000000e+00 : f32
    %63 = vector.broadcast %cst_21 : f32 to vector<2x256xf32>
    %64 = arith.maximumf %62, %63 : vector<2x256xf32>
    %c0_22 = arith.constant 0 : index
    %c0_23 = arith.constant 0 : index
    %65 = vector.load %arg7[%c0_22, %c0_23] : memref<2x1024xf32, #tpu.memory_space<vmem>>, vector<2x256xf32>
    tpu.vector_store %arg7[%c0_22, %c0_23], %64 {strides = array<i32>} : memref<2x1024xf32, #tpu.memory_space<vmem>>, vector<2x256xf32>,
    %66 = vector.shape_cast %64 : vector<2x256xf32> to vector<1x2x256xf32>
    %cst_24 = arith.constant dense<0.000000e+00> : vector<1xf32>
    %67 = vector.multi_reduction <add>, %66, %cst_24 [1, 2] : vector<1x2x256xf32> to vector<1xf32>
    %68 = vector.shape_cast %67 : vector<1xf32> to vector<1x1x1xf32>
    %69 = vector.extract %68[0, 0, 0] : f32 from vector<1x1x1xf32>
    %70 = vector.broadcast %69 : f32 to vector<1x1xf32>
    %cst_25 = arith.constant 0.001953125 : f32
    %71 = vector.broadcast %cst_25 : f32 to vector<1x1xf32>
    %72 = arith.mulf %70, %71 : vector<1x1xf32>
    %c0_26 = arith.constant 0 : index
    %c0_27 = arith.constant 0 : index
    %73 = vector.load %arg4[%c0_26, %c0_27] : memref<4x1024xf32, #tpu.memory_space<vmem>>, vector<1x1024xf32>
    %74 = vector.broadcast %72 : vector<1x1xf32> to vector<1x1024xf32>
    %75 = arith.mulf %74, %73 : vector<1x1024xf32>
    %76 = arith.addf %31, %75 : vector<1x1024xf32>
    %77 = vector.extract_strided_slice %30 {offsets = [0, 256], sizes = [2, 256], strides = [1, 1]} : vector<2x1024xf32> to vector<2x256xf32>
    %78 = vector.shape_cast %77 : vector<2x256xf32> to vector<1x2x256xf32>
    %cst_28 = arith.constant dense<0.000000e+00> : vector<1xf32>
    %79 = vector.multi_reduction <add>, %78, %cst_28 [1, 2] : vector<1x2x256xf32> to vector<1xf32>
    %80 = vector.shape_cast %79 : vector<1xf32> to vector<1x1x1xf32>
    %81 = vector.extract %80[0, 0, 0] : f32 from vector<1x1x1xf32>
    %82 = vector.broadcast %81 : f32 to vector<1x1xf32>
    %cst_29 = arith.constant 5.120000e+02 : f32
    %83 = vector.broadcast %cst_29 : f32 to vector<1x1xf32>
    %84 = arith.divf %82, %83 : vector<1x1xf32>
    %85 = vector.broadcast %84 : vector<1x1xf32> to vector<2x256xf32>
    %86 = arith.subf %77, %85 : vector<2x256xf32>
    %87 = arith.mulf %86, %86 : vector<2x256xf32>
    %88 = vector.shape_cast %87 : vector<2x256xf32> to vector<1x2x256xf32>
    %cst_30 = arith.constant dense<0.000000e+00> : vector<1xf32>
    %89 = vector.multi_reduction <add>, %88, %cst_30 [1, 2] : vector<1x2x256xf32> to vector<1xf32>
    %90 = vector.shape_cast %89 : vector<1xf32> to vector<1x1x1xf32>
    %91 = vector.extract %90[0, 0, 0] : f32 from vector<1x1x1xf32>
    %92 = vector.broadcast %91 : f32 to vector<1x1xf32>
    %cst_31 = arith.constant 5.120000e+02 : f32
    %93 = vector.broadcast %cst_31 : f32 to vector<1x1xf32>
    %94 = arith.divf %92, %93 : vector<1x1xf32>
    %c0_32 = arith.constant 0 : index
    %c1_33 = arith.constant 1 : index
    %95 = memref.load %arg5[%c0_32, %c1_33] : memref<4x4xf32, #tpu.memory_space<smem>>
    %cst_34 = arith.constant 9.99999974E-6 : f32
    %96 = vector.broadcast %cst_34 : f32 to vector<1x1xf32>
    %97 = arith.addf %94, %96 : vector<1x1xf32>
    %98 = math.rsqrt %97 : vector<1x1xf32>
    %99 = vector.broadcast %95 : f32 to vector<1x1xf32>
    %100 = arith.mulf %99, %98 : vector<1x1xf32>
    %101 = vector.broadcast %84 : vector<1x1xf32> to vector<2x256xf32>
    %102 = arith.subf %77, %101 : vector<2x256xf32>
    %103 = vector.broadcast %100 : vector<1x1xf32> to vector<2x256xf32>
    %104 = arith.mulf %102, %103 : vector<2x256xf32>
    %c1_35 = arith.constant 1 : index
    %c1_36 = arith.constant 1 : index
    %105 = memref.load %arg5[%c1_35, %c1_36] : memref<4x4xf32, #tpu.memory_space<smem>>
    %106 = vector.broadcast %105 : f32 to vector<2x256xf32>
    %107 = arith.addf %104, %106 : vector<2x256xf32>
    %cst_37 = arith.constant 0.000000e+00 : f32
    %108 = vector.broadcast %cst_37 : f32 to vector<2x256xf32>
    %109 = arith.maximumf %107, %108 : vector<2x256xf32>
    %c0_38 = arith.constant 0 : index
    %c256 = arith.constant 256 : index
    %110 = vector.load %arg7[%c0_38, %c256] : memref<2x1024xf32, #tpu.memory_space<vmem>>, vector<2x256xf32>
    tpu.vector_store %arg7[%c0_38, %c256], %109 {strides = array<i32>} : memref<2x1024xf32, #tpu.memory_space<vmem>>, vector<2x256xf32>,
    %111 = vector.shape_cast %109 : vector<2x256xf32> to vector<1x2x256xf32>
    %cst_39 = arith.constant dense<0.000000e+00> : vector<1xf32>
    %112 = vector.multi_reduction <add>, %111, %cst_39 [1, 2] : vector<1x2x256xf32> to vector<1xf32>
    %113 = vector.shape_cast %112 : vector<1xf32> to vector<1x1x1xf32>
    %114 = vector.extract %113[0, 0, 0] : f32 from vector<1x1x1xf32>
    %115 = vector.broadcast %114 : f32 to vector<1x1xf32>
    %cst_40 = arith.constant 0.001953125 : f32
    %116 = vector.broadcast %cst_40 : f32 to vector<1x1xf32>
    %117 = arith.mulf %115, %116 : vector<1x1xf32>
    %c1_41 = arith.constant 1 : index
    %c0_42 = arith.constant 0 : index
    %118 = vector.load %arg4[%c1_41, %c0_42] : memref<4x1024xf32, #tpu.memory_space<vmem>>, vector<1x1024xf32>
    %119 = vector.broadcast %117 : vector<1x1xf32> to vector<1x1024xf32>
    %120 = arith.mulf %119, %118 : vector<1x1024xf32>
    %121 = arith.addf %76, %120 : vector<1x1024xf32>
    %122 = vector.extract_strided_slice %30 {offsets = [0, 512], sizes = [2, 256], strides = [1, 1]} : vector<2x1024xf32> to vector<2x256xf32>
    %123 = vector.shape_cast %122 : vector<2x256xf32> to vector<1x2x256xf32>
    %cst_43 = arith.constant dense<0.000000e+00> : vector<1xf32>
    %124 = vector.multi_reduction <add>, %123, %cst_43 [1, 2] : vector<1x2x256xf32> to vector<1xf32>
    %125 = vector.shape_cast %124 : vector<1xf32> to vector<1x1x1xf32>
    %126 = vector.extract %125[0, 0, 0] : f32 from vector<1x1x1xf32>
    %127 = vector.broadcast %126 : f32 to vector<1x1xf32>
    %cst_44 = arith.constant 5.120000e+02 : f32
    %128 = vector.broadcast %cst_44 : f32 to vector<1x1xf32>
    %129 = arith.divf %127, %128 : vector<1x1xf32>
    %130 = vector.broadcast %129 : vector<1x1xf32> to vector<2x256xf32>
    %131 = arith.subf %122, %130 : vector<2x256xf32>
    %132 = arith.mulf %131, %131 : vector<2x256xf32>
    %133 = vector.shape_cast %132 : vector<2x256xf32> to vector<1x2x256xf32>
    %cst_45 = arith.constant dense<0.000000e+00> : vector<1xf32>
    %134 = vector.multi_reduction <add>, %133, %cst_45 [1, 2] : vector<1x2x256xf32> to vector<1xf32>
    %135 = vector.shape_cast %134 : vector<1xf32> to vector<1x1x1xf32>
    %136 = vector.extract %135[0, 0, 0] : f32 from vector<1x1x1xf32>
    %137 = vector.broadcast %136 : f32 to vector<1x1xf32>
    %cst_46 = arith.constant 5.120000e+02 : f32
    %138 = vector.broadcast %cst_46 : f32 to vector<1x1xf32>
    %139 = arith.divf %137, %138 : vector<1x1xf32>
    %c0_47 = arith.constant 0 : index
    %c2 = arith.constant 2 : index
    %140 = memref.load %arg5[%c0_47, %c2] : memref<4x4xf32, #tpu.memory_space<smem>>
    %cst_48 = arith.constant 9.99999974E-6 : f32
    %141 = vector.broadcast %cst_48 : f32 to vector<1x1xf32>
    %142 = arith.addf %139, %141 : vector<1x1xf32>
    %143 = math.rsqrt %142 : vector<1x1xf32>
    %144 = vector.broadcast %140 : f32 to vector<1x1xf32>
    %145 = arith.mulf %144, %143 : vector<1x1xf32>
    %146 = vector.broadcast %129 : vector<1x1xf32> to vector<2x256xf32>
    %147 = arith.subf %122, %146 : vector<2x256xf32>
    %148 = vector.broadcast %145 : vector<1x1xf32> to vector<2x256xf32>
    %149 = arith.mulf %147, %148 : vector<2x256xf32>
    %c1_49 = arith.constant 1 : index
    %c2_50 = arith.constant 2 : index
    %150 = memref.load %arg5[%c1_49, %c2_50] : memref<4x4xf32, #tpu.memory_space<smem>>
    %151 = vector.broadcast %150 : f32 to vector<2x256xf32>
    %152 = arith.addf %149, %151 : vector<2x256xf32>
    %cst_51 = arith.constant 0.000000e+00 : f32
    %153 = vector.broadcast %cst_51 : f32 to vector<2x256xf32>
    %154 = arith.maximumf %152, %153 : vector<2x256xf32>
    %c0_52 = arith.constant 0 : index
    %c512 = arith.constant 512 : index
    %155 = vector.load %arg7[%c0_52, %c512] : memref<2x1024xf32, #tpu.memory_space<vmem>>, vector<2x256xf32>
    tpu.vector_store %arg7[%c0_52, %c512], %154 {strides = array<i32>} : memref<2x1024xf32, #tpu.memory_space<vmem>>, vector<2x256xf32>,
    %156 = vector.shape_cast %154 : vector<2x256xf32> to vector<1x2x256xf32>
    %cst_53 = arith.constant dense<0.000000e+00> : vector<1xf32>
    %157 = vector.multi_reduction <add>, %156, %cst_53 [1, 2] : vector<1x2x256xf32> to vector<1xf32>
    %158 = vector.shape_cast %157 : vector<1xf32> to vector<1x1x1xf32>
    %159 = vector.extract %158[0, 0, 0] : f32 from vector<1x1x1xf32>
    %160 = vector.broadcast %159 : f32 to vector<1x1xf32>
    %cst_54 = arith.constant 0.001953125 : f32
    %161 = vector.broadcast %cst_54 : f32 to vector<1x1xf32>
    %162 = arith.mulf %160, %161 : vector<1x1xf32>
    %c2_55 = arith.constant 2 : index
    %c0_56 = arith.constant 0 : index
    %163 = vector.load %arg4[%c2_55, %c0_56] : memref<4x1024xf32, #tpu.memory_space<vmem>>, vector<1x1024xf32>
    %164 = vector.broadcast %162 : vector<1x1xf32> to vector<1x1024xf32>
    %165 = arith.mulf %164, %163 : vector<1x1024xf32>
    %166 = arith.addf %121, %165 : vector<1x1024xf32>
    %167 = vector.extract_strided_slice %30 {offsets = [0, 768], sizes = [2, 256], strides = [1, 1]} : vector<2x1024xf32> to vector<2x256xf32>
    %168 = vector.shape_cast %167 : vector<2x256xf32> to vector<1x2x256xf32>
    %cst_57 = arith.constant dense<0.000000e+00> : vector<1xf32>
    %169 = vector.multi_reduction <add>, %168, %cst_57 [1, 2] : vector<1x2x256xf32> to vector<1xf32>
    %170 = vector.shape_cast %169 : vector<1xf32> to vector<1x1x1xf32>
    %171 = vector.extract %170[0, 0, 0] : f32 from vector<1x1x1xf32>
    %172 = vector.broadcast %171 : f32 to vector<1x1xf32>
    %cst_58 = arith.constant 5.120000e+02 : f32
    %173 = vector.broadcast %cst_58 : f32 to vector<1x1xf32>
    %174 = arith.divf %172, %173 : vector<1x1xf32>
    %175 = vector.broadcast %174 : vector<1x1xf32> to vector<2x256xf32>
    %176 = arith.subf %167, %175 : vector<2x256xf32>
    %177 = arith.mulf %176, %176 : vector<2x256xf32>
    %178 = vector.shape_cast %177 : vector<2x256xf32> to vector<1x2x256xf32>
    %cst_59 = arith.constant dense<0.000000e+00> : vector<1xf32>
    %179 = vector.multi_reduction <add>, %178, %cst_59 [1, 2] : vector<1x2x256xf32> to vector<1xf32>
    %180 = vector.shape_cast %179 : vector<1xf32> to vector<1x1x1xf32>
    %181 = vector.extract %180[0, 0, 0] : f32 from vector<1x1x1xf32>
    %182 = vector.broadcast %181 : f32 to vector<1x1xf32>
    %cst_60 = arith.constant 5.120000e+02 : f32
    %183 = vector.broadcast %cst_60 : f32 to vector<1x1xf32>
    %184 = arith.divf %182, %183 : vector<1x1xf32>
    %c0_61 = arith.constant 0 : index
    %c3 = arith.constant 3 : index
    %185 = memref.load %arg5[%c0_61, %c3] : memref<4x4xf32, #tpu.memory_space<smem>>
    %cst_62 = arith.constant 9.99999974E-6 : f32
    %186 = vector.broadcast %cst_62 : f32 to vector<1x1xf32>
    %187 = arith.addf %184, %186 : vector<1x1xf32>
    %188 = math.rsqrt %187 : vector<1x1xf32>
    %189 = vector.broadcast %185 : f32 to vector<1x1xf32>
    %190 = arith.mulf %189, %188 : vector<1x1xf32>
    %191 = vector.broadcast %174 : vector<1x1xf32> to vector<2x256xf32>
    %192 = arith.subf %167, %191 : vector<2x256xf32>
    %193 = vector.broadcast %190 : vector<1x1xf32> to vector<2x256xf32>
    %194 = arith.mulf %192, %193 : vector<2x256xf32>
    %c1_63 = arith.constant 1 : index
    %c3_64 = arith.constant 3 : index
    %195 = memref.load %arg5[%c1_63, %c3_64] : memref<4x4xf32, #tpu.memory_space<smem>>
    %196 = vector.broadcast %195 : f32 to vector<2x256xf32>
    %197 = arith.addf %194, %196 : vector<2x256xf32>
    %cst_65 = arith.constant 0.000000e+00 : f32
    %198 = vector.broadcast %cst_65 : f32 to vector<2x256xf32>
    %199 = arith.maximumf %197, %198 : vector<2x256xf32>
    %c0_66 = arith.constant 0 : index
    %c768 = arith.constant 768 : index
    %200 = vector.load %arg7[%c0_66, %c768] : memref<2x1024xf32, #tpu.memory_space<vmem>>, vector<2x256xf32>
    tpu.vector_store %arg7[%c0_66, %c768], %199 {strides = array<i32>} : memref<2x1024xf32, #tpu.memory_space<vmem>>, vector<2x256xf32>,
    %201 = vector.shape_cast %199 : vector<2x256xf32> to vector<1x2x256xf32>
    %cst_67 = arith.constant dense<0.000000e+00> : vector<1xf32>
    %202 = vector.multi_reduction <add>, %201, %cst_67 [1, 2] : vector<1x2x256xf32> to vector<1xf32>
    %203 = vector.shape_cast %202 : vector<1xf32> to vector<1x1x1xf32>
    %204 = vector.extract %203[0, 0, 0] : f32 from vector<1x1x1xf32>
    %205 = vector.broadcast %204 : f32 to vector<1x1xf32>
    %cst_68 = arith.constant 0.001953125 : f32
    %206 = vector.broadcast %cst_68 : f32 to vector<1x1xf32>
    %207 = arith.mulf %205, %206 : vector<1x1xf32>
    %c3_69 = arith.constant 3 : index
    %c0_70 = arith.constant 0 : index
    %208 = vector.load %arg4[%c3_69, %c0_70] : memref<4x1024xf32, #tpu.memory_space<vmem>>, vector<1x1024xf32>
    %209 = vector.broadcast %207 : vector<1x1xf32> to vector<1x1024xf32>
    %210 = arith.mulf %209, %208 : vector<1x1024xf32>
    %211 = arith.addf %166, %210 : vector<1x1024xf32>
    %c0_71 = arith.constant 0 : index
    %c0_72 = arith.constant 0 : index
    %212 = vector.load %arg7[%c0_71, %c0_72] : memref<2x1024xf32, #tpu.memory_space<vmem>>, vector<2x1024xf32>
    %213 = arith.truncf %212 : vector<2x1024xf32> to vector<2x1024xbf16>
    %c0_73 = arith.constant 0 : index
    %c0_74 = arith.constant 0 : index
    %214 = vector.load %arg3[%c0_73, %c0_74] : memref<1024x1024xbf16, #tpu.memory_space<vmem>>, vector<1024x1024xbf16>
    %cst_75 = arith.constant dense<0.000000e+00> : vector<2x1024xf32>
    %215 = tpu.matmul %213, %214, %cst_75 {dimension_numbers = #tpu.dot_dimension_numbers<[1], [0], [0], [1], [0, 0, 1, 1], [], []>} : vector<2x1024xbf16>, vector<1024x1024xbf16>, vector<2x1024xf32> -> vector<2x1024xf32>
    %216 = vector.broadcast %211 : vector<1x1024xf32> to vector<2x1024xf32>
    %217 = arith.subf %215, %216 : vector<2x1024xf32>
    %218 = vector.extract_strided_slice %217 {offsets = [0, 0], sizes = [2, 256], strides = [1, 1]} : vector<2x1024xf32> to vector<2x256xf32>
    %219 = vector.shape_cast %218 : vector<2x256xf32> to vector<1x2x256xf32>
    %cst_76 = arith.constant dense<0.000000e+00> : vector<1xf32>
    %220 = vector.multi_reduction <add>, %219, %cst_76 [1, 2] : vector<1x2x256xf32> to vector<1xf32>
    %221 = vector.shape_cast %220 : vector<1xf32> to vector<1x1x1xf32>
    %222 = vector.extract %221[0, 0, 0] : f32 from vector<1x1x1xf32>
    %223 = vector.broadcast %222 : f32 to vector<1x1xf32>
    %cst_77 = arith.constant 5.120000e+02 : f32
    %224 = vector.broadcast %cst_77 : f32 to vector<1x1xf32>
    %225 = arith.divf %223, %224 : vector<1x1xf32>
    %226 = vector.broadcast %225 : vector<1x1xf32> to vector<2x256xf32>
    %227 = arith.subf %218, %226 : vector<2x256xf32>
    %228 = arith.mulf %227, %227 : vector<2x256xf32>
    %229 = vector.shape_cast %228 : vector<2x256xf32> to vector<1x2x256xf32>
    %cst_78 = arith.constant dense<0.000000e+00> : vector<1xf32>
    %230 = vector.multi_reduction <add>, %229, %cst_78 [1, 2] : vector<1x2x256xf32> to vector<1xf32>
    %231 = vector.shape_cast %230 : vector<1xf32> to vector<1x1x1xf32>
    %232 = vector.extract %231[0, 0, 0] : f32 from vector<1x1x1xf32>
    %233 = vector.broadcast %232 : f32 to vector<1x1xf32>
    %cst_79 = arith.constant 5.120000e+02 : f32
    %234 = vector.broadcast %cst_79 : f32 to vector<1x1xf32>
    %235 = arith.divf %233, %234 : vector<1x1xf32>
    %c2_80 = arith.constant 2 : index
    %c0_81 = arith.constant 0 : index
    %236 = memref.load %arg5[%c2_80, %c0_81] : memref<4x4xf32, #tpu.memory_space<smem>>
    %cst_82 = arith.constant 9.99999974E-6 : f32
    %237 = vector.broadcast %cst_82 : f32 to vector<1x1xf32>
    %238 = arith.addf %235, %237 : vector<1x1xf32>
    %239 = math.rsqrt %238 : vector<1x1xf32>
    %240 = vector.broadcast %236 : f32 to vector<1x1xf32>
    %241 = arith.mulf %240, %239 : vector<1x1xf32>
    %242 = vector.broadcast %225 : vector<1x1xf32> to vector<2x256xf32>
    %243 = arith.subf %218, %242 : vector<2x256xf32>
    %244 = vector.broadcast %241 : vector<1x1xf32> to vector<2x256xf32>
    %245 = arith.mulf %243, %244 : vector<2x256xf32>
    %c3_83 = arith.constant 3 : index
    %c0_84 = arith.constant 0 : index
    %246 = memref.load %arg5[%c3_83, %c0_84] : memref<4x4xf32, #tpu.memory_space<smem>>
    %247 = vector.broadcast %246 : f32 to vector<2x256xf32>
    %248 = arith.addf %245, %247 : vector<2x256xf32>
    %cst_85 = arith.constant 0.000000e+00 : f32
    %249 = vector.broadcast %cst_85 : f32 to vector<2x256xf32>
    %250 = arith.maximumf %248, %249 : vector<2x256xf32>
    %c0_86 = arith.constant 0 : index
    %c0_87 = arith.constant 0 : index
    %251 = vector.load %arg6[%c0_86, %c0_87] : memref<2x1024xf32, #tpu.memory_space<vmem>>, vector<2x256xf32>
    tpu.vector_store %arg6[%c0_86, %c0_87], %250 {strides = array<i32>} : memref<2x1024xf32, #tpu.memory_space<vmem>>, vector<2x256xf32>,
    %252 = vector.extract_strided_slice %217 {offsets = [0, 256], sizes = [2, 256], strides = [1, 1]} : vector<2x1024xf32> to vector<2x256xf32>
    %253 = vector.shape_cast %252 : vector<2x256xf32> to vector<1x2x256xf32>
    %cst_88 = arith.constant dense<0.000000e+00> : vector<1xf32>
    %254 = vector.multi_reduction <add>, %253, %cst_88 [1, 2] : vector<1x2x256xf32> to vector<1xf32>
    %255 = vector.shape_cast %254 : vector<1xf32> to vector<1x1x1xf32>
    %256 = vector.extract %255[0, 0, 0] : f32 from vector<1x1x1xf32>
    %257 = vector.broadcast %256 : f32 to vector<1x1xf32>
    %cst_89 = arith.constant 5.120000e+02 : f32
    %258 = vector.broadcast %cst_89 : f32 to vector<1x1xf32>
    %259 = arith.divf %257, %258 : vector<1x1xf32>
    %260 = vector.broadcast %259 : vector<1x1xf32> to vector<2x256xf32>
    %261 = arith.subf %252, %260 : vector<2x256xf32>
    %262 = arith.mulf %261, %261 : vector<2x256xf32>
    %263 = vector.shape_cast %262 : vector<2x256xf32> to vector<1x2x256xf32>
    %cst_90 = arith.constant dense<0.000000e+00> : vector<1xf32>
    %264 = vector.multi_reduction <add>, %263, %cst_90 [1, 2] : vector<1x2x256xf32> to vector<1xf32>
    %265 = vector.shape_cast %264 : vector<1xf32> to vector<1x1x1xf32>
    %266 = vector.extract %265[0, 0, 0] : f32 from vector<1x1x1xf32>
    %267 = vector.broadcast %266 : f32 to vector<1x1xf32>
    %cst_91 = arith.constant 5.120000e+02 : f32
    %268 = vector.broadcast %cst_91 : f32 to vector<1x1xf32>
    %269 = arith.divf %267, %268 : vector<1x1xf32>
    %c2_92 = arith.constant 2 : index
    %c1_93 = arith.constant 1 : index
    %270 = memref.load %arg5[%c2_92, %c1_93] : memref<4x4xf32, #tpu.memory_space<smem>>
    %cst_94 = arith.constant 9.99999974E-6 : f32
    %271 = vector.broadcast %cst_94 : f32 to vector<1x1xf32>
    %272 = arith.addf %269, %271 : vector<1x1xf32>
    %273 = math.rsqrt %272 : vector<1x1xf32>
    %274 = vector.broadcast %270 : f32 to vector<1x1xf32>
    %275 = arith.mulf %274, %273 : vector<1x1xf32>
    %276 = vector.broadcast %259 : vector<1x1xf32> to vector<2x256xf32>
    %277 = arith.subf %252, %276 : vector<2x256xf32>
    %278 = vector.broadcast %275 : vector<1x1xf32> to vector<2x256xf32>
    %279 = arith.mulf %277, %278 : vector<2x256xf32>
    %c3_95 = arith.constant 3 : index
    %c1_96 = arith.constant 1 : index
    %280 = memref.load %arg5[%c3_95, %c1_96] : memref<4x4xf32, #tpu.memory_space<smem>>
    %281 = vector.broadcast %280 : f32 to vector<2x256xf32>
    %282 = arith.addf %279, %281 : vector<2x256xf32>
    %283 = vector.extract_strided_slice %0 {offsets = [0, 0], sizes = [2, 256], strides = [1, 1]} : vector<2x512xf32> to vector<2x256xf32>
    %284 = arith.addf %282, %283 : vector<2x256xf32>
    %cst_97 = arith.constant 0.000000e+00 : f32
    %285 = vector.broadcast %cst_97 : f32 to vector<2x256xf32>
    %286 = arith.maximumf %284, %285 : vector<2x256xf32>
    %c0_98 = arith.constant 0 : index
    %c256_99 = arith.constant 256 : index
    %287 = vector.load %arg6[%c0_98, %c256_99] : memref<2x1024xf32, #tpu.memory_space<vmem>>, vector<2x256xf32>
    tpu.vector_store %arg6[%c0_98, %c256_99], %286 {strides = array<i32>} : memref<2x1024xf32, #tpu.memory_space<vmem>>, vector<2x256xf32>,
    %288 = vector.extract_strided_slice %217 {offsets = [0, 512], sizes = [2, 256], strides = [1, 1]} : vector<2x1024xf32> to vector<2x256xf32>
    %289 = vector.shape_cast %288 : vector<2x256xf32> to vector<1x2x256xf32>
    %cst_100 = arith.constant dense<0.000000e+00> : vector<1xf32>
    %290 = vector.multi_reduction <add>, %289, %cst_100 [1, 2] : vector<1x2x256xf32> to vector<1xf32>
    %291 = vector.shape_cast %290 : vector<1xf32> to vector<1x1x1xf32>
    %292 = vector.extract %291[0, 0, 0] : f32 from vector<1x1x1xf32>
    %293 = vector.broadcast %292 : f32 to vector<1x1xf32>
    %cst_101 = arith.constant 5.120000e+02 : f32
    %294 = vector.broadcast %cst_101 : f32 to vector<1x1xf32>
    %295 = arith.divf %293, %294 : vector<1x1xf32>
    %296 = vector.broadcast %295 : vector<1x1xf32> to vector<2x256xf32>
    %297 = arith.subf %288, %296 : vector<2x256xf32>
    %298 = arith.mulf %297, %297 : vector<2x256xf32>
    %299 = vector.shape_cast %298 : vector<2x256xf32> to vector<1x2x256xf32>
    %cst_102 = arith.constant dense<0.000000e+00> : vector<1xf32>
    %300 = vector.multi_reduction <add>, %299, %cst_102 [1, 2] : vector<1x2x256xf32> to vector<1xf32>
    %301 = vector.shape_cast %300 : vector<1xf32> to vector<1x1x1xf32>
    %302 = vector.extract %301[0, 0, 0] : f32 from vector<1x1x1xf32>
    %303 = vector.broadcast %302 : f32 to vector<1x1xf32>
    %cst_103 = arith.constant 5.120000e+02 : f32
    %304 = vector.broadcast %cst_103 : f32 to vector<1x1xf32>
    %305 = arith.divf %303, %304 : vector<1x1xf32>
    %c2_104 = arith.constant 2 : index
    %c2_105 = arith.constant 2 : index
    %306 = memref.load %arg5[%c2_104, %c2_105] : memref<4x4xf32, #tpu.memory_space<smem>>
    %cst_106 = arith.constant 9.99999974E-6 : f32
    %307 = vector.broadcast %cst_106 : f32 to vector<1x1xf32>
    %308 = arith.addf %305, %307 : vector<1x1xf32>
    %309 = math.rsqrt %308 : vector<1x1xf32>
    %310 = vector.broadcast %306 : f32 to vector<1x1xf32>
    %311 = arith.mulf %310, %309 : vector<1x1xf32>
    %312 = vector.broadcast %295 : vector<1x1xf32> to vector<2x256xf32>
    %313 = arith.subf %288, %312 : vector<2x256xf32>
    %314 = vector.broadcast %311 : vector<1x1xf32> to vector<2x256xf32>
    %315 = arith.mulf %313, %314 : vector<2x256xf32>
    %c3_107 = arith.constant 3 : index
    %c2_108 = arith.constant 2 : index
    %316 = memref.load %arg5[%c3_107, %c2_108] : memref<4x4xf32, #tpu.memory_space<smem>>
    %317 = vector.broadcast %316 : f32 to vector<2x256xf32>
    %318 = arith.addf %315, %317 : vector<2x256xf32>
    %319 = vector.extract_strided_slice %0 {offsets = [0, 256], sizes = [2, 256], strides = [1, 1]} : vector<2x512xf32> to vector<2x256xf32>
    %320 = arith.addf %318, %319 : vector<2x256xf32>
    %cst_109 = arith.constant 0.000000e+00 : f32
    %321 = vector.broadcast %cst_109 : f32 to vector<2x256xf32>
    %322 = arith.maximumf %320, %321 : vector<2x256xf32>
    %c0_110 = arith.constant 0 : index
    %c512_111 = arith.constant 512 : index
    %323 = vector.load %arg6[%c0_110, %c512_111] : memref<2x1024xf32, #tpu.memory_space<vmem>>, vector<2x256xf32>
    tpu.vector_store %arg6[%c0_110, %c512_111], %322 {strides = array<i32>} : memref<2x1024xf32, #tpu.memory_space<vmem>>, vector<2x256xf32>,
    %324 = vector.extract_strided_slice %217 {offsets = [0, 768], sizes = [2, 256], strides = [1, 1]} : vector<2x1024xf32> to vector<2x256xf32>
    %325 = vector.shape_cast %324 : vector<2x256xf32> to vector<1x2x256xf32>
    %cst_112 = arith.constant dense<0.000000e+00> : vector<1xf32>
    %326 = vector.multi_reduction <add>, %325, %cst_112 [1, 2] : vector<1x2x256xf32> to vector<1xf32>
    %327 = vector.shape_cast %326 : vector<1xf32> to vector<1x1x1xf32>
    %328 = vector.extract %327[0, 0, 0] : f32 from vector<1x1x1xf32>
    %329 = vector.broadcast %328 : f32 to vector<1x1xf32>
    %cst_113 = arith.constant 5.120000e+02 : f32
    %330 = vector.broadcast %cst_113 : f32 to vector<1x1xf32>
    %331 = arith.divf %329, %330 : vector<1x1xf32>
    %332 = vector.broadcast %331 : vector<1x1xf32> to vector<2x256xf32>
    %333 = arith.subf %324, %332 : vector<2x256xf32>
    %334 = arith.mulf %333, %333 : vector<2x256xf32>
    %335 = vector.shape_cast %334 : vector<2x256xf32> to vector<1x2x256xf32>
    %cst_114 = arith.constant dense<0.000000e+00> : vector<1xf32>
    %336 = vector.multi_reduction <add>, %335, %cst_114 [1, 2] : vector<1x2x256xf32> to vector<1xf32>
    %337 = vector.shape_cast %336 : vector<1xf32> to vector<1x1x1xf32>
    %338 = vector.extract %337[0, 0, 0] : f32 from vector<1x1x1xf32>
    %339 = vector.broadcast %338 : f32 to vector<1x1xf32>
    %cst_115 = arith.constant 5.120000e+02 : f32
    %340 = vector.broadcast %cst_115 : f32 to vector<1x1xf32>
    %341 = arith.divf %339, %340 : vector<1x1xf32>
    %c2_116 = arith.constant 2 : index
    %c3_117 = arith.constant 3 : index
    %342 = memref.load %arg5[%c2_116, %c3_117] : memref<4x4xf32, #tpu.memory_space<smem>>
    %cst_118 = arith.constant 9.99999974E-6 : f32
    %343 = vector.broadcast %cst_118 : f32 to vector<1x1xf32>
    %344 = arith.addf %341, %343 : vector<1x1xf32>
    %345 = math.rsqrt %344 : vector<1x1xf32>
    %346 = vector.broadcast %342 : f32 to vector<1x1xf32>
    %347 = arith.mulf %346, %345 : vector<1x1xf32>
    %348 = vector.broadcast %331 : vector<1x1xf32> to vector<2x256xf32>
    %349 = arith.subf %324, %348 : vector<2x256xf32>
    %350 = vector.broadcast %347 : vector<1x1xf32> to vector<2x256xf32>
    %351 = arith.mulf %349, %350 : vector<2x256xf32>
    %c3_119 = arith.constant 3 : index
    %c3_120 = arith.constant 3 : index
    %352 = memref.load %arg5[%c3_119, %c3_120] : memref<4x4xf32, #tpu.memory_space<smem>>
    %353 = vector.broadcast %352 : f32 to vector<2x256xf32>
    %354 = arith.addf %351, %353 : vector<2x256xf32>
    %cst_121 = arith.constant 0.000000e+00 : f32
    %355 = vector.broadcast %cst_121 : f32 to vector<2x256xf32>
    %356 = arith.maximumf %354, %355 : vector<2x256xf32>
    %c0_122 = arith.constant 0 : index
    %c768_123 = arith.constant 768 : index
    %357 = vector.load %arg6[%c0_122, %c768_123] : memref<2x1024xf32, #tpu.memory_space<vmem>>, vector<2x256xf32>
    tpu.vector_store %arg6[%c0_122, %c768_123], %356 {strides = array<i32>} : memref<2x1024xf32, #tpu.memory_space<vmem>>, vector<2x256xf32>,
    return
  }
}

</mosaic_0001>

<llo_original>
// kernel: poisson_basic_block.1
$region0: #{poisson_basic_block.1}
  #allocation0 [shape = 'u32[]', space=smem, size = 0x4, offset = 0x4, fixed_abs, tag = 'smem constant byte address 0x4 - core index']
  #allocation1 [shape = 'u32[144,128]{1,0:T(1,128)}', space=vmem, size = 0x12000, scoped, tag = 'internal scratch']
  #allocation2 [shape = 'f32[2,1024]{1,0:T(2,128)}', space=vmem, size = 0x2000, scoped, tag = 'scratch operand']
  %s0 = inlined_call_operand.vmem [shape: f32[2,512], index: 0, kind: input, shape index: {}]
  %s1 = inlined_call_operand.hbm [shape: bf16[512,1024], index: 1, kind: input, shape index: {}]
  %s2 = inlined_call_operand.hbm [shape: f32[2,1024], index: 2, kind: input, shape index: {}]
  %s3 = inlined_call_operand.hbm [shape: bf16[1024,1024], index: 3, kind: input, shape index: {}]
  %s4 = inlined_call_operand.hbm [shape: f32[4,1024], index: 4, kind: input, shape index: {}]
  %s5 = inlined_call_operand.hbm [shape: f32[4,4], index: 5, kind: input, shape index: {}]
  %s6 = inlined_call_operand.vmem [shape: f32[2,1024], index: 6, kind: output, shape index: {}]
  %s7 = sld [smem:[#allocation0]]
  $region54: #{poisson_basic_block.1} parent=0
    _
  %s9 = ssub.s32 1, %s7
  %s10 = scalar_select 0, %s9, %s7
  $region1: #{poisson_basic_block.1} parent=0
    #allocation3 [shape = 'u8[1048576]{0}', space=vmem, size = 0x100000, scoped, tag = 'input window, operand 1, single buffered']
    #allocation4 [shape = 's32[1]{0}', space=sflag, size = 0x4, scoped, tag = 'scoped memory for poisson_basic_block.1']
    #allocation5 [shape = 's32[1]{0}', space=sflag, size = 0x4, scoped, tag = 'scoped memory for poisson_basic_block.1']
    #allocation6 [shape = 'u8[8192]{0}', space=vmem, size = 0x2000, scoped, tag = 'input window, operand 2, single buffered']
    #allocation7 [shape = 's32[1]{0}', space=sflag, size = 0x4, scoped, tag = 'scoped memory for poisson_basic_block.1']
    #allocation8 [shape = 'u8[2097152]{0}', space=vmem, size = 0x200000, scoped, tag = 'input window, operand 3, single buffered']
    #allocation9 [shape = 'u8[16384]{0}', space=vmem, size = 0x4000, scoped, tag = 'input window, operand 4, single buffered']
    #allocation10 [shape = 's32[1]{0}', space=sflag, size = 0x4, scoped, tag = 'scoped memory for poisson_basic_block.1']
    #allocation11 [shape = 'u8[2048]{0}', space=smem, size = 0x800, scoped, tag = 'input window, operand 5, single buffered']
    %11 = vsyncpa [#allocation4], 0
    %12 = vsyncpa [#allocation7], 0
    %13 = vsyncpa [#allocation10], 0
    %14 = vsyncpa [#allocation5], 0
    // Predicated region
    $region2: #{poisson_basic_block.1} parent=1 // pred_check
      _
    $region3: #{poisson_basic_block.1} parent=1 // pred_check_branch
      %16 = sbr.rel (0) target = $region5
    $region4: #{poisson_basic_block.1} parent=1 // pred_region
      _
    $region5: #{poisson_basic_block.1} parent=1 // pred_fallthru
      _
    // Predicated region
    $region6: #{poisson_basic_block.1} parent=1 // pred_check
      _
    $region7: #{poisson_basic_block.1} parent=1 // pred_check_branch
      %18 = sbr.rel (0) target = $region9
    $region8: #{poisson_basic_block.1} parent=1 // pred_region
      %s20 = ssub.s32 32768, 32768
      %21 = vsyncadd [#allocation4], %s20
      %s22 = sshll.u32 [#allocation3], 4
      %s23 = int_to_ptr.vmem [resolvable:$true] %s22
      %28 = dma.hbm_to_vmem [thread:$0]  %s1, 32768, %s23, [#allocation4], 512, 512, 32
    $region9: #{poisson_basic_block.1} parent=1 // pred_fallthru
      _
    // Predicated region
    $region10: #{poisson_basic_block.1} parent=1 // pred_check
      _
    $region11: #{poisson_basic_block.1} parent=1 // pred_check_branch
      %30 = sbr.rel (0) target = $region13
    $region12: #{poisson_basic_block.1} parent=1 // pred_region
      %s32 = ssub.s32 256, 256
      %33 = vsyncadd [#allocation7], %s32
      %s35 = sshll.u32 [#allocation6], 4
      %s36 = int_to_ptr.vmem [resolvable:$true] %s35
      %38 = dma.hbm_to_vmem [thread:$0]  %s2, 256, %s36, [#allocation7]
    $region13: #{poisson_basic_block.1} parent=1 // pred_fallthru
      _
    // Predicated region
    $region14: #{poisson_basic_block.1} parent=1 // pred_check
      _
    $region15: #{poisson_basic_block.1} parent=1 // pred_check_branch
      %40 = sbr.rel (0) target = $region17
    $region16: #{poisson_basic_block.1} parent=1 // pred_region
      %s42 = ssub.s32 65536, 65536
      %43 = vsyncadd [#allocation7], %s42
      %s44 = sshll.u32 [#allocation8], 4
      %s45 = int_to_ptr.vmem [resolvable:$true] %s44
      %50 = dma.hbm_to_vmem [thread:$0]  %s3, 65536, %s45, [#allocation7], 512, 512, 32
    $region17: #{poisson_basic_block.1} parent=1 // pred_fallthru
      _
    // Predicated region
    $region18: #{poisson_basic_block.1} parent=1 // pred_check
      _
    $region19: #{poisson_basic_block.1} parent=1 // pred_check_branch
      %52 = sbr.rel (0) target = $region21
    $region20: #{poisson_basic_block.1} parent=1 // pred_region
      %s54 = ssub.s32 512, 512
      %55 = vsyncadd [#allocation10], %s54
      %s57 = sshll.u32 [#allocation9], 4
      %s58 = int_to_ptr.vmem [resolvable:$true] %s57
      %60 = dma.hbm_to_vmem [thread:$0]  %s4, 512, %s58, [#allocation10]
    $region21: #{poisson_basic_block.1} parent=1 // pred_fallthru
      _
    // Predicated region
    $region22: #{poisson_basic_block.1} parent=1 // pred_check
      _
    $region23: #{poisson_basic_block.1} parent=1 // pred_check_branch
      %62 = sbr.rel (0) target = $region25
    $region24: #{poisson_basic_block.1} parent=1 // pred_region
      %s64 = ssub.s32 64, 64
      %65 = vsyncadd [#allocation5], %s64
      %68 = dma.hbm_to_smem %s5, 64, [#allocation11], [#allocation5]
    $region25: #{poisson_basic_block.1} parent=1 // pred_fallthru
      _
    // Predicated region
    $region26: #{poisson_basic_block.1} parent=1 // pred_check
      _
    $region27: #{poisson_basic_block.1} parent=1 // pred_check_branch
      %70 = sbr.rel (0) target = $region29
    $region28: #{poisson_basic_block.1} parent=1 // pred_region
      %71 = dma.done [#allocation4], 32768
    $region29: #{poisson_basic_block.1} parent=1 // pred_fallthru
      _
    // Predicated region
    $region30: #{poisson_basic_block.1} parent=1 // pred_check
      _
    $region31: #{poisson_basic_block.1} parent=1 // pred_check_branch
      %73 = sbr.rel (0) target = $region33
    $region32: #{poisson_basic_block.1} parent=1 // pred_region
      %74 = dma.done [#allocation7], 256
    $region33: #{poisson_basic_block.1} parent=1 // pred_fallthru
      _
    // Predicated region
    $region34: #{poisson_basic_block.1} parent=1 // pred_check
      _
    $region35: #{poisson_basic_block.1} parent=1 // pred_check_branch
      %76 = sbr.rel (0) target = $region37
    $region36: #{poisson_basic_block.1} parent=1 // pred_region
      %77 = dma.done [#allocation7], 65536
    $region37: #{poisson_basic_block.1} parent=1 // pred_fallthru
      _
    // Predicated region
    $region38: #{poisson_basic_block.1} parent=1 // pred_check
      _
    $region39: #{poisson_basic_block.1} parent=1 // pred_check_branch
      %79 = sbr.rel (0) target = $region41
    $region40: #{poisson_basic_block.1} parent=1 // pred_region
      %80 = dma.done [#allocation10], 512
    $region41: #{poisson_basic_block.1} parent=1 // pred_fallthru
      _
    // Predicated region
    $region42: #{poisson_basic_block.1} parent=1 // pred_check
      _
    $region43: #{poisson_basic_block.1} parent=1 // pred_check_branch
      %82 = sbr.rel (0) target = $region45
    $region44: #{poisson_basic_block.1} parent=1 // pred_region
      %83 = dma.done [#allocation5], 64
    $region45: #{poisson_basic_block.1} parent=1 // pred_fallthru
      _
    %84 = sfence
    %v85 = vld [vmem:[%s0] sm:$0xff]
    %v87 = vcombine.high %v85, %v85
    %v89 = vunpack.c.l.s4 1983009808
    %v90 = vunpack.c.0.s8 %v89
    %v91 = vlaneseq
    %v92 = vshrl.u32 %v91, 7
    %v93 = vsub.s32 %v90, %v92
    %v94 = vrot.slane %v85, %v93
    %v96 = vunpack.c.l.s4 1983009808
    %v97 = vunpack.c.0.s8 %v96
    %v98 = vlaneseq
    %v99 = vshrl.u32 %v98, 7
    %v100 = vsub.s32 %v97, %v99
    %v101 = vrot.slane %v87, %v100
    %v102 = vcombine.high %v94, %v94
    %v103 = vcombine.high %v101, %v101
    %v108 = vpack.c.bf16 %v94, %v94
    %v109 = vpack.c.bf16 %v102, %v102
    %v110 = vpack.c.bf16 %v101, %v101
    %v111 = vpack.c.bf16 %v103, %v103
    %v112 = vld [vmem:[#allocation3] sm:$0xff]
    %v113 = vld [vmem:[#allocation3 + $0x8] sm:$0xff]
    %v114 = vld [vmem:[#allocation3 + $0x10] sm:$0xff]
    %v115 = vld [vmem:[#allocation3 + $0x18] sm:$0xff]
    %v116 = vld [vmem:[#allocation3 + $0x20] sm:$0xff]
    %v117 = vld [vmem:[#allocation3 + $0x28] sm:$0xff]
    %v118 = vld [vmem:[#allocation3 + $0x30] sm:$0xff]
    %v119 = vld [vmem:[#allocation3 + $0x38] sm:$0xff]
    %v120 = vld [vmem:[#allocation3 + $0x40] sm:$0xff]
    %v121 = vld [vmem:[#allocation3 + $0x48] sm:$0xff]
    %v122 = vld [vmem:[#allocation3 + $0x50] sm:$0xff]
    %v123 = vld [vmem:[#allocation3 + $0x58] sm:$0xff]
    %v124 = vld [vmem:[#allocation3 + $0x60] sm:$0xff]
    %v125 = vld [vmem:[#allocation3 + $0x68] sm:$0xff]
    %v126 = vld [vmem:[#allocation3 + $0x70] sm:$0xff]
    %v127 = vld [vmem:[#allocation3 + $0x78] sm:$0xff]
    %v128 = vld [vmem:[#allocation3 + $0x80] sm:$0xff]
    %v129 = vld [vmem:[#allocation3 + $0x88] sm:$0xff]
    %v130 = vld [vmem:[#allocation3 + $0x90] sm:$0xff]
    %v131 = vld [vmem:[#allocation3 + $0x98] sm:$0xff]
    %v132 = vld [vmem:[#allocation3 + $0xa0] sm:$0xff]
    %v133 = vld [vmem:[#allocation3 + $0xa8] sm:$0xff]
    %v134 = vld [vmem:[#allocation3 + $0xb0] sm:$0xff]
    %v135 = vld [vmem:[#allocation3 + $0xb8] sm:$0xff]
    %v136 = vld [vmem:[#allocation3 + $0xc0] sm:$0xff]
    %v137 = vld [vmem:[#allocation3 + $0xc8] sm:$0xff]
    %v138 = vld [vmem:[#allocation3 + $0xd0] sm:$0xff]
    %v139 = vld [vmem:[#allocation3 + $0xd8] sm:$0xff]
    %v140 = vld [vmem:[#allocation3 + $0xe0] sm:$0xff]
    %v141 = vld [vmem:[#allocation3 + $0xe8] sm:$0xff]
    %v142 = vld [vmem:[#allocation3 + $0xf0] sm:$0xff]
    %v143 = vld [vmem:[#allocation3 + $0xf8] sm:$0xff]
    %v144 = vld [vmem:[#allocation3 + $0x100] sm:$0xff]
    %v145 = vld [vmem:[#allocation3 + $0x108] sm:$0xff]
    %v146 = vld [vmem:[#allocation3 + $0x110] sm:$0xff]
    %v147 = vld [vmem:[#allocation3 + $0x118] sm:$0xff]
    %v148 = vld [vmem:[#allocation3 + $0x120] sm:$0xff]
    %v149 = vld [vmem:[#allocation3 + $0x128] sm:$0xff]
    %v150 = vld [vmem:[#allocation3 + $0x130] sm:$0xff]
    %v151 = vld [vmem:[#allocation3 + $0x138] sm:$0xff]
    %v152 = vld [vmem:[#allocation3 + $0x140] sm:$0xff]
    %v153 = vld [vmem:[#allocation3 + $0x148] sm:$0xff]
    %v154 = vld [vmem:[#allocation3 + $0x150] sm:$0xff]
    %v155 = vld [vmem:[#allocation3 + $0x158] sm:$0xff]
    %v156 = vld [vmem:[#allocation3 + $0x160] sm:$0xff]
    %v157 = vld [vmem:[#allocation3 + $0x168] sm:$0xff]
    %v158 = vld [vmem:[#allocation3 + $0x170] sm:$0xff]
    %v159 = vld [vmem:[#allocation3 + $0x178] sm:$0xff]
    %v160 = vld [vmem:[#allocation3 + $0x180] sm:$0xff]
    %v161 = vld [vmem:[#allocation3 + $0x188] sm:$0xff]
    %v162 = vld [vmem:[#allocation3 + $0x190] sm:$0xff]
    %v163 = vld [vmem:[#allocation3 + $0x198] sm:$0xff]
    %v164 = vld [vmem:[#allocation3 + $0x1a0] sm:$0xff]
    %v165 = vld [vmem:[#allocation3 + $0x1a8] sm:$0xff]
    %v166 = vld [vmem:[#allocation3 + $0x1b0] sm:$0xff]
    %v167 = vld [vmem:[#allocation3 + $0x1b8] sm:$0xff]
    %v168 = vld [vmem:[#allocation3 + $0x1c0] sm:$0xff]
    %v169 = vld [vmem:[#allocation3 + $0x1c8] sm:$0xff]
    %v170 = vld [vmem:[#allocation3 + $0x1d0] sm:$0xff]
    %v171 = vld [vmem:[#allocation3 + $0x1d8] sm:$0xff]
    %v172 = vld [vmem:[#allocation3 + $0x1e0] sm:$0xff]
    %v173 = vld [vmem:[#allocation3 + $0x1e8] sm:$0xff]
    %v174 = vld [vmem:[#allocation3 + $0x1f0] sm:$0xff]
    %v175 = vld [vmem:[#allocation3 + $0x1f8] sm:$0xff]
    %v176 = vld [vmem:[#allocation3 + $0x200] sm:$0xff]
    %v177 = vld [vmem:[#allocation3 + $0x208] sm:$0xff]
    %v178 = vld [vmem:[#allocation3 + $0x210] sm:$0xff]
    %v179 = vld [vmem:[#allocation3 + $0x218] sm:$0xff]
    %v180 = vld [vmem:[#allocation3 + $0x220] sm:$0xff]
    %v181 = vld [vmem:[#allocation3 + $0x228] sm:$0xff]
    %v182 = vld [vmem:[#allocation3 + $0x230] sm:$0xff]
    %v183 = vld [vmem:[#allocation3 + $0x238] sm:$0xff]
    %v184 = vld [vmem:[#allocation3 + $0x240] sm:$0xff]
    %v185 = vld [vmem:[#allocation3 + $0x248] sm:$0xff]
    %v186 = vld [vmem:[#allocation3 + $0x250] sm:$0xff]
    %v187 = vld [vmem:[#allocation3 + $0x258] sm:$0xff]
    %v188 = vld [vmem:[#allocation3 + $0x260] sm:$0xff]
    %v189 = vld [vmem:[#allocation3 + $0x268] sm:$0xff]
    %v190 = vld [vmem:[#allocation3 + $0x270] sm:$0xff]
    %v191 = vld [vmem:[#allocation3 + $0x278] sm:$0xff]
    %v192 = vld [vmem:[#allocation3 + $0x280] sm:$0xff]
    %v193 = vld [vmem:[#allocation3 + $0x288] sm:$0xff]
    %v194 = vld [vmem:[#allocation3 + $0x290] sm:$0xff]
    %v195 = vld [vmem:[#allocation3 + $0x298] sm:$0xff]
    %v196 = vld [vmem:[#allocation3 + $0x2a0] sm:$0xff]
    %v197 = vld [vmem:[#allocation3 + $0x2a8] sm:$0xff]
    %v198 = vld [vmem:[#allocation3 + $0x2b0] sm:$0xff]
    %v199 = vld [vmem:[#allocation3 + $0x2b8] sm:$0xff]
    %v200 = vld [vmem:[#allocation3 + $0x2c0] sm:$0xff]
    %v201 = vld [vmem:[#allocation3 + $0x2c8] sm:$0xff]
    %v202 = vld [vmem:[#allocation3 + $0x2d0] sm:$0xff]
    %v203 = vld [vmem:[#allocation3 + $0x2d8] sm:$0xff]
    %v204 = vld [vmem:[#allocation3 + $0x2e0] sm:$0xff]
    %v205 = vld [vmem:[#allocation3 + $0x2e8] sm:$0xff]
    %v206 = vld [vmem:[#allocation3 + $0x2f0] sm:$0xff]
    %v207 = vld [vmem:[#allocation3 + $0x2f8] sm:$0xff]
    %v208 = vld [vmem:[#allocation3 + $0x300] sm:$0xff]
    %v209 = vld [vmem:[#allocation3 + $0x308] sm:$0xff]
    %v210 = vld [vmem:[#allocation3 + $0x310] sm:$0xff]
    %v211 = vld [vmem:[#allocation3 + $0x318] sm:$0xff]
    %v212 = vld [vmem:[#allocation3 + $0x320] sm:$0xff]
    %v213 = vld [vmem:[#allocation3 + $0x328] sm:$0xff]
    %v214 = vld [vmem:[#allocation3 + $0x330] sm:$0xff]
    %v215 = vld [vmem:[#allocation3 + $0x338] sm:$0xff]
    %v216 = vld [vmem:[#allocation3 + $0x340] sm:$0xff]
    %v217 = vld [vmem:[#allocation3 + $0x348] sm:$0xff]
    %v218 = vld [vmem:[#allocation3 + $0x350] sm:$0xff]
    %v219 = vld [vmem:[#allocation3 + $0x358] sm:$0xff]
    %v220 = vld [vmem:[#allocation3 + $0x360] sm:$0xff]
    %v221 = vld [vmem:[#allocation3 + $0x368] sm:$0xff]
    %v222 = vld [vmem:[#allocation3 + $0x370] sm:$0xff]
    %v223 = vld [vmem:[#allocation3 + $0x378] sm:$0xff]
    %v224 = vld [vmem:[#allocation3 + $0x380] sm:$0xff]
    %v225 = vld [vmem:[#allocation3 + $0x388] sm:$0xff]
    %v226 = vld [vmem:[#allocation3 + $0x390] sm:$0xff]
    %v227 = vld [vmem:[#allocation3 + $0x398] sm:$0xff]
    %v228 = vld [vmem:[#allocation3 + $0x3a0] sm:$0xff]
    %v229 = vld [vmem:[#allocation3 + $0x3a8] sm:$0xff]
    %v230 = vld [vmem:[#allocation3 + $0x3b0] sm:$0xff]
    %v231 = vld [vmem:[#allocation3 + $0x3b8] sm:$0xff]
    %v232 = vld [vmem:[#allocation3 + $0x3c0] sm:$0xff]
    %v233 = vld [vmem:[#allocation3 + $0x3c8] sm:$0xff]
    %v234 = vld [vmem:[#allocation3 + $0x3d0] sm:$0xff]
    %v235 = vld [vmem:[#allocation3 + $0x3d8] sm:$0xff]
    %v236 = vld [vmem:[#allocation3 + $0x3e0] sm:$0xff]
    %v237 = vld [vmem:[#allocation3 + $0x3e8] sm:$0xff]
    %v238 = vld [vmem:[#allocation3 + $0x3f0] sm:$0xff]
    %v239 = vld [vmem:[#allocation3 + $0x3f8] sm:$0xff]
    %v240 = vld [vmem:[#allocation3 + $0x400] sm:$0xff]
    %v241 = vld [vmem:[#allocation3 + $0x408] sm:$0xff]
    %v242 = vld [vmem:[#allocation3 + $0x410] sm:$0xff]
    %v243 = vld [vmem:[#allocation3 + $0x418] sm:$0xff]
    %v244 = vld [vmem:[#allocation3 + $0x420] sm:$0xff]
    %v245 = vld [vmem:[#allocation3 + $0x428] sm:$0xff]
    %v246 = vld [vmem:[#allocation3 + $0x430] sm:$0xff]
    %v247 = vld [vmem:[#allocation3 + $0x438] sm:$0xff]
    %v248 = vld [vmem:[#allocation3 + $0x440] sm:$0xff]
    %v249 = vld [vmem:[#allocation3 + $0x448] sm:$0xff]
    %v250 = vld [vmem:[#allocation3 + $0x450] sm:$0xff]
    %v251 = vld [vmem:[#allocation3 + $0x458] sm:$0xff]
    %v252 = vld [vmem:[#allocation3 + $0x460] sm:$0xff]
    %v253 = vld [vmem:[#allocation3 + $0x468] sm:$0xff]
    %v254 = vld [vmem:[#allocation3 + $0x470] sm:$0xff]
    %v255 = vld [vmem:[#allocation3 + $0x478] sm:$0xff]
    %v256 = vld [vmem:[#allocation3 + $0x480] sm:$0xff]
    %v257 = vld [vmem:[#allocation3 + $0x488] sm:$0xff]
    %v258 = vld [vmem:[#allocation3 + $0x490] sm:$0xff]
    %v259 = vld [vmem:[#allocation3 + $0x498] sm:$0xff]
    %v260 = vld [vmem:[#allocation3 + $0x4a0] sm:$0xff]
    %v261 = vld [vmem:[#allocation3 + $0x4a8] sm:$0xff]
    %v262 = vld [vmem:[#allocation3 + $0x4b0] sm:$0xff]
    %v263 = vld [vmem:[#allocation3 + $0x4b8] sm:$0xff]
    %v264 = vld [vmem:[#allocation3 + $0x4c0] sm:$0xff]
    %v265 = vld [vmem:[#allocation3 + $0x4c8] sm:$0xff]
    %v266 = vld [vmem:[#allocation3 + $0x4d0] sm:$0xff]
    %v267 = vld [vmem:[#allocation3 + $0x4d8] sm:$0xff]
    %v268 = vld [vmem:[#allocation3 + $0x4e0] sm:$0xff]
    %v269 = vld [vmem:[#allocation3 + $0x4e8] sm:$0xff]
    %v270 = vld [vmem:[#allocation3 + $0x4f0] sm:$0xff]
    %v271 = vld [vmem:[#allocation3 + $0x4f8] sm:$0xff]
    %v272 = vld [vmem:[#allocation3 + $0x500] sm:$0xff]
    %v273 = vld [vmem:[#allocation3 + $0x508] sm:$0xff]
    %v274 = vld [vmem:[#allocation3 + $0x510] sm:$0xff]
    %v275 = vld [vmem:[#allocation3 + $0x518] sm:$0xff]
    %v276 = vld [vmem:[#allocation3 + $0x520] sm:$0xff]
    %v277 = vld [vmem:[#allocation3 + $0x528] sm:$0xff]
    %v278 = vld [vmem:[#allocation3 + $0x530] sm:$0xff]
    %v279 = vld [vmem:[#allocation3 + $0x538] sm:$0xff]
    %v280 = vld [vmem:[#allocation3 + $0x540] sm:$0xff]
    %v281 = vld [vmem:[#allocation3 + $0x548] sm:$0xff]
    %v282 = vld [vmem:[#allocation3 + $0x550] sm:$0xff]
    %v283 = vld [vmem:[#allocation3 + $0x558] sm:$0xff]
    %v284 = vld [vmem:[#allocation3 + $0x560] sm:$0xff]
    %v285 = vld [vmem:[#allocation3 + $0x568] sm:$0xff]
    %v286 = vld [vmem:[#allocation3 + $0x570] sm:$0xff]
    %v287 = vld [vmem:[#allocation3 + $0x578] sm:$0xff]
    %v288 = vld [vmem:[#allocation3 + $0x580] sm:$0xff]
    %v289 = vld [vmem:[#allocation3 + $0x588] sm:$0xff]
    %v290 = vld [vmem:[#allocation3 + $0x590] sm:$0xff]
    %v291 = vld [vmem:[#allocation3 + $0x598] sm:$0xff]
    %v292 = vld [vmem:[#allocation3 + $0x5a0] sm:$0xff]
    %v293 = vld [vmem:[#allocation3 + $0x5a8] sm:$0xff]
    %v294 = vld [vmem:[#allocation3 + $0x5b0] sm:$0xff]
    %v295 = vld [vmem:[#allocation3 + $0x5b8] sm:$0xff]
    %v296 = vld [vmem:[#allocation3 + $0x5c0] sm:$0xff]
    %v297 = vld [vmem:[#allocation3 + $0x5c8] sm:$0xff]
    %v298 = vld [vmem:[#allocation3 + $0x5d0] sm:$0xff]
    %v299 = vld [vmem:[#allocation3 + $0x5d8] sm:$0xff]
    %v300 = vld [vmem:[#allocation3 + $0x5e0] sm:$0xff]
    %v301 = vld [vmem:[#allocation3 + $0x5e8] sm:$0xff]
    %v302 = vld [vmem:[#allocation3 + $0x5f0] sm:$0xff]
    %v303 = vld [vmem:[#allocation3 + $0x5f8] sm:$0xff]
    %v304 = vld [vmem:[#allocation3 + $0x600] sm:$0xff]
    %v305 = vld [vmem:[#allocation3 + $0x608] sm:$0xff]
    %v306 = vld [vmem:[#allocation3 + $0x610] sm:$0xff]
    %v307 = vld [vmem:[#allocation3 + $0x618] sm:$0xff]
    %v308 = vld [vmem:[#allocation3 + $0x620] sm:$0xff]
    %v309 = vld [vmem:[#allocation3 + $0x628] sm:$0xff]
    %v310 = vld [vmem:[#allocation3 + $0x630] sm:$0xff]
    %v311 = vld [vmem:[#allocation3 + $0x638] sm:$0xff]
    %v312 = vld [vmem:[#allocation3 + $0x640] sm:$0xff]
    %v313 = vld [vmem:[#allocation3 + $0x648] sm:$0xff]
    %v314 = vld [vmem:[#allocation3 + $0x650] sm:$0xff]
    %v315 = vld [vmem:[#allocation3 + $0x658] sm:$0xff]
    %v316 = vld [vmem:[#allocation3 + $0x660] sm:$0xff]
    %v317 = vld [vmem:[#allocation3 + $0x668] sm:$0xff]
    %v318 = vld [vmem:[#allocation3 + $0x670] sm:$0xff]
    %v319 = vld [vmem:[#allocation3 + $0x678] sm:$0xff]
    %v320 = vld [vmem:[#allocation3 + $0x680] sm:$0xff]
    %v321 = vld [vmem:[#allocation3 + $0x688] sm:$0xff]
    %v322 = vld [vmem:[#allocation3 + $0x690] sm:$0xff]
    %v323 = vld [vmem:[#allocation3 + $0x698] sm:$0xff]
    %v324 = vld [vmem:[#allocation3 + $0x6a0] sm:$0xff]
    %v325 = vld [vmem:[#allocation3 + $0x6a8] sm:$0xff]
    %v326 = vld [vmem:[#allocation3 + $0x6b0] sm:$0xff]
    %v327 = vld [vmem:[#allocation3 + $0x6b8] sm:$0xff]
    %v328 = vld [vmem:[#allocation3 + $0x6c0] sm:$0xff]
    %v329 = vld [vmem:[#allocation3 + $0x6c8] sm:$0xff]
    %v330 = vld [vmem:[#allocation3 + $0x6d0] sm:$0xff]
    %v331 = vld [vmem:[#allocation3 + $0x6d8] sm:$0xff]
    %v332 = vld [vmem:[#allocation3 + $0x6e0] sm:$0xff]
    %v333 = vld [vmem:[#allocation3 + $0x6e8] sm:$0xff]
    %v334 = vld [vmem:[#allocation3 + $0x6f0] sm:$0xff]
    %v335 = vld [vmem:[#allocation3 + $0x6f8] sm:$0xff]
    %v336 = vld [vmem:[#allocation3 + $0x700] sm:$0xff]
    %v337 = vld [vmem:[#allocation3 + $0x708] sm:$0xff]
    %v338 = vld [vmem:[#allocation3 + $0x710] sm:$0xff]
    %v339 = vld [vmem:[#allocation3 + $0x718] sm:$0xff]
    %v340 = vld [vmem:[#allocation3 + $0x720] sm:$0xff]
    %v341 = vld [vmem:[#allocation3 + $0x728] sm:$0xff]
    %v342 = vld [vmem:[#allocation3 + $0x730] sm:$0xff]
    %v343 = vld [vmem:[#allocation3 + $0x738] sm:$0xff]
    %v344 = vld [vmem:[#allocation3 + $0x740] sm:$0xff]
    %v345 = vld [vmem:[#allocation3 + $0x748] sm:$0xff]
    %v346 = vld [vmem:[#allocation3 + $0x750] sm:$0xff]
    %v347 = vld [vmem:[#allocation3 + $0x758] sm:$0xff]
    %v348 = vld [vmem:[#allocation3 + $0x760] sm:$0xff]
    %v349 = vld [vmem:[#allocation3 + $0x768] sm:$0xff]
    %v350 = vld [vmem:[#allocation3 + $0x770] sm:$0xff]
    %v351 = vld [vmem:[#allocation3 + $0x778] sm:$0xff]
    %v352 = vld [vmem:[#allocation3 + $0x780] sm:$0xff]
    %v353 = vld [vmem:[#allocation3 + $0x788] sm:$0xff]
    %v354 = vld [vmem:[#allocation3 + $0x790] sm:$0xff]
    %v355 = vld [vmem:[#allocation3 + $0x798] sm:$0xff]
    %v356 = vld [vmem:[#allocation3 + $0x7a0] sm:$0xff]
    %v357 = vld [vmem:[#allocation3 + $0x7a8] sm:$0xff]
    %v358 = vld [vmem:[#allocation3 + $0x7b0] sm:$0xff]
    %v359 = vld [vmem:[#allocation3 + $0x7b8] sm:$0xff]
    %v360 = vld [vmem:[#allocation3 + $0x7c0] sm:$0xff]
    %v361 = vld [vmem:[#allocation3 + $0x7c8] sm:$0xff]
    %v362 = vld [vmem:[#allocation3 + $0x7d0] sm:$0xff]
    %v363 = vld [vmem:[#allocation3 + $0x7d8] sm:$0xff]
    %v364 = vld [vmem:[#allocation3 + $0x7e0] sm:$0xff]
    %v365 = vld [vmem:[#allocation3 + $0x7e8] sm:$0xff]
    %v366 = vld [vmem:[#allocation3 + $0x7f0] sm:$0xff]
    %v367 = vld [vmem:[#allocation3 + $0x7f8] sm:$0xff]
    %v624 = vunpack.c.l.b16 %v112
    %v625 = vunpack.c.h.b16 %v112
    %v626 = vunpack.c.l.b16 %v113
    %v627 = vunpack.c.h.b16 %v113
    %v628 = vunpack.c.l.b16 %v114
    %v629 = vunpack.c.h.b16 %v114
    %v630 = vunpack.c.l.b16 %v115
    %v631 = vunpack.c.h.b16 %v115
    %v632 = vunpack.c.l.b16 %v116
    %v633 = vunpack.c.h.b16 %v116
    %v634 = vunpack.c.l.b16 %v117
    %v635 = vunpack.c.h.b16 %v117
    %v636 = vunpack.c.l.b16 %v118
    %v637 = vunpack.c.h.b16 %v118
    %v638 = vunpack.c.l.b16 %v119
    %v639 = vunpack.c.h.b16 %v119
    %v640 = vunpack.c.l.b16 %v120
    %v641 = vunpack.c.h.b16 %v120
    %v642 = vunpack.c.l.b16 %v121
    %v643 = vunpack.c.h.b16 %v121
    %v644 = vunpack.c.l.b16 %v122
    %v645 = vunpack.c.h.b16 %v122
    %v646 = vunpack.c.l.b16 %v123
    %v647 = vunpack.c.h.b16 %v123
    %v648 = vunpack.c.l.b16 %v124
    %v649 = vunpack.c.h.b16 %v124
    %v650 = vunpack.c.l.b16 %v125
    %v651 = vunpack.c.h.b16 %v125
    %v652 = vunpack.c.l.b16 %v126
    %v653 = vunpack.c.h.b16 %v126
    %v654 = vunpack.c.l.b16 %v127
    %v655 = vunpack.c.h.b16 %v127
    %v656 = vunpack.c.l.b16 %v128
    %v657 = vunpack.c.h.b16 %v128
    %v658 = vunpack.c.l.b16 %v129
    %v659 = vunpack.c.h.b16 %v129
    %v660 = vunpack.c.l.b16 %v130
    %v661 = vunpack.c.h.b16 %v130
    %v662 = vunpack.c.l.b16 %v131
    %v663 = vunpack.c.h.b16 %v131
    %v664 = vunpack.c.l.b16 %v132
    %v665 = vunpack.c.h.b16 %v132
    %v666 = vunpack.c.l.b16 %v133
    %v667 = vunpack.c.h.b16 %v133
    %v668 = vunpack.c.l.b16 %v134
    %v669 = vunpack.c.h.b16 %v134
    %v670 = vunpack.c.l.b16 %v135
    %v671 = vunpack.c.h.b16 %v135
    %v672 = vunpack.c.l.b16 %v136
    %v673 = vunpack.c.h.b16 %v136
    %v674 = vunpack.c.l.b16 %v137
    %v675 = vunpack.c.h.b16 %v137
    %v676 = vunpack.c.l.b16 %v138
    %v677 = vunpack.c.h.b16 %v138
    %v678 = vunpack.c.l.b16 %v139
    %v679 = vunpack.c.h.b16 %v139
    %v680 = vunpack.c.l.b16 %v140
    %v681 = vunpack.c.h.b16 %v140
    %v682 = vunpack.c.l.b16 %v141
    %v683 = vunpack.c.h.b16 %v141
    %v684 = vunpack.c.l.b16 %v142
    %v685 = vunpack.c.h.b16 %v142
    %v686 = vunpack.c.l.b16 %v143
    %v687 = vunpack.c.h.b16 %v143
    %v688 = vunpack.c.l.b16 %v144
    %v689 = vunpack.c.h.b16 %v144
    %v690 = vunpack.c.l.b16 %v145
    %v691 = vunpack.c.h.b16 %v145
    %v692 = vunpack.c.l.b16 %v146
    %v693 = vunpack.c.h.b16 %v146
    %v694 = vunpack.c.l.b16 %v147
    %v695 = vunpack.c.h.b16 %v147
    %v696 = vunpack.c.l.b16 %v148
    %v697 = vunpack.c.h.b16 %v148
    %v698 = vunpack.c.l.b16 %v149
    %v699 = vunpack.c.h.b16 %v149
    %v700 = vunpack.c.l.b16 %v150
    %v701 = vunpack.c.h.b16 %v150
    %v702 = vunpack.c.l.b16 %v151
    %v703 = vunpack.c.h.b16 %v151
    %v704 = vunpack.c.l.b16 %v152
    %v705 = vunpack.c.h.b16 %v152
    %v706 = vunpack.c.l.b16 %v153
    %v707 = vunpack.c.h.b16 %v153
    %v708 = vunpack.c.l.b16 %v154
    %v709 = vunpack.c.h.b16 %v154
    %v710 = vunpack.c.l.b16 %v155
    %v711 = vunpack.c.h.b16 %v155
    %v712 = vunpack.c.l.b16 %v156
    %v713 = vunpack.c.h.b16 %v156
    %v714 = vunpack.c.l.b16 %v157
    %v715 = vunpack.c.h.b16 %v157
    %v716 = vunpack.c.l.b16 %v158
    %v717 = vunpack.c.h.b16 %v158
    %v718 = vunpack.c.l.b16 %v159
    %v719 = vunpack.c.h.b16 %v159
    %v720 = vunpack.c.l.b16 %v160
    %v721 = vunpack.c.h.b16 %v160
    %v722 = vunpack.c.l.b16 %v161
    %v723 = vunpack.c.h.b16 %v161
    %v724 = vunpack.c.l.b16 %v162
    %v725 = vunpack.c.h.b16 %v162
    %v726 = vunpack.c.l.b16 %v163
    %v727 = vunpack.c.h.b16 %v163
    %v728 = vunpack.c.l.b16 %v164
    %v729 = vunpack.c.h.b16 %v164
    %v730 = vunpack.c.l.b16 %v165
    %v731 = vunpack.c.h.b16 %v165
    %v732 = vunpack.c.l.b16 %v166
    %v733 = vunpack.c.h.b16 %v166
    %v734 = vunpack.c.l.b16 %v167
    %v735 = vunpack.c.h.b16 %v167
    %v736 = vunpack.c.l.b16 %v168
    %v737 = vunpack.c.h.b16 %v168
    %v738 = vunpack.c.l.b16 %v169
    %v739 = vunpack.c.h.b16 %v169
    %v740 = vunpack.c.l.b16 %v170
    %v741 = vunpack.c.h.b16 %v170
    %v742 = vunpack.c.l.b16 %v171
    %v743 = vunpack.c.h.b16 %v171
    %v744 = vunpack.c.l.b16 %v172
    %v745 = vunpack.c.h.b16 %v172
    %v746 = vunpack.c.l.b16 %v173
    %v747 = vunpack.c.h.b16 %v173
    %v748 = vunpack.c.l.b16 %v174
    %v749 = vunpack.c.h.b16 %v174
    %v750 = vunpack.c.l.b16 %v175
    %v751 = vunpack.c.h.b16 %v175
    %v752 = vunpack.c.l.b16 %v176
    %v753 = vunpack.c.h.b16 %v176
    %v754 = vunpack.c.l.b16 %v177
    %v755 = vunpack.c.h.b16 %v177
    %v756 = vunpack.c.l.b16 %v178
    %v757 = vunpack.c.h.b16 %v178
    %v758 = vunpack.c.l.b16 %v179
    %v759 = vunpack.c.h.b16 %v179
    %v760 = vunpack.c.l.b16 %v180
    %v761 = vunpack.c.h.b16 %v180
    %v762 = vunpack.c.l.b16 %v181
    %v763 = vunpack.c.h.b16 %v181
    %v764 = vunpack.c.l.b16 %v182
    %v765 = vunpack.c.h.b16 %v182
    %v766 = vunpack.c.l.b16 %v183
    %v767 = vunpack.c.h.b16 %v183
    %v768 = vunpack.c.l.b16 %v184
    %v769 = vunpack.c.h.b16 %v184
    %v770 = vunpack.c.l.b16 %v185
    %v771 = vunpack.c.h.b16 %v185
    %v772 = vunpack.c.l.b16 %v186
    %v773 = vunpack.c.h.b16 %v186
    %v774 = vunpack.c.l.b16 %v187
    %v775 = vunpack.c.h.b16 %v187
    %v776 = vunpack.c.l.b16 %v188
    %v777 = vunpack.c.h.b16 %v188
    %v778 = vunpack.c.l.b16 %v189
    %v779 = vunpack.c.h.b16 %v189
    %v780 = vunpack.c.l.b16 %v190
    %v781 = vunpack.c.h.b16 %v190
    %v782 = vunpack.c.l.b16 %v191
    %v783 = vunpack.c.h.b16 %v191
    %v784 = vunpack.c.l.b16 %v192
    %v785 = vunpack.c.h.b16 %v192
    %v786 = vunpack.c.l.b16 %v193
    %v787 = vunpack.c.h.b16 %v193
    %v788 = vunpack.c.l.b16 %v194
    %v789 = vunpack.c.h.b16 %v194
    %v790 = vunpack.c.l.b16 %v195
    %v791 = vunpack.c.h.b16 %v195
    %v792 = vunpack.c.l.b16 %v196
    %v793 = vunpack.c.h.b16 %v196
    %v794 = vunpack.c.l.b16 %v197
    %v795 = vunpack.c.h.b16 %v197
    %v796 = vunpack.c.l.b16 %v198
    %v797 = vunpack.c.h.b16 %v198
    %v798 = vunpack.c.l.b16 %v199
    %v799 = vunpack.c.h.b16 %v199
    %v800 = vunpack.c.l.b16 %v200
    %v801 = vunpack.c.h.b16 %v200
    %v802 = vunpack.c.l.b16 %v201
    %v803 = vunpack.c.h.b16 %v201
    %v804 = vunpack.c.l.b16 %v202
    %v805 = vunpack.c.h.b16 %v202
    %v806 = vunpack.c.l.b16 %v203
    %v807 = vunpack.c.h.b16 %v203
    %v808 = vunpack.c.l.b16 %v204
    %v809 = vunpack.c.h.b16 %v204
    %v810 = vunpack.c.l.b16 %v205
    %v811 = vunpack.c.h.b16 %v205
    %v812 = vunpack.c.l.b16 %v206
    %v813 = vunpack.c.h.b16 %v206
    %v814 = vunpack.c.l.b16 %v207
    %v815 = vunpack.c.h.b16 %v207
    %v816 = vunpack.c.l.b16 %v208
    %v817 = vunpack.c.h.b16 %v208
    %v818 = vunpack.c.l.b16 %v209
    %v819 = vunpack.c.h.b16 %v209
    %v820 = vunpack.c.l.b16 %v210
    %v821 = vunpack.c.h.b16 %v210
    %v822 = vunpack.c.l.b16 %v211
    %v823 = vunpack.c.h.b16 %v211
    %v824 = vunpack.c.l.b16 %v212
    %v825 = vunpack.c.h.b16 %v212
    %v826 = vunpack.c.l.b16 %v213
    %v827 = vunpack.c.h.b16 %v213
    %v828 = vunpack.c.l.b16 %v214
    %v829 = vunpack.c.h.b16 %v214
    %v830 = vunpack.c.l.b16 %v215
    %v831 = vunpack.c.h.b16 %v215
    %v832 = vunpack.c.l.b16 %v216
    %v833 = vunpack.c.h.b16 %v216
    %v834 = vunpack.c.l.b16 %v217
    %v835 = vunpack.c.h.b16 %v217
    %v836 = vunpack.c.l.b16 %v218
    %v837 = vunpack.c.h.b16 %v218
    %v838 = vunpack.c.l.b16 %v219
    %v839 = vunpack.c.h.b16 %v219
    %v840 = vunpack.c.l.b16 %v220
    %v841 = vunpack.c.h.b16 %v220
    %v842 = vunpack.c.l.b16 %v221
    %v843 = vunpack.c.h.b16 %v221
    %v844 = vunpack.c.l.b16 %v222
    %v845 = vunpack.c.h.b16 %v222
    %v846 = vunpack.c.l.b16 %v223
    %v847 = vunpack.c.h.b16 %v223
    %v848 = vunpack.c.l.b16 %v224
    %v849 = vunpack.c.h.b16 %v224
    %v850 = vunpack.c.l.b16 %v225
    %v851 = vunpack.c.h.b16 %v225
    %v852 = vunpack.c.l.b16 %v226
    %v853 = vunpack.c.h.b16 %v226
    %v854 = vunpack.c.l.b16 %v227
    %v855 = vunpack.c.h.b16 %v227
    %v856 = vunpack.c.l.b16 %v228
    %v857 = vunpack.c.h.b16 %v228
    %v858 = vunpack.c.l.b16 %v229
    %v859 = vunpack.c.h.b16 %v229
    %v860 = vunpack.c.l.b16 %v230
    %v861 = vunpack.c.h.b16 %v230
    %v862 = vunpack.c.l.b16 %v231
    %v863 = vunpack.c.h.b16 %v231
    %v864 = vunpack.c.l.b16 %v232
    %v865 = vunpack.c.h.b16 %v232
    %v866 = vunpack.c.l.b16 %v233
    %v867 = vunpack.c.h.b16 %v233
    %v868 = vunpack.c.l.b16 %v234
    %v869 = vunpack.c.h.b16 %v234
    %v870 = vunpack.c.l.b16 %v235
    %v871 = vunpack.c.h.b16 %v235
    %v872 = vunpack.c.l.b16 %v236
    %v873 = vunpack.c.h.b16 %v236
    %v874 = vunpack.c.l.b16 %v237
    %v875 = vunpack.c.h.b16 %v237
    %v876 = vunpack.c.l.b16 %v238
    %v877 = vunpack.c.h.b16 %v238
    %v878 = vunpack.c.l.b16 %v239
    %v879 = vunpack.c.h.b16 %v239
    %v880 = vunpack.c.l.b16 %v240
    %v881 = vunpack.c.h.b16 %v240
    %v882 = vunpack.c.l.b16 %v241
    %v883 = vunpack.c.h.b16 %v241
    %v884 = vunpack.c.l.b16 %v242
    %v885 = vunpack.c.h.b16 %v242
    %v886 = vunpack.c.l.b16 %v243
    %v887 = vunpack.c.h.b16 %v243
    %v888 = vunpack.c.l.b16 %v244
    %v889 = vunpack.c.h.b16 %v244
    %v890 = vunpack.c.l.b16 %v245
    %v891 = vunpack.c.h.b16 %v245
    %v892 = vunpack.c.l.b16 %v246
    %v893 = vunpack.c.h.b16 %v246
    %v894 = vunpack.c.l.b16 %v247
    %v895 = vunpack.c.h.b16 %v247
    %v896 = vunpack.c.l.b16 %v248
    %v897 = vunpack.c.h.b16 %v248
    %v898 = vunpack.c.l.b16 %v249
    %v899 = vunpack.c.h.b16 %v249
    %v900 = vunpack.c.l.b16 %v250
    %v901 = vunpack.c.h.b16 %v250
    %v902 = vunpack.c.l.b16 %v251
    %v903 = vunpack.c.h.b16 %v251
    %v904 = vunpack.c.l.b16 %v252
    %v905 = vunpack.c.h.b16 %v252
    %v906 = vunpack.c.l.b16 %v253
    %v907 = vunpack.c.h.b16 %v253
    %v908 = vunpack.c.l.b16 %v254
    %v909 = vunpack.c.h.b16 %v254
    %v910 = vunpack.c.l.b16 %v255
    %v911 = vunpack.c.h.b16 %v255
    %v912 = vunpack.c.l.b16 %v256
    %v913 = vunpack.c.h.b16 %v256
    %v914 = vunpack.c.l.b16 %v257
    %v915 = vunpack.c.h.b16 %v257
    %v916 = vunpack.c.l.b16 %v258
    %v917 = vunpack.c.h.b16 %v258
    %v918 = vunpack.c.l.b16 %v259
    %v919 = vunpack.c.h.b16 %v259
    %v920 = vunpack.c.l.b16 %v260
    %v921 = vunpack.c.h.b16 %v260
    %v922 = vunpack.c.l.b16 %v261
    %v923 = vunpack.c.h.b16 %v261
    %v924 = vunpack.c.l.b16 %v262
    %v925 = vunpack.c.h.b16 %v262
    %v926 = vunpack.c.l.b16 %v263
    %v927 = vunpack.c.h.b16 %v263
    %v928 = vunpack.c.l.b16 %v264
    %v929 = vunpack.c.h.b16 %v264
    %v930 = vunpack.c.l.b16 %v265
    %v931 = vunpack.c.h.b16 %v265
    %v932 = vunpack.c.l.b16 %v266
    %v933 = vunpack.c.h.b16 %v266
    %v934 = vunpack.c.l.b16 %v267
    %v935 = vunpack.c.h.b16 %v267
    %v936 = vunpack.c.l.b16 %v268
    %v937 = vunpack.c.h.b16 %v268
    %v938 = vunpack.c.l.b16 %v269
    %v939 = vunpack.c.h.b16 %v269
    %v940 = vunpack.c.l.b16 %v270
    %v941 = vunpack.c.h.b16 %v270
    %v942 = vunpack.c.l.b16 %v271
    %v943 = vunpack.c.h.b16 %v271
    %v944 = vunpack.c.l.b16 %v272
    %v945 = vunpack.c.h.b16 %v272
    %v946 = vunpack.c.l.b16 %v273
    %v947 = vunpack.c.h.b16 %v273
    %v948 = vunpack.c.l.b16 %v274
    %v949 = vunpack.c.h.b16 %v274
    %v950 = vunpack.c.l.b16 %v275
    %v951 = vunpack.c.h.b16 %v275
    %v952 = vunpack.c.l.b16 %v276
    %v953 = vunpack.c.h.b16 %v276
    %v954 = vunpack.c.l.b16 %v277
    %v955 = vunpack.c.h.b16 %v277
    %v956 = vunpack.c.l.b16 %v278
    %v957 = vunpack.c.h.b16 %v278
    %v958 = vunpack.c.l.b16 %v279
    %v959 = vunpack.c.h.b16 %v279
    %v960 = vunpack.c.l.b16 %v280
    %v961 = vunpack.c.h.b16 %v280
    %v962 = vunpack.c.l.b16 %v281
    %v963 = vunpack.c.h.b16 %v281
    %v964 = vunpack.c.l.b16 %v282
    %v965 = vunpack.c.h.b16 %v282
    %v966 = vunpack.c.l.b16 %v283
    %v967 = vunpack.c.h.b16 %v283
    %v968 = vunpack.c.l.b16 %v284
    %v969 = vunpack.c.h.b16 %v284
    %v970 = vunpack.c.l.b16 %v285
    %v971 = vunpack.c.h.b16 %v285
    %v972 = vunpack.c.l.b16 %v286
    %v973 = vunpack.c.h.b16 %v286
    %v974 = vunpack.c.l.b16 %v287
    %v975 = vunpack.c.h.b16 %v287
    %v976 = vunpack.c.l.b16 %v288
    %v977 = vunpack.c.h.b16 %v288
    %v978 = vunpack.c.l.b16 %v289
    %v979 = vunpack.c.h.b16 %v289
    %v980 = vunpack.c.l.b16 %v290
    %v981 = vunpack.c.h.b16 %v290
    %v982 = vunpack.c.l.b16 %v291
    %v983 = vunpack.c.h.b16 %v291
    %v984 = vunpack.c.l.b16 %v292
    %v985 = vunpack.c.h.b16 %v292
    %v986 = vunpack.c.l.b16 %v293
    %v987 = vunpack.c.h.b16 %v293
    %v988 = vunpack.c.l.b16 %v294
    %v989 = vunpack.c.h.b16 %v294
    %v990 = vunpack.c.l.b16 %v295
    %v991 = vunpack.c.h.b16 %v295
    %v992 = vunpack.c.l.b16 %v296
    %v993 = vunpack.c.h.b16 %v296
    %v994 = vunpack.c.l.b16 %v297
    %v995 = vunpack.c.h.b16 %v297
    %v996 = vunpack.c.l.b16 %v298
    %v997 = vunpack.c.h.b16 %v298
    %v998 = vunpack.c.l.b16 %v299
    %v999 = vunpack.c.h.b16 %v299
    %v1000 = vunpack.c.l.b16 %v300
    %v1001 = vunpack.c.h.b16 %v300
    %v1002 = vunpack.c.l.b16 %v301
    %v1003 = vunpack.c.h.b16 %v301
    %v1004 = vunpack.c.l.b16 %v302
    %v1005 = vunpack.c.h.b16 %v302
    %v1006 = vunpack.c.l.b16 %v303
    %v1007 = vunpack.c.h.b16 %v303
    %v1008 = vunpack.c.l.b16 %v304
    %v1009 = vunpack.c.h.b16 %v304
    %v1010 = vunpack.c.l.b16 %v305
    %v1011 = vunpack.c.h.b16 %v305
    %v1012 = vunpack.c.l.b16 %v306
    %v1013 = vunpack.c.h.b16 %v306
    %v1014 = vunpack.c.l.b16 %v307
    %v1015 = vunpack.c.h.b16 %v307
    %v1016 = vunpack.c.l.b16 %v308
    %v1017 = vunpack.c.h.b16 %v308
    %v1018 = vunpack.c.l.b16 %v309
    %v1019 = vunpack.c.h.b16 %v309
    %v1020 = vunpack.c.l.b16 %v310
    %v1021 = vunpack.c.h.b16 %v310
    %v1022 = vunpack.c.l.b16 %v311
    %v1023 = vunpack.c.h.b16 %v311
    %v1024 = vunpack.c.l.b16 %v312
    %v1025 = vunpack.c.h.b16 %v312
    %v1026 = vunpack.c.l.b16 %v313
    %v1027 = vunpack.c.h.b16 %v313
    %v1028 = vunpack.c.l.b16 %v314
    %v1029 = vunpack.c.h.b16 %v314
    %v1030 = vunpack.c.l.b16 %v315
    %v1031 = vunpack.c.h.b16 %v315
    %v1032 = vunpack.c.l.b16 %v316
    %v1033 = vunpack.c.h.b16 %v316
    %v1034 = vunpack.c.l.b16 %v317
    %v1035 = vunpack.c.h.b16 %v317
    %v1036 = vunpack.c.l.b16 %v318
    %v1037 = vunpack.c.h.b16 %v318
    %v1038 = vunpack.c.l.b16 %v319
    %v1039 = vunpack.c.h.b16 %v319
    %v1040 = vunpack.c.l.b16 %v320
    %v1041 = vunpack.c.h.b16 %v320
    %v1042 = vunpack.c.l.b16 %v321
    %v1043 = vunpack.c.h.b16 %v321
    %v1044 = vunpack.c.l.b16 %v322
    %v1045 = vunpack.c.h.b16 %v322
    %v1046 = vunpack.c.l.b16 %v323
    %v1047 = vunpack.c.h.b16 %v323
    %v1048 = vunpack.c.l.b16 %v324
    %v1049 = vunpack.c.h.b16 %v324
    %v1050 = vunpack.c.l.b16 %v325
    %v1051 = vunpack.c.h.b16 %v325
    %v1052 = vunpack.c.l.b16 %v326
    %v1053 = vunpack.c.h.b16 %v326
    %v1054 = vunpack.c.l.b16 %v327
    %v1055 = vunpack.c.h.b16 %v327
    %v1056 = vunpack.c.l.b16 %v328
    %v1057 = vunpack.c.h.b16 %v328
    %v1058 = vunpack.c.l.b16 %v329
    %v1059 = vunpack.c.h.b16 %v329
    %v1060 = vunpack.c.l.b16 %v330
    %v1061 = vunpack.c.h.b16 %v330
    %v1062 = vunpack.c.l.b16 %v331
    %v1063 = vunpack.c.h.b16 %v331
    %v1064 = vunpack.c.l.b16 %v332
    %v1065 = vunpack.c.h.b16 %v332
    %v1066 = vunpack.c.l.b16 %v333
    %v1067 = vunpack.c.h.b16 %v333
    %v1068 = vunpack.c.l.b16 %v334
    %v1069 = vunpack.c.h.b16 %v334
    %v1070 = vunpack.c.l.b16 %v335
    %v1071 = vunpack.c.h.b16 %v335
    %v1072 = vunpack.c.l.b16 %v336
    %v1073 = vunpack.c.h.b16 %v336
    %v1074 = vunpack.c.l.b16 %v337
    %v1075 = vunpack.c.h.b16 %v337
    %v1076 = vunpack.c.l.b16 %v338
    %v1077 = vunpack.c.h.b16 %v338
    %v1078 = vunpack.c.l.b16 %v339
    %v1079 = vunpack.c.h.b16 %v339
    %v1080 = vunpack.c.l.b16 %v340
    %v1081 = vunpack.c.h.b16 %v340
    %v1082 = vunpack.c.l.b16 %v341
    %v1083 = vunpack.c.h.b16 %v341
    %v1084 = vunpack.c.l.b16 %v342
    %v1085 = vunpack.c.h.b16 %v342
    %v1086 = vunpack.c.l.b16 %v343
    %v1087 = vunpack.c.h.b16 %v343
    %v1088 = vunpack.c.l.b16 %v344
    %v1089 = vunpack.c.h.b16 %v344
    %v1090 = vunpack.c.l.b16 %v345
    %v1091 = vunpack.c.h.b16 %v345
    %v1092 = vunpack.c.l.b16 %v346
    %v1093 = vunpack.c.h.b16 %v346
    %v1094 = vunpack.c.l.b16 %v347
    %v1095 = vunpack.c.h.b16 %v347
    %v1096 = vunpack.c.l.b16 %v348
    %v1097 = vunpack.c.h.b16 %v348
    %v1098 = vunpack.c.l.b16 %v349
    %v1099 = vunpack.c.h.b16 %v349
    %v1100 = vunpack.c.l.b16 %v350
    %v1101 = vunpack.c.h.b16 %v350
    %v1102 = vunpack.c.l.b16 %v351
    %v1103 = vunpack.c.h.b16 %v351
    %v1104 = vunpack.c.l.b16 %v352
    %v1105 = vunpack.c.h.b16 %v352
    %v1106 = vunpack.c.l.b16 %v353
    %v1107 = vunpack.c.h.b16 %v353
    %v1108 = vunpack.c.l.b16 %v354
    %v1109 = vunpack.c.h.b16 %v354
    %v1110 = vunpack.c.l.b16 %v355
    %v1111 = vunpack.c.h.b16 %v355
    %v1112 = vunpack.c.l.b16 %v356
    %v1113 = vunpack.c.h.b16 %v356
    %v1114 = vunpack.c.l.b16 %v357
    %v1115 = vunpack.c.h.b16 %v357
    %v1116 = vunpack.c.l.b16 %v358
    %v1117 = vunpack.c.h.b16 %v358
    %v1118 = vunpack.c.l.b16 %v359
    %v1119 = vunpack.c.h.b16 %v359
    %v1120 = vunpack.c.l.b16 %v360
    %v1121 = vunpack.c.h.b16 %v360
    %v1122 = vunpack.c.l.b16 %v361
    %v1123 = vunpack.c.h.b16 %v361
    %v1124 = vunpack.c.l.b16 %v362
    %v1125 = vunpack.c.h.b16 %v362
    %v1126 = vunpack.c.l.b16 %v363
    %v1127 = vunpack.c.h.b16 %v363
    %v1128 = vunpack.c.l.b16 %v364
    %v1129 = vunpack.c.h.b16 %v364
    %v1130 = vunpack.c.l.b16 %v365
    %v1131 = vunpack.c.h.b16 %v365
    %v1132 = vunpack.c.l.b16 %v366
    %v1133 = vunpack.c.h.b16 %v366
    %v1134 = vunpack.c.l.b16 %v367
    %v1135 = vunpack.c.h.b16 %v367
    %v1136 = vpack.c.b16 %v632, %v624
    %v1137 = vpack.c.b16 %v633, %v625
    %v1138 = vpack.c.b16 %v634, %v626
    %v1139 = vpack.c.b16 %v635, %v627
    %v1140 = vpack.c.b16 %v636, %v628
    %v1141 = vpack.c.b16 %v637, %v629
    %v1142 = vpack.c.b16 %v638, %v630
    %v1143 = vpack.c.b16 %v639, %v631
    %v1144 = vpack.c.b16 %v648, %v640
    %v1145 = vpack.c.b16 %v649, %v641
    %v1146 = vpack.c.b16 %v650, %v642
    %v1147 = vpack.c.b16 %v651, %v643
    %v1148 = vpack.c.b16 %v652, %v644
    %v1149 = vpack.c.b16 %v653, %v645
    %v1150 = vpack.c.b16 %v654, %v646
    %v1151 = vpack.c.b16 %v655, %v647
    %v1152 = vpack.c.b16 %v664, %v656
    %v1153 = vpack.c.b16 %v665, %v657
    %v1154 = vpack.c.b16 %v666, %v658
    %v1155 = vpack.c.b16 %v667, %v659
    %v1156 = vpack.c.b16 %v668, %v660
    %v1157 = vpack.c.b16 %v669, %v661
    %v1158 = vpack.c.b16 %v670, %v662
    %v1159 = vpack.c.b16 %v671, %v663
    %v1160 = vpack.c.b16 %v680, %v672
    %v1161 = vpack.c.b16 %v681, %v673
    %v1162 = vpack.c.b16 %v682, %v674
    %v1163 = vpack.c.b16 %v683, %v675
    %v1164 = vpack.c.b16 %v684, %v676
    %v1165 = vpack.c.b16 %v685, %v677
    %v1166 = vpack.c.b16 %v686, %v678
    %v1167 = vpack.c.b16 %v687, %v679
    %v1168 = vpack.c.b16 %v696, %v688
    %v1169 = vpack.c.b16 %v697, %v689
    %v1170 = vpack.c.b16 %v698, %v690
    %v1171 = vpack.c.b16 %v699, %v691
    %v1172 = vpack.c.b16 %v700, %v692
    %v1173 = vpack.c.b16 %v701, %v693
    %v1174 = vpack.c.b16 %v702, %v694
    %v1175 = vpack.c.b16 %v703, %v695
    %v1176 = vpack.c.b16 %v712, %v704
    %v1177 = vpack.c.b16 %v713, %v705
    %v1178 = vpack.c.b16 %v714, %v706
    %v1179 = vpack.c.b16 %v715, %v707
    %v1180 = vpack.c.b16 %v716, %v708
    %v1181 = vpack.c.b16 %v717, %v709
    %v1182 = vpack.c.b16 %v718, %v710
    %v1183 = vpack.c.b16 %v719, %v711
    %v1184 = vpack.c.b16 %v728, %v720
    %v1185 = vpack.c.b16 %v729, %v721
    %v1186 = vpack.c.b16 %v730, %v722
    %v1187 = vpack.c.b16 %v731, %v723
    %v1188 = vpack.c.b16 %v732, %v724
    %v1189 = vpack.c.b16 %v733, %v725
    %v1190 = vpack.c.b16 %v734, %v726
    %v1191 = vpack.c.b16 %v735, %v727
    %v1192 = vpack.c.b16 %v744, %v736
    %v1193 = vpack.c.b16 %v745, %v737
    %v1194 = vpack.c.b16 %v746, %v738
    %v1195 = vpack.c.b16 %v747, %v739
    %v1196 = vpack.c.b16 %v748, %v740
    %v1197 = vpack.c.b16 %v749, %v741
    %v1198 = vpack.c.b16 %v750, %v742
    %v1199 = vpack.c.b16 %v751, %v743
    %v1200 = vpack.c.b16 %v760, %v752
    %v1201 = vpack.c.b16 %v761, %v753
    %v1202 = vpack.c.b16 %v762, %v754
    %v1203 = vpack.c.b16 %v763, %v755
    %v1204 = vpack.c.b16 %v764, %v756
    %v1205 = vpack.c.b16 %v765, %v757
    %v1206 = vpack.c.b16 %v766, %v758
    %v1207 = vpack.c.b16 %v767, %v759
    %v1208 = vpack.c.b16 %v776, %v768
    %v1209 = vpack.c.b16 %v777, %v769
    %v1210 = vpack.c.b16 %v778, %v770
    %v1211 = vpack.c.b16 %v779, %v771
    %v1212 = vpack.c.b16 %v780, %v772
    %v1213 = vpack.c.b16 %v781, %v773
    %v1214 = vpack.c.b16 %v782, %v774
    %v1215 = vpack.c.b16 %v783, %v775
    %v1216 = vpack.c.b16 %v792, %v784
    %v1217 = vpack.c.b16 %v793, %v785
    %v1218 = vpack.c.b16 %v794, %v786
    %v1219 = vpack.c.b16 %v795, %v787
    %v1220 = vpack.c.b16 %v796, %v788
    %v1221 = vpack.c.b16 %v797, %v789
    %v1222 = vpack.c.b16 %v798, %v790
    %v1223 = vpack.c.b16 %v799, %v791
    %v1224 = vpack.c.b16 %v808, %v800
    %v1225 = vpack.c.b16 %v809, %v801
    %v1226 = vpack.c.b16 %v810, %v802
    %v1227 = vpack.c.b16 %v811, %v803
    %v1228 = vpack.c.b16 %v812, %v804
    %v1229 = vpack.c.b16 %v813, %v805
    %v1230 = vpack.c.b16 %v814, %v806
    %v1231 = vpack.c.b16 %v815, %v807
    %v1232 = vpack.c.b16 %v824, %v816
    %v1233 = vpack.c.b16 %v825, %v817
    %v1234 = vpack.c.b16 %v826, %v818
    %v1235 = vpack.c.b16 %v827, %v819
    %v1236 = vpack.c.b16 %v828, %v820
    %v1237 = vpack.c.b16 %v829, %v821
    %v1238 = vpack.c.b16 %v830, %v822
    %v1239 = vpack.c.b16 %v831, %v823
    %v1240 = vpack.c.b16 %v840, %v832
    %v1241 = vpack.c.b16 %v841, %v833
    %v1242 = vpack.c.b16 %v842, %v834
    %v1243 = vpack.c.b16 %v843, %v835
    %v1244 = vpack.c.b16 %v844, %v836
    %v1245 = vpack.c.b16 %v845, %v837
    %v1246 = vpack.c.b16 %v846, %v838
    %v1247 = vpack.c.b16 %v847, %v839
    %v1248 = vpack.c.b16 %v856, %v848
    %v1249 = vpack.c.b16 %v857, %v849
    %v1250 = vpack.c.b16 %v858, %v850
    %v1251 = vpack.c.b16 %v859, %v851
    %v1252 = vpack.c.b16 %v860, %v852
    %v1253 = vpack.c.b16 %v861, %v853
    %v1254 = vpack.c.b16 %v862, %v854
    %v1255 = vpack.c.b16 %v863, %v855
    %v1256 = vpack.c.b16 %v872, %v864
    %v1257 = vpack.c.b16 %v873, %v865
    %v1258 = vpack.c.b16 %v874, %v866
    %v1259 = vpack.c.b16 %v875, %v867
    %v1260 = vpack.c.b16 %v876, %v868
    %v1261 = vpack.c.b16 %v877, %v869
    %v1262 = vpack.c.b16 %v878, %v870
    %v1263 = vpack.c.b16 %v879, %v871
    %v1264 = vpack.c.b16 %v888, %v880
    %v1265 = vpack.c.b16 %v889, %v881
    %v1266 = vpack.c.b16 %v890, %v882
    %v1267 = vpack.c.b16 %v891, %v883
    %v1268 = vpack.c.b16 %v892, %v884
    %v1269 = vpack.c.b16 %v893, %v885
    %v1270 = vpack.c.b16 %v894, %v886
    %v1271 = vpack.c.b16 %v895, %v887
    %v1272 = vpack.c.b16 %v904, %v896
    %v1273 = vpack.c.b16 %v905, %v897
    %v1274 = vpack.c.b16 %v906, %v898
    %v1275 = vpack.c.b16 %v907, %v899
    %v1276 = vpack.c.b16 %v908, %v900
    %v1277 = vpack.c.b16 %v909, %v901
    %v1278 = vpack.c.b16 %v910, %v902
    %v1279 = vpack.c.b16 %v911, %v903
    %v1280 = vpack.c.b16 %v920, %v912
    %v1281 = vpack.c.b16 %v921, %v913
    %v1282 = vpack.c.b16 %v922, %v914
    %v1283 = vpack.c.b16 %v923, %v915
    %v1284 = vpack.c.b16 %v924, %v916
    %v1285 = vpack.c.b16 %v925, %v917
    %v1286 = vpack.c.b16 %v926, %v918
    %v1287 = vpack.c.b16 %v927, %v919
    %v1288 = vpack.c.b16 %v936, %v928
    %v1289 = vpack.c.b16 %v937, %v929
    %v1290 = vpack.c.b16 %v938, %v930
    %v1291 = vpack.c.b16 %v939, %v931
    %v1292 = vpack.c.b16 %v940, %v932
    %v1293 = vpack.c.b16 %v941, %v933
    %v1294 = vpack.c.b16 %v942, %v934
    %v1295 = vpack.c.b16 %v943, %v935
    %v1296 = vpack.c.b16 %v952, %v944
    %v1297 = vpack.c.b16 %v953, %v945
    %v1298 = vpack.c.b16 %v954, %v946
    %v1299 = vpack.c.b16 %v955, %v947
    %v1300 = vpack.c.b16 %v956, %v948
    %v1301 = vpack.c.b16 %v957, %v949
    %v1302 = vpack.c.b16 %v958, %v950
    %v1303 = vpack.c.b16 %v959, %v951
    %v1304 = vpack.c.b16 %v968, %v960
    %v1305 = vpack.c.b16 %v969, %v961
    %v1306 = vpack.c.b16 %v970, %v962
    %v1307 = vpack.c.b16 %v971, %v963
    %v1308 = vpack.c.b16 %v972, %v964
    %v1309 = vpack.c.b16 %v973, %v965
    %v1310 = vpack.c.b16 %v974, %v966
    %v1311 = vpack.c.b16 %v975, %v967
    %v1312 = vpack.c.b16 %v984, %v976
    %v1313 = vpack.c.b16 %v985, %v977
    %v1314 = vpack.c.b16 %v986, %v978
    %v1315 = vpack.c.b16 %v987, %v979
    %v1316 = vpack.c.b16 %v988, %v980
    %v1317 = vpack.c.b16 %v989, %v981
    %v1318 = vpack.c.b16 %v990, %v982
    %v1319 = vpack.c.b16 %v991, %v983
    %v1320 = vpack.c.b16 %v1000, %v992
    %v1321 = vpack.c.b16 %v1001, %v993
    %v1322 = vpack.c.b16 %v1002, %v994
    %v1323 = vpack.c.b16 %v1003, %v995
    %v1324 = vpack.c.b16 %v1004, %v996
    %v1325 = vpack.c.b16 %v1005, %v997
    %v1326 = vpack.c.b16 %v1006, %v998
    %v1327 = vpack.c.b16 %v1007, %v999
    %v1328 = vpack.c.b16 %v1016, %v1008
    %v1329 = vpack.c.b16 %v1017, %v1009
    %v1330 = vpack.c.b16 %v1018, %v1010
    %v1331 = vpack.c.b16 %v1019, %v1011
    %v1332 = vpack.c.b16 %v1020, %v1012
    %v1333 = vpack.c.b16 %v1021, %v1013
    %v1334 = vpack.c.b16 %v1022, %v1014
    %v1335 = vpack.c.b16 %v1023, %v1015
    %v1336 = vpack.c.b16 %v1032, %v1024
    %v1337 = vpack.c.b16 %v1033, %v1025
    %v1338 = vpack.c.b16 %v1034, %v1026
    %v1339 = vpack.c.b16 %v1035, %v1027
    %v1340 = vpack.c.b16 %v1036, %v1028
    %v1341 = vpack.c.b16 %v1037, %v1029
    %v1342 = vpack.c.b16 %v1038, %v1030
    %v1343 = vpack.c.b16 %v1039, %v1031
    %v1344 = vpack.c.b16 %v1048, %v1040
    %v1345 = vpack.c.b16 %v1049, %v1041
    %v1346 = vpack.c.b16 %v1050, %v1042
    %v1347 = vpack.c.b16 %v1051, %v1043
    %v1348 = vpack.c.b16 %v1052, %v1044
    %v1349 = vpack.c.b16 %v1053, %v1045
    %v1350 = vpack.c.b16 %v1054, %v1046
    %v1351 = vpack.c.b16 %v1055, %v1047
    %v1352 = vpack.c.b16 %v1064, %v1056
    %v1353 = vpack.c.b16 %v1065, %v1057
    %v1354 = vpack.c.b16 %v1066, %v1058
    %v1355 = vpack.c.b16 %v1067, %v1059
    %v1356 = vpack.c.b16 %v1068, %v1060
    %v1357 = vpack.c.b16 %v1069, %v1061
    %v1358 = vpack.c.b16 %v1070, %v1062
    %v1359 = vpack.c.b16 %v1071, %v1063
    %v1360 = vpack.c.b16 %v1080, %v1072
    %v1361 = vpack.c.b16 %v1081, %v1073
    %v1362 = vpack.c.b16 %v1082, %v1074
    %v1363 = vpack.c.b16 %v1083, %v1075
    %v1364 = vpack.c.b16 %v1084, %v1076
    %v1365 = vpack.c.b16 %v1085, %v1077
    %v1366 = vpack.c.b16 %v1086, %v1078
    %v1367 = vpack.c.b16 %v1087, %v1079
    %v1368 = vpack.c.b16 %v1096, %v1088
    %v1369 = vpack.c.b16 %v1097, %v1089
    %v1370 = vpack.c.b16 %v1098, %v1090
    %v1371 = vpack.c.b16 %v1099, %v1091
    %v1372 = vpack.c.b16 %v1100, %v1092
    %v1373 = vpack.c.b16 %v1101, %v1093
    %v1374 = vpack.c.b16 %v1102, %v1094
    %v1375 = vpack.c.b16 %v1103, %v1095
    %v1376 = vpack.c.b16 %v1112, %v1104
    %v1377 = vpack.c.b16 %v1113, %v1105
    %v1378 = vpack.c.b16 %v1114, %v1106
    %v1379 = vpack.c.b16 %v1115, %v1107
    %v1380 = vpack.c.b16 %v1116, %v1108
    %v1381 = vpack.c.b16 %v1117, %v1109
    %v1382 = vpack.c.b16 %v1118, %v1110
    %v1383 = vpack.c.b16 %v1119, %v1111
    %v1384 = vpack.c.b16 %v1128, %v1120
    %v1385 = vpack.c.b16 %v1129, %v1121
    %v1386 = vpack.c.b16 %v1130, %v1122
    %v1387 = vpack.c.b16 %v1131, %v1123
    %v1388 = vpack.c.b16 %v1132, %v1124
    %v1389 = vpack.c.b16 %v1133, %v1125
    %v1390 = vpack.c.b16 %v1134, %v1126
    %v1391 = vpack.c.b16 %v1135, %v1127
    %1648 = vmatprep.subr.bf16.mxu0 %v1193
    %1649 = vmatpush1.bf16.msra.mxu0 %v1192
    %1650 = vmatprep.subr.bf16.mxu0 %v1185
    %1651 = vmatpush1.bf16.msra.mxu0 %v1184
    %1652 = vmatprep.subr.bf16.mxu0 %v1177
    %1653 = vmatpush1.bf16.msra.mxu0 %v1176
    %1654 = vmatprep.subr.bf16.mxu0 %v1169
    %1655 = vmatpush1.bf16.msra.mxu0 %v1168
    %1656 = vmatprep.subr.bf16.mxu0 %v1161
    %1657 = vmatpush1.bf16.msra.mxu0 %v1160
    %1658 = vmatprep.subr.bf16.mxu0 %v1153
    %1659 = vmatpush1.bf16.msra.mxu0 %v1152
    %1660 = vmatprep.subr.bf16.mxu0 %v1145
    %1661 = vmatpush1.bf16.msra.mxu0 %v1144
    %1662 = vmatprep.subr.bf16.mxu0 %v1137
    %1663 = vmatpush1.bf16.msra.mxu0 %v1136
    %1664 = vmatprep.subr.bf16.mxu0 %v1257
    %1665 = vmatpush2.bf16.msra.mxu0 %v1256
    %1666 = vmatprep.subr.bf16.mxu0 %v1249
    %1667 = vmatpush2.bf16.msra.mxu0 %v1248
    %1668 = vmatprep.subr.bf16.mxu0 %v1241
    %1669 = vmatpush2.bf16.msra.mxu0 %v1240
    %1670 = vmatprep.subr.bf16.mxu0 %v1233
    %1671 = vmatpush2.bf16.msra.mxu0 %v1232
    %1672 = vmatprep.subr.bf16.mxu0 %v1225
    %1673 = vmatpush2.bf16.msra.mxu0 %v1224
    %1674 = vmatprep.subr.bf16.mxu0 %v1217
    %1675 = vmatpush2.bf16.msra.mxu0 %v1216
    %1676 = vmatprep.subr.bf16.mxu0 %v1209
    %1677 = vmatpush2.bf16.msra.mxu0 %v1208
    %1678 = vmatprep.subr.bf16.mxu0 %v1201
    %1679 = vmatpush2.bf16.msra.mxu0 %v1200
    %1680 = vmatprep.mubr.bf16.mxu0 %v109
    %1681 = vmatmul.mubr.bf16.gmra.mxu0 %v108
    %v1682 = vpop.f32.mrf.mxu0
    %v1683 = vadd.f32 0.0, %v1682
    %v1684 = vpop.f32.mrf.mxu0
    %v1685 = vadd.f32 0.0, %v1684
    %v1686 = vpop.f32.mrf.mxu0
    %v1687 = vpop.f32.mrf.mxu0
    %1688 = vdwg.mxu0
    %1689 = vmatprep.subr.bf16.mxu0 %v1321
    %1690 = vmatpush1.bf16.msra.mxu0 %v1320
    %1691 = vmatprep.subr.bf16.mxu0 %v1313
    %1692 = vmatpush1.bf16.msra.mxu0 %v1312
    %1693 = vmatprep.subr.bf16.mxu0 %v1305
    %1694 = vmatpush1.bf16.msra.mxu0 %v1304
    %1695 = vmatprep.subr.bf16.mxu0 %v1297
    %1696 = vmatpush1.bf16.msra.mxu0 %v1296
    %1697 = vmatprep.subr.bf16.mxu0 %v1289
    %1698 = vmatpush1.bf16.msra.mxu0 %v1288
    %1699 = vmatprep.subr.bf16.mxu0 %v1281
    %1700 = vmatpush1.bf16.msra.mxu0 %v1280
    %1701 = vmatprep.subr.bf16.mxu0 %v1273
    %1702 = vmatpush1.bf16.msra.mxu0 %v1272
    %1703 = vmatprep.subr.bf16.mxu0 %v1265
    %1704 = vmatpush1.bf16.msra.mxu0 %v1264
    %1705 = vmatprep.subr.bf16.mxu0 %v1385
    %1706 = vmatpush2.bf16.msra.mxu0 %v1384
    %1707 = vmatprep.subr.bf16.mxu0 %v1377
    %1708 = vmatpush2.bf16.msra.mxu0 %v1376
    %1709 = vmatprep.subr.bf16.mxu0 %v1369
    %1710 = vmatpush2.bf16.msra.mxu0 %v1368
    %1711 = vmatprep.subr.bf16.mxu0 %v1361
    %1712 = vmatpush2.bf16.msra.mxu0 %v1360
    %1713 = vmatprep.subr.bf16.mxu0 %v1353
    %1714 = vmatpush2.bf16.msra.mxu0 %v1352
    %1715 = vmatprep.subr.bf16.mxu0 %v1345
    %1716 = vmatpush2.bf16.msra.mxu0 %v1344
    %1717 = vmatprep.subr.bf16.mxu0 %v1337
    %1718 = vmatpush2.bf16.msra.mxu0 %v1336
    %1719 = vmatprep.subr.bf16.mxu0 %v1329
    %1720 = vmatpush2.bf16.msra.mxu0 %v1328
    %1721 = vmatprep.mubr.bf16.mxu0 %v111
    %1722 = vmatmul.mubr.bf16.gmra.mxu0 %v110
    %v1723 = vpop.f32.mrf.mxu0
    %v1724 = vadd.f32 %v1683, %v1723
    %v1725 = vpop.f32.mrf.mxu0
    %v1726 = vadd.f32 %v1685, %v1725
    %v1727 = vpop.f32.mrf.mxu0
    %v1728 = vpop.f32.mrf.mxu0
    %1729 = vdwg.mxu0
    %1730 = vmatprep.subr.bf16.mxu0 %v1195
    %1731 = vmatpush1.bf16.msra.mxu0 %v1194
    %1732 = vmatprep.subr.bf16.mxu0 %v1187
    %1733 = vmatpush1.bf16.msra.mxu0 %v1186
    %1734 = vmatprep.subr.bf16.mxu0 %v1179
    %1735 = vmatpush1.bf16.msra.mxu0 %v1178
    %1736 = vmatprep.subr.bf16.mxu0 %v1171
    %1737 = vmatpush1.bf16.msra.mxu0 %v1170
    %1738 = vmatprep.subr.bf16.mxu0 %v1163
    %1739 = vmatpush1.bf16.msra.mxu0 %v1162
    %1740 = vmatprep.subr.bf16.mxu0 %v1155
    %1741 = vmatpush1.bf16.msra.mxu0 %v1154
    %1742 = vmatprep.subr.bf16.mxu0 %v1147
    %1743 = vmatpush1.bf16.msra.mxu0 %v1146
    %1744 = vmatprep.subr.bf16.mxu0 %v1139
    %1745 = vmatpush1.bf16.msra.mxu0 %v1138
    %1746 = vmatprep.subr.bf16.mxu0 %v1259
    %1747 = vmatpush2.bf16.msra.mxu0 %v1258
    %1748 = vmatprep.subr.bf16.mxu0 %v1251
    %1749 = vmatpush2.bf16.msra.mxu0 %v1250
    %1750 = vmatprep.subr.bf16.mxu0 %v1243
    %1751 = vmatpush2.bf16.msra.mxu0 %v1242
    %1752 = vmatprep.subr.bf16.mxu0 %v1235
    %1753 = vmatpush2.bf16.msra.mxu0 %v1234
    %1754 = vmatprep.subr.bf16.mxu0 %v1227
    %1755 = vmatpush2.bf16.msra.mxu0 %v1226
    %1756 = vmatprep.subr.bf16.mxu0 %v1219
    %1757 = vmatpush2.bf16.msra.mxu0 %v1218
    %1758 = vmatprep.subr.bf16.mxu0 %v1211
    %1759 = vmatpush2.bf16.msra.mxu0 %v1210
    %1760 = vmatprep.subr.bf16.mxu0 %v1203
    %1761 = vmatpush2.bf16.msra.mxu0 %v1202
    %1762 = vmatprep.mubr.bf16.mxu0 %v109
    %1763 = vmatmul.mubr.bf16.gmra.mxu0 %v108
    %v1764 = vpop.f32.mrf.mxu0
    %v1765 = vadd.f32 0.0, %v1764
    %v1766 = vpop.f32.mrf.mxu0
    %v1767 = vadd.f32 0.0, %v1766
    %v1768 = vpop.f32.mrf.mxu0
    %v1769 = vpop.f32.mrf.mxu0
    %1770 = vdwg.mxu0
    %1771 = vmatprep.subr.bf16.mxu0 %v1323
    %1772 = vmatpush1.bf16.msra.mxu0 %v1322
    %1773 = vmatprep.subr.bf16.mxu0 %v1315
    %1774 = vmatpush1.bf16.msra.mxu0 %v1314
    %1775 = vmatprep.subr.bf16.mxu0 %v1307
    %1776 = vmatpush1.bf16.msra.mxu0 %v1306
    %1777 = vmatprep.subr.bf16.mxu0 %v1299
    %1778 = vmatpush1.bf16.msra.mxu0 %v1298
    %1779 = vmatprep.subr.bf16.mxu0 %v1291
    %1780 = vmatpush1.bf16.msra.mxu0 %v1290
    %1781 = vmatprep.subr.bf16.mxu0 %v1283
    %1782 = vmatpush1.bf16.msra.mxu0 %v1282
    %1783 = vmatprep.subr.bf16.mxu0 %v1275
    %1784 = vmatpush1.bf16.msra.mxu0 %v1274
    %1785 = vmatprep.subr.bf16.mxu0 %v1267
    %1786 = vmatpush1.bf16.msra.mxu0 %v1266
    %1787 = vmatprep.subr.bf16.mxu0 %v1387
    %1788 = vmatpush2.bf16.msra.mxu0 %v1386
    %1789 = vmatprep.subr.bf16.mxu0 %v1379
    %1790 = vmatpush2.bf16.msra.mxu0 %v1378
    %1791 = vmatprep.subr.bf16.mxu0 %v1371
    %1792 = vmatpush2.bf16.msra.mxu0 %v1370
    %1793 = vmatprep.subr.bf16.mxu0 %v1363
    %1794 = vmatpush2.bf16.msra.mxu0 %v1362
    %1795 = vmatprep.subr.bf16.mxu0 %v1355
    %1796 = vmatpush2.bf16.msra.mxu0 %v1354
    %1797 = vmatprep.subr.bf16.mxu0 %v1347
    %1798 = vmatpush2.bf16.msra.mxu0 %v1346
    %1799 = vmatprep.subr.bf16.mxu0 %v1339
    %1800 = vmatpush2.bf16.msra.mxu0 %v1338
    %1801 = vmatprep.subr.bf16.mxu0 %v1331
    %1802 = vmatpush2.bf16.msra.mxu0 %v1330
    %1803 = vmatprep.mubr.bf16.mxu0 %v111
    %1804 = vmatmul.mubr.bf16.gmra.mxu0 %v110
    %v1805 = vpop.f32.mrf.mxu0
    %v1806 = vadd.f32 %v1765, %v1805
    %v1807 = vpop.f32.mrf.mxu0
    %v1808 = vadd.f32 %v1767, %v1807
    %v1809 = vpop.f32.mrf.mxu0
    %v1810 = vpop.f32.mrf.mxu0
    %1811 = vdwg.mxu0
    %1812 = vmatprep.subr.bf16.mxu0 %v1197
    %1813 = vmatpush1.bf16.msra.mxu0 %v1196
    %1814 = vmatprep.subr.bf16.mxu0 %v1189
    %1815 = vmatpush1.bf16.msra.mxu0 %v1188
    %1816 = vmatprep.subr.bf16.mxu0 %v1181
    %1817 = vmatpush1.bf16.msra.mxu0 %v1180
    %1818 = vmatprep.subr.bf16.mxu0 %v1173
    %1819 = vmatpush1.bf16.msra.mxu0 %v1172
    %1820 = vmatprep.subr.bf16.mxu0 %v1165
    %1821 = vmatpush1.bf16.msra.mxu0 %v1164
    %1822 = vmatprep.subr.bf16.mxu0 %v1157
    %1823 = vmatpush1.bf16.msra.mxu0 %v1156
    %1824 = vmatprep.subr.bf16.mxu0 %v1149
    %1825 = vmatpush1.bf16.msra.mxu0 %v1148
    %1826 = vmatprep.subr.bf16.mxu0 %v1141
    %1827 = vmatpush1.bf16.msra.mxu0 %v1140
    %1828 = vmatprep.subr.bf16.mxu0 %v1261
    %1829 = vmatpush2.bf16.msra.mxu0 %v1260
    %1830 = vmatprep.subr.bf16.mxu0 %v1253
    %1831 = vmatpush2.bf16.msra.mxu0 %v1252
    %1832 = vmatprep.subr.bf16.mxu0 %v1245
    %1833 = vmatpush2.bf16.msra.mxu0 %v1244
    %1834 = vmatprep.subr.bf16.mxu0 %v1237
    %1835 = vmatpush2.bf16.msra.mxu0 %v1236
    %1836 = vmatprep.subr.bf16.mxu0 %v1229
    %1837 = vmatpush2.bf16.msra.mxu0 %v1228
    %1838 = vmatprep.subr.bf16.mxu0 %v1221
    %1839 = vmatpush2.bf16.msra.mxu0 %v1220
    %1840 = vmatprep.subr.bf16.mxu0 %v1213
    %1841 = vmatpush2.bf16.msra.mxu0 %v1212
    %1842 = vmatprep.subr.bf16.mxu0 %v1205
    %1843 = vmatpush2.bf16.msra.mxu0 %v1204
    %1844 = vmatprep.mubr.bf16.mxu0 %v109
    %1845 = vmatmul.mubr.bf16.gmra.mxu0 %v108
    %v1846 = vpop.f32.mrf.mxu0
    %v1847 = vadd.f32 0.0, %v1846
    %v1848 = vpop.f32.mrf.mxu0
    %v1849 = vadd.f32 0.0, %v1848
    %v1850 = vpop.f32.mrf.mxu0
    %v1851 = vpop.f32.mrf.mxu0
    %1852 = vdwg.mxu0
    %1853 = vmatprep.subr.bf16.mxu0 %v1325
    %1854 = vmatpush1.bf16.msra.mxu0 %v1324
    %1855 = vmatprep.subr.bf16.mxu0 %v1317
    %1856 = vmatpush1.bf16.msra.mxu0 %v1316
    %1857 = vmatprep.subr.bf16.mxu0 %v1309
    %1858 = vmatpush1.bf16.msra.mxu0 %v1308
    %1859 = vmatprep.subr.bf16.mxu0 %v1301
    %1860 = vmatpush1.bf16.msra.mxu0 %v1300
    %1861 = vmatprep.subr.bf16.mxu0 %v1293
    %1862 = vmatpush1.bf16.msra.mxu0 %v1292
    %1863 = vmatprep.subr.bf16.mxu0 %v1285
    %1864 = vmatpush1.bf16.msra.mxu0 %v1284
    %1865 = vmatprep.subr.bf16.mxu0 %v1277
    %1866 = vmatpush1.bf16.msra.mxu0 %v1276
    %1867 = vmatprep.subr.bf16.mxu0 %v1269
    %1868 = vmatpush1.bf16.msra.mxu0 %v1268
    %1869 = vmatprep.subr.bf16.mxu0 %v1389
    %1870 = vmatpush2.bf16.msra.mxu0 %v1388
    %1871 = vmatprep.subr.bf16.mxu0 %v1381
    %1872 = vmatpush2.bf16.msra.mxu0 %v1380
    %1873 = vmatprep.subr.bf16.mxu0 %v1373
    %1874 = vmatpush2.bf16.msra.mxu0 %v1372
    %1875 = vmatprep.subr.bf16.mxu0 %v1365
    %1876 = vmatpush2.bf16.msra.mxu0 %v1364
    %1877 = vmatprep.subr.bf16.mxu0 %v1357
    %1878 = vmatpush2.bf16.msra.mxu0 %v1356
    %1879 = vmatprep.subr.bf16.mxu0 %v1349
    %1880 = vmatpush2.bf16.msra.mxu0 %v1348
    %1881 = vmatprep.subr.bf16.mxu0 %v1341
    %1882 = vmatpush2.bf16.msra.mxu0 %v1340
    %1883 = vmatprep.subr.bf16.mxu0 %v1333
    %1884 = vmatpush2.bf16.msra.mxu0 %v1332
    %1885 = vmatprep.mubr.bf16.mxu0 %v111
    %1886 = vmatmul.mubr.bf16.gmra.mxu0 %v110
    %v1887 = vpop.f32.mrf.mxu0
    %v1888 = vadd.f32 %v1847, %v1887
    %v1889 = vpop.f32.mrf.mxu0
    %v1890 = vadd.f32 %v1849, %v1889
    %v1891 = vpop.f32.mrf.mxu0
    %v1892 = vpop.f32.mrf.mxu0
    %1893 = vdwg.mxu0
    %1894 = vmatprep.subr.bf16.mxu0 %v1199
    %1895 = vmatpush1.bf16.msra.mxu0 %v1198
    %1896 = vmatprep.subr.bf16.mxu0 %v1191
    %1897 = vmatpush1.bf16.msra.mxu0 %v1190
    %1898 = vmatprep.subr.bf16.mxu0 %v1183
    %1899 = vmatpush1.bf16.msra.mxu0 %v1182
    %1900 = vmatprep.subr.bf16.mxu0 %v1175
    %1901 = vmatpush1.bf16.msra.mxu0 %v1174
    %1902 = vmatprep.subr.bf16.mxu0 %v1167
    %1903 = vmatpush1.bf16.msra.mxu0 %v1166
    %1904 = vmatprep.subr.bf16.mxu0 %v1159
    %1905 = vmatpush1.bf16.msra.mxu0 %v1158
    %1906 = vmatprep.subr.bf16.mxu0 %v1151
    %1907 = vmatpush1.bf16.msra.mxu0 %v1150
    %1908 = vmatprep.subr.bf16.mxu0 %v1143
    %1909 = vmatpush1.bf16.msra.mxu0 %v1142
    %1910 = vmatprep.subr.bf16.mxu0 %v1263
    %1911 = vmatpush2.bf16.msra.mxu0 %v1262
    %1912 = vmatprep.subr.bf16.mxu0 %v1255
    %1913 = vmatpush2.bf16.msra.mxu0 %v1254
    %1914 = vmatprep.subr.bf16.mxu0 %v1247
    %1915 = vmatpush2.bf16.msra.mxu0 %v1246
    %1916 = vmatprep.subr.bf16.mxu0 %v1239
    %1917 = vmatpush2.bf16.msra.mxu0 %v1238
    %1918 = vmatprep.subr.bf16.mxu0 %v1231
    %1919 = vmatpush2.bf16.msra.mxu0 %v1230
    %1920 = vmatprep.subr.bf16.mxu0 %v1223
    %1921 = vmatpush2.bf16.msra.mxu0 %v1222
    %1922 = vmatprep.subr.bf16.mxu0 %v1215
    %1923 = vmatpush2.bf16.msra.mxu0 %v1214
    %1924 = vmatprep.subr.bf16.mxu0 %v1207
    %1925 = vmatpush2.bf16.msra.mxu0 %v1206
    %1926 = vmatprep.mubr.bf16.mxu0 %v109
    %1927 = vmatmul.mubr.bf16.gmra.mxu0 %v108
    %v1928 = vpop.f32.mrf.mxu0
    %v1929 = vadd.f32 0.0, %v1928
    %v1930 = vpop.f32.mrf.mxu0
    %v1931 = vadd.f32 0.0, %v1930
    %v1932 = vpop.f32.mrf.mxu0
    %v1933 = vpop.f32.mrf.mxu0
    %1934 = vdwg.mxu0
    %1935 = vmatprep.subr.bf16.mxu0 %v1327
    %1936 = vmatpush1.bf16.msra.mxu0 %v1326
    %1937 = vmatprep.subr.bf16.mxu0 %v1319
    %1938 = vmatpush1.bf16.msra.mxu0 %v1318
    %1939 = vmatprep.subr.bf16.mxu0 %v1311
    %1940 = vmatpush1.bf16.msra.mxu0 %v1310
    %1941 = vmatprep.subr.bf16.mxu0 %v1303
    %1942 = vmatpush1.bf16.msra.mxu0 %v1302
    %1943 = vmatprep.subr.bf16.mxu0 %v1295
    %1944 = vmatpush1.bf16.msra.mxu0 %v1294
    %1945 = vmatprep.subr.bf16.mxu0 %v1287
    %1946 = vmatpush1.bf16.msra.mxu0 %v1286
    %1947 = vmatprep.subr.bf16.mxu0 %v1279
    %1948 = vmatpush1.bf16.msra.mxu0 %v1278
    %1949 = vmatprep.subr.bf16.mxu0 %v1271
    %1950 = vmatpush1.bf16.msra.mxu0 %v1270
    %1951 = vmatprep.subr.bf16.mxu0 %v1391
    %1952 = vmatpush2.bf16.msra.mxu0 %v1390
    %1953 = vmatprep.subr.bf16.mxu0 %v1383
    %1954 = vmatpush2.bf16.msra.mxu0 %v1382
    %1955 = vmatprep.subr.bf16.mxu0 %v1375
    %1956 = vmatpush2.bf16.msra.mxu0 %v1374
    %1957 = vmatprep.subr.bf16.mxu0 %v1367
    %1958 = vmatpush2.bf16.msra.mxu0 %v1366
    %1959 = vmatprep.subr.bf16.mxu0 %v1359
    %1960 = vmatpush2.bf16.msra.mxu0 %v1358
    %1961 = vmatprep.subr.bf16.mxu0 %v1351
    %1962 = vmatpush2.bf16.msra.mxu0 %v1350
    %1963 = vmatprep.subr.bf16.mxu0 %v1343
    %1964 = vmatpush2.bf16.msra.mxu0 %v1342
    %1965 = vmatprep.subr.bf16.mxu0 %v1335
    %1966 = vmatpush2.bf16.msra.mxu0 %v1334
    %1967 = vmatprep.mubr.bf16.mxu0 %v111
    %1968 = vmatmul.mubr.bf16.gmra.mxu0 %v110
    %v1969 = vpop.f32.mrf.mxu0
    %v1970 = vadd.f32 %v1929, %v1969
    %v1971 = vpop.f32.mrf.mxu0
    %v1972 = vadd.f32 %v1931, %v1971
    %v1973 = vpop.f32.mrf.mxu0
    %v1974 = vpop.f32.mrf.mxu0
    %1975 = vdwg.mxu0
    %vm1976 = vcmask 1041408
    %v1977 = vsel %vm1976, %v94, 0.0
    %v1978 = vsel %vm1976, %v102, 0.0
    %v1979 = vadd.f32 %v1977, %v1978
    %1980 = vadd.xlane.f32.xlu0 %v1979
    %v1981 = vpop.xlane.xlu0 %1980
    %v1982 = vrot.slane %v1981, 4
    %v1983 = vadd.f32 %v1981, %v1982
    %v1984 = vrot.slane %v1983, 2
    %v1985 = vadd.f32 %v1983, %v1984
    %v1986 = vrot.slane %v1985, 1
    %v1987 = vadd.f32 %v1985, %v1986
    %s1988 = vtos %v1987
    %v1989 = vstv %s1988
    %v1990 = vmul.f32 %v1989, 0.001953125
    %v1991 = vld [vmem:[#allocation6] ss:$2 sm:$0xff]
    %v1992 = vmul.f32 %v1990, %v1991
    %v1993 = vadd.f32 %v1992, 0.0
    %v1994 = vrot.slane %v85, 4
    %v1996 = vunpack.c.l.s4 1983009808
    %v1997 = vunpack.c.0.s8 %v1996
    %v1998 = vlaneseq
    %v1999 = vshrl.u32 %v1998, 7
    %v2000 = vsub.s32 %v1997, %v1999
    %v2001 = vrot.slane %v1994, %v2000
    %v2002 = vcombine.high %v2001, %v2001
    %v2005 = vsel %vm1976, %v2001, 0.0
    %v2006 = vsel %vm1976, %v2002, 0.0
    %v2007 = vadd.f32 %v2005, %v2006
    %2008 = vadd.xlane.f32.xlu0 %v2007
    %v2009 = vpop.xlane.xlu0 %2008
    %v2010 = vrot.slane %v2009, 4
    %v2011 = vadd.f32 %v2009, %v2010
    %v2012 = vrot.slane %v2011, 2
    %v2013 = vadd.f32 %v2011, %v2012
    %v2014 = vrot.slane %v2013, 1
    %v2015 = vadd.f32 %v2013, %v2014
    %s2016 = vtos %v2015
    %v2017 = vstv %s2016
    %v2018 = vmul.f32 %v2017, 0.001953125
    %s2019 = scalar_lea.vmem [#allocation6], 1
    %v2020 = vld [vmem:[%s2019] ss:$2 sm:$0xff]
    %v2021 = vmul.f32 %v2018, %v2020
    %v2022 = vadd.f32 %v1993, %v2021
    %v2024 = vlaneseq
    %v2025 = vshrl.u32 %v2024, 7
    %v2026 = vsub.s32 0, %v2025
    %v2027 = vrot.slane %v2022, %v2026
    %v2028 = vlaneseq
    %v2029 = vshrl.u32 %v2028, 7
    %v2030 = vsub.s32 1, %v2029
    %v2031 = vrot.slane %v2022, %v2030
    %v2032 = vlaneseq
    %v2033 = vshrl.u32 %v2032, 7
    %v2034 = vsub.s32 2, %v2033
    %v2035 = vrot.slane %v2022, %v2034
    %v2036 = vlaneseq
    %v2037 = vshrl.u32 %v2036, 7
    %v2038 = vsub.s32 3, %v2037
    %v2039 = vrot.slane %v2022, %v2038
    %v2040 = vlaneseq
    %v2041 = vshrl.u32 %v2040, 7
    %v2042 = vsub.s32 4, %v2041
    %v2043 = vrot.slane %v2022, %v2042
    %v2044 = vlaneseq
    %v2045 = vshrl.u32 %v2044, 7
    %v2046 = vsub.s32 5, %v2045
    %v2047 = vrot.slane %v2022, %v2046
    %v2048 = vlaneseq
    %v2049 = vshrl.u32 %v2048, 7
    %v2050 = vsub.s32 6, %v2049
    %v2051 = vrot.slane %v2022, %v2050
    %v2052 = vlaneseq
    %v2053 = vshrl.u32 %v2052, 7
    %v2054 = vsub.s32 7, %v2053
    %v2055 = vrot.slane %v2022, %v2054
    %v2064 = vsub.f32 %v1724, %v2027
    %v2065 = vsub.f32 %v1726, %v2031
    %v2066 = vsub.f32 %v1806, %v2035
    %v2067 = vsub.f32 %v1808, %v2039
    %v2068 = vsub.f32 %v1888, %v2043
    %v2069 = vsub.f32 %v1890, %v2047
    %v2070 = vsub.f32 %v1970, %v2051
    %v2071 = vsub.f32 %v1972, %v2055
    %v2072 = vsel %vm1976, %v2064, 0.0
    %v2073 = vsel %vm1976, %v2065, 0.0
    %v2074 = vadd.f32 %v2072, %v2073
    %2075 = vadd.xlane.f32.xlu0 %v2074
    %v2076 = vpop.xlane.xlu0 %2075
    %v2077 = vrot.slane %v2076, 4
    %v2078 = vadd.f32 %v2076, %v2077
    %v2079 = vrot.slane %v2078, 2
    %v2080 = vadd.f32 %v2078, %v2079
    %v2081 = vrot.slane %v2080, 1
    %v2082 = vadd.f32 %v2080, %v2081
    %s2083 = vtos %v2082
    %v2084 = vstv %s2083
    %v2085 = vrcp.pop 512.0
    %v2086 = vmul.f32 %v2084, %v2085
    %v2087 = vsub.f32 %v2064, %v2086
    %v2088 = vsub.f32 %v2065, %v2086
    %v2089 = vmul.f32 %v2087, %v2087
    %v2090 = vmul.f32 %v2088, %v2088
    %v2091 = vsel %vm1976, %v2089, 0.0
    %v2092 = vsel %vm1976, %v2090, 0.0
    %v2093 = vadd.f32 %v2091, %v2092
    %2094 = vadd.xlane.f32.xlu0 %v2093
    %v2095 = vpop.xlane.xlu0 %2094
    %v2096 = vrot.slane %v2095, 4
    %v2097 = vadd.f32 %v2095, %v2096
    %v2098 = vrot.slane %v2097, 2
    %v2099 = vadd.f32 %v2097, %v2098
    %v2100 = vrot.slane %v2099, 1
    %v2101 = vadd.f32 %v2099, %v2100
    %s2102 = vtos %v2101
    %v2103 = vstv %s2102
    %v2104 = vmul.f32 %v2103, %v2085
    %s2105 = sld [smem:[#allocation11]]
    %v2106 = vadd.f32 %v2104, 1e-05
    %v2107 = vrsqrt.pop %v2106
    %v2108 = vstv %s2105
    %v2109 = vmul.f32 %v2108, %v2107
    %v2110 = vmul.f32 %v2087, %v2109
    %v2111 = vmul.f32 %v2088, %v2109
    %s2112 = sld [smem:[#allocation11 + $0x80]]
    %v2113 = vstv %s2112
    %v2114 = vadd.f32 %v2110, %v2113
    %v2115 = vadd.f32 %v2111, %v2113
    %v2116 = vmax.f32 %v2114, 0.0
    %v2117 = vmax.f32 %v2115, 0.0
    %v2120 = vcombine.low %v2116, %v2117
    %v2122 = vunpack.c.l.s4 1983009808
    %v2123 = vunpack.c.0.s8 %v2122
    %v2124 = vlaneseq
    %v2125 = vshrl.u32 %v2124, 7
    %v2126 = vsub.s32 %v2123, %v2125
    %v2127 = vrot.slane %v2120, %v2126
    %2129 = vst [vmem:[#allocation2] sm:$0xf] %v2127
    %v2130 = vsel %vm1976, %v2116, 0.0
    %v2131 = vsel %vm1976, %v2117, 0.0
    %v2132 = vadd.f32 %v2130, %v2131
    %2133 = vadd.xlane.f32.xlu0 %v2132
    %v2134 = vpop.xlane.xlu0 %2133
    %v2135 = vrot.slane %v2134, 4
    %v2136 = vadd.f32 %v2134, %v2135
    %v2137 = vrot.slane %v2136, 2
    %v2138 = vadd.f32 %v2136, %v2137
    %v2139 = vrot.slane %v2138, 1
    %v2140 = vadd.f32 %v2138, %v2139
    %s2141 = vtos %v2140
    %v2142 = vstv %s2141
    %v2143 = vmul.f32 %v2142, 0.001953125
    %v2144 = vld [vmem:[#allocation9] ss:$4 sm:$0xff]
    %v2145 = vmul.f32 %v2143, %v2144
    %v2146 = vadd.f32 %v2145, 0.0
    %v2147 = vsel %vm1976, %v2066, 0.0
    %v2148 = vsel %vm1976, %v2067, 0.0
    %v2149 = vadd.f32 %v2147, %v2148
    %2150 = vadd.xlane.f32.xlu0 %v2149
    %v2151 = vpop.xlane.xlu0 %2150
    %v2152 = vrot.slane %v2151, 4
    %v2153 = vadd.f32 %v2151, %v2152
    %v2154 = vrot.slane %v2153, 2
    %v2155 = vadd.f32 %v2153, %v2154
    %v2156 = vrot.slane %v2155, 1
    %v2157 = vadd.f32 %v2155, %v2156
    %s2158 = vtos %v2157
    %v2159 = vstv %s2158
    %v2160 = vmul.f32 %v2159, %v2085
    %v2161 = vsub.f32 %v2066, %v2160
    %v2162 = vsub.f32 %v2067, %v2160
    %v2163 = vmul.f32 %v2161, %v2161
    %v2164 = vmul.f32 %v2162, %v2162
    %v2165 = vsel %vm1976, %v2163, 0.0
    %v2166 = vsel %vm1976, %v2164, 0.0
    %v2167 = vadd.f32 %v2165, %v2166
    %2168 = vadd.xlane.f32.xlu0 %v2167
    %v2169 = vpop.xlane.xlu0 %2168
    %v2170 = vrot.slane %v2169, 4
    %v2171 = vadd.f32 %v2169, %v2170
    %v2172 = vrot.slane %v2171, 2
    %v2173 = vadd.f32 %v2171, %v2172
    %v2174 = vrot.slane %v2173, 1
    %v2175 = vadd.f32 %v2173, %v2174
    %s2176 = vtos %v2175
    %v2177 = vstv %s2176
    %v2178 = vmul.f32 %v2177, %v2085
    %s2179 = sld [smem:[#allocation11 + $0x1]]
    %v2180 = vadd.f32 %v2178, 1e-05
    %v2181 = vrsqrt.pop %v2180
    %v2182 = vstv %s2179
    %v2183 = vmul.f32 %v2182, %v2181
    %v2184 = vmul.f32 %v2161, %v2183
    %v2185 = vmul.f32 %v2162, %v2183
    %s2186 = sld [smem:[#allocation11 + $0x81]]
    %v2187 = vstv %s2186
    %v2188 = vadd.f32 %v2184, %v2187
    %v2189 = vadd.f32 %v2185, %v2187
    %v2190 = vmax.f32 %v2188, 0.0
    %v2191 = vmax.f32 %v2189, 0.0
    %v2194 = vcombine.low %v2190, %v2191
    %v2196 = vunpack.c.l.s4 1983009808
    %v2197 = vunpack.c.0.s8 %v2196
    %v2198 = vlaneseq
    %v2199 = vshrl.u32 %v2198, 7
    %v2200 = vsub.s32 %v2197, %v2199
    %v2201 = vrot.slane %v2194, %v2200
    %2203 = vst [vmem:[#allocation2 + $0x4] sm:$0xf] %v2201
    %v2204 = vsel %vm1976, %v2190, 0.0
    %v2205 = vsel %vm1976, %v2191, 0.0
    %v2206 = vadd.f32 %v2204, %v2205
    %2207 = vadd.xlane.f32.xlu0 %v2206
    %v2208 = vpop.xlane.xlu0 %2207
    %v2209 = vrot.slane %v2208, 4
    %v2210 = vadd.f32 %v2208, %v2209
    %v2211 = vrot.slane %v2210, 2
    %v2212 = vadd.f32 %v2210, %v2211
    %v2213 = vrot.slane %v2212, 1
    %v2214 = vadd.f32 %v2212, %v2213
    %s2215 = vtos %v2214
    %v2216 = vstv %s2215
    %v2217 = vmul.f32 %v2216, 0.001953125
    %s2218 = scalar_lea.vmem [#allocation9], 1
    %v2219 = vld [vmem:[%s2218] ss:$4 sm:$0xff]
    %v2220 = vmul.f32 %v2217, %v2219
    %v2221 = vadd.f32 %v2146, %v2220
    %v2222 = vsel %vm1976, %v2068, 0.0
    %v2223 = vsel %vm1976, %v2069, 0.0
    %v2224 = vadd.f32 %v2222, %v2223
    %2225 = vadd.xlane.f32.xlu0 %v2224
    %v2226 = vpop.xlane.xlu0 %2225
    %v2227 = vrot.slane %v2226, 4
    %v2228 = vadd.f32 %v2226, %v2227
    %v2229 = vrot.slane %v2228, 2
    %v2230 = vadd.f32 %v2228, %v2229
    %v2231 = vrot.slane %v2230, 1
    %v2232 = vadd.f32 %v2230, %v2231
    %s2233 = vtos %v2232
    %v2234 = vstv %s2233
    %v2235 = vmul.f32 %v2234, %v2085
    %v2236 = vsub.f32 %v2068, %v2235
    %v2237 = vsub.f32 %v2069, %v2235
    %v2238 = vmul.f32 %v2236, %v2236
    %v2239 = vmul.f32 %v2237, %v2237
    %v2240 = vsel %vm1976, %v2238, 0.0
    %v2241 = vsel %vm1976, %v2239, 0.0
    %v2242 = vadd.f32 %v2240, %v2241
    %2243 = vadd.xlane.f32.xlu0 %v2242
    %v2244 = vpop.xlane.xlu0 %2243
    %v2245 = vrot.slane %v2244, 4
    %v2246 = vadd.f32 %v2244, %v2245
    %v2247 = vrot.slane %v2246, 2
    %v2248 = vadd.f32 %v2246, %v2247
    %v2249 = vrot.slane %v2248, 1
    %v2250 = vadd.f32 %v2248, %v2249
    %s2251 = vtos %v2250
    %v2252 = vstv %s2251
    %v2253 = vmul.f32 %v2252, %v2085
    %s2254 = sld [smem:[#allocation11 + $0x2]]
    %v2255 = vadd.f32 %v2253, 1e-05
    %v2256 = vrsqrt.pop %v2255
    %v2257 = vstv %s2254
    %v2258 = vmul.f32 %v2257, %v2256
    %v2259 = vmul.f32 %v2236, %v2258
    %v2260 = vmul.f32 %v2237, %v2258
    %s2261 = sld [smem:[#allocation11 + $0x82]]
    %v2262 = vstv %s2261
    %v2263 = vadd.f32 %v2259, %v2262
    %v2264 = vadd.f32 %v2260, %v2262
    %v2265 = vmax.f32 %v2263, 0.0
    %v2266 = vmax.f32 %v2264, 0.0
    %v2269 = vcombine.low %v2265, %v2266
    %v2271 = vunpack.c.l.s4 1983009808
    %v2272 = vunpack.c.0.s8 %v2271
    %v2273 = vlaneseq
    %v2274 = vshrl.u32 %v2273, 7
    %v2275 = vsub.s32 %v2272, %v2274
    %v2276 = vrot.slane %v2269, %v2275
    %2278 = vst [vmem:[#allocation2 + $0x8] sm:$0xf] %v2276
    %v2279 = vsel %vm1976, %v2265, 0.0
    %v2280 = vsel %vm1976, %v2266, 0.0
    %v2281 = vadd.f32 %v2279, %v2280
    %2282 = vadd.xlane.f32.xlu0 %v2281
    %v2283 = vpop.xlane.xlu0 %2282
    %v2284 = vrot.slane %v2283, 4
    %v2285 = vadd.f32 %v2283, %v2284
    %v2286 = vrot.slane %v2285, 2
    %v2287 = vadd.f32 %v2285, %v2286
    %v2288 = vrot.slane %v2287, 1
    %v2289 = vadd.f32 %v2287, %v2288
    %s2290 = vtos %v2289
    %v2291 = vstv %s2290
    %v2292 = vmul.f32 %v2291, 0.001953125
    %s2293 = scalar_lea.vmem [#allocation9], 2
    %v2294 = vld [vmem:[%s2293] ss:$4 sm:$0xff]
    %v2295 = vmul.f32 %v2292, %v2294
    %v2296 = vadd.f32 %v2221, %v2295
    %v2297 = vsel %vm1976, %v2070, 0.0
    %v2298 = vsel %vm1976, %v2071, 0.0
    %v2299 = vadd.f32 %v2297, %v2298
    %2300 = vadd.xlane.f32.xlu0 %v2299
    %v2301 = vpop.xlane.xlu0 %2300
    %v2302 = vrot.slane %v2301, 4
    %v2303 = vadd.f32 %v2301, %v2302
    %v2304 = vrot.slane %v2303, 2
    %v2305 = vadd.f32 %v2303, %v2304
    %v2306 = vrot.slane %v2305, 1
    %v2307 = vadd.f32 %v2305, %v2306
    %s2308 = vtos %v2307
    %v2309 = vstv %s2308
    %v2310 = vmul.f32 %v2309, %v2085
    %v2311 = vsub.f32 %v2070, %v2310
    %v2312 = vsub.f32 %v2071, %v2310
    %v2313 = vmul.f32 %v2311, %v2311
    %v2314 = vmul.f32 %v2312, %v2312
    %v2315 = vsel %vm1976, %v2313, 0.0
    %v2316 = vsel %vm1976, %v2314, 0.0
    %v2317 = vadd.f32 %v2315, %v2316
    %2318 = vadd.xlane.f32.xlu0 %v2317
    %v2319 = vpop.xlane.xlu0 %2318
    %v2320 = vrot.slane %v2319, 4
    %v2321 = vadd.f32 %v2319, %v2320
    %v2322 = vrot.slane %v2321, 2
    %v2323 = vadd.f32 %v2321, %v2322
    %v2324 = vrot.slane %v2323, 1
    %v2325 = vadd.f32 %v2323, %v2324
    %s2326 = vtos %v2325
    %v2327 = vstv %s2326
    %v2328 = vmul.f32 %v2327, %v2085
    %s2329 = sld [smem:[#allocation11 + $0x3]]
    %v2330 = vadd.f32 %v2328, 1e-05
    %v2331 = vrsqrt.pop %v2330
    %v2332 = vstv %s2329
    %v2333 = vmul.f32 %v2332, %v2331
    %v2334 = vmul.f32 %v2311, %v2333
    %v2335 = vmul.f32 %v2312, %v2333
    %s2336 = sld [smem:[#allocation11 + $0x83]]
    %v2337 = vstv %s2336
    %v2338 = vadd.f32 %v2334, %v2337
    %v2339 = vadd.f32 %v2335, %v2337
    %v2340 = vmax.f32 %v2338, 0.0
    %v2341 = vmax.f32 %v2339, 0.0
    %v2344 = vcombine.low %v2340, %v2341
    %v2346 = vunpack.c.l.s4 1983009808
    %v2347 = vunpack.c.0.s8 %v2346
    %v2348 = vlaneseq
    %v2349 = vshrl.u32 %v2348, 7
    %v2350 = vsub.s32 %v2347, %v2349
    %v2351 = vrot.slane %v2344, %v2350
    %2353 = vst [vmem:[#allocation2 + $0xc] sm:$0xf] %v2351
    %v2354 = vsel %vm1976, %v2340, 0.0
    %v2355 = vsel %vm1976, %v2341, 0.0
    %v2356 = vadd.f32 %v2354, %v2355
    %2357 = vadd.xlane.f32.xlu0 %v2356
    %v2358 = vpop.xlane.xlu0 %2357
    %v2359 = vrot.slane %v2358, 4
    %v2360 = vadd.f32 %v2358, %v2359
    %v2361 = vrot.slane %v2360, 2
    %v2362 = vadd.f32 %v2360, %v2361
    %v2363 = vrot.slane %v2362, 1
    %v2364 = vadd.f32 %v2362, %v2363
    %s2365 = vtos %v2364
    %v2366 = vstv %s2365
    %v2367 = vmul.f32 %v2366, 0.001953125
    %s2368 = scalar_lea.vmem [#allocation9], 3
    %v2369 = vld [vmem:[%s2368] ss:$4 sm:$0xff]
    %v2370 = vmul.f32 %v2367, %v2369
    %v2371 = vadd.f32 %v2296, %v2370
    %v2372 = vld [vmem:[#allocation2] sm:$0xff]
    %v2373 = vld [vmem:[#allocation2 + $0x8] sm:$0xff]
    %v2376 = vcombine.high %v2372, %v2372
    %v2378 = vunpack.c.l.s4 1983009808
    %v2379 = vunpack.c.0.s8 %v2378
    %v2380 = vlaneseq
    %v2381 = vshrl.u32 %v2380, 7
    %v2382 = vsub.s32 %v2379, %v2381
    %v2383 = vrot.slane %v2372, %v2382
    %v2385 = vunpack.c.l.s4 1983009808
    %v2386 = vunpack.c.0.s8 %v2385
    %v2387 = vlaneseq
    %v2388 = vshrl.u32 %v2387, 7
    %v2389 = vsub.s32 %v2386, %v2388
    %v2390 = vrot.slane %v2376, %v2389
    %v2391 = vcombine.high %v2383, %v2383
    %v2392 = vcombine.high %v2390, %v2390
    %v2393 = vcombine.high %v2373, %v2373
    %v2395 = vunpack.c.l.s4 1983009808
    %v2396 = vunpack.c.0.s8 %v2395
    %v2397 = vlaneseq
    %v2398 = vshrl.u32 %v2397, 7
    %v2399 = vsub.s32 %v2396, %v2398
    %v2400 = vrot.slane %v2373, %v2399
    %v2402 = vunpack.c.l.s4 1983009808
    %v2403 = vunpack.c.0.s8 %v2402
    %v2404 = vlaneseq
    %v2405 = vshrl.u32 %v2404, 7
    %v2406 = vsub.s32 %v2403, %v2405
    %v2407 = vrot.slane %v2393, %v2406
    %v2408 = vcombine.high %v2400, %v2400
    %v2409 = vcombine.high %v2407, %v2407
    %v2418 = vpack.c.bf16 %v2383, %v2383
    %v2419 = vpack.c.bf16 %v2391, %v2391
    %v2420 = vpack.c.bf16 %v2390, %v2390
    %v2421 = vpack.c.bf16 %v2392, %v2392
    %v2422 = vpack.c.bf16 %v2400, %v2400
    %v2423 = vpack.c.bf16 %v2408, %v2408
    %v2424 = vpack.c.bf16 %v2407, %v2407
    %v2425 = vpack.c.bf16 %v2409, %v2409
    %v2426 = vld [vmem:[#allocation8] sm:$0xff]
    %v2427 = vld [vmem:[#allocation8 + $0x8] sm:$0xff]
    %v2428 = vld [vmem:[#allocation8 + $0x10] sm:$0xff]
    %v2429 = vld [vmem:[#allocation8 + $0x18] sm:$0xff]
    %v2430 = vld [vmem:[#allocation8 + $0x20] sm:$0xff]
    %v2431 = vld [vmem:[#allocation8 + $0x28] sm:$0xff]
    %v2432 = vld [vmem:[#allocation8 + $0x30] sm:$0xff]
    %v2433 = vld [vmem:[#allocation8 + $0x38] sm:$0xff]
    %v2434 = vld [vmem:[#allocation8 + $0x40] sm:$0xff]
    %v2435 = vld [vmem:[#allocation8 + $0x48] sm:$0xff]
    %v2436 = vld [vmem:[#allocation8 + $0x50] sm:$0xff]
    %v2437 = vld [vmem:[#allocation8 + $0x58] sm:$0xff]
    %v2438 = vld [vmem:[#allocation8 + $0x60] sm:$0xff]
    %v2439 = vld [vmem:[#allocation8 + $0x68] sm:$0xff]
    %v2440 = vld [vmem:[#allocation8 + $0x70] sm:$0xff]
    %v2441 = vld [vmem:[#allocation8 + $0x78] sm:$0xff]
    %v2442 = vld [vmem:[#allocation8 + $0x80] sm:$0xff]
    %v2443 = vld [vmem:[#allocation8 + $0x88] sm:$0xff]
    %v2444 = vld [vmem:[#allocation8 + $0x90] sm:$0xff]
    %v2445 = vld [vmem:[#allocation8 + $0x98] sm:$0xff]
    %v2446 = vld [vmem:[#allocation8 + $0xa0] sm:$0xff]
    %v2447 = vld [vmem:[#allocation8 + $0xa8] sm:$0xff]
    %v2448 = vld [vmem:[#allocation8 + $0xb0] sm:$0xff]
    %v2449 = vld [vmem:[#allocation8 + $0xb8] sm:$0xff]
    %v2450 = vld [vmem:[#allocation8 + $0xc0] sm:$0xff]
    %v2451 = vld [vmem:[#allocation8 + $0xc8] sm:$0xff]
    %v2452 = vld [vmem:[#allocation8 + $0xd0] sm:$0xff]
    %v2453 = vld [vmem:[#allocation8 + $0xd8] sm:$0xff]
    %v2454 = vld [vmem:[#allocation8 + $0xe0] sm:$0xff]
    %v2455 = vld [vmem:[#allocation8 + $0xe8] sm:$0xff]
    %v2456 = vld [vmem:[#allocation8 + $0xf0] sm:$0xff]
    %v2457 = vld [vmem:[#allocation8 + $0xf8] sm:$0xff]
    %v2458 = vld [vmem:[#allocation8 + $0x100] sm:$0xff]
    %v2459 = vld [vmem:[#allocation8 + $0x108] sm:$0xff]
    %v2460 = vld [vmem:[#allocation8 + $0x110] sm:$0xff]
    %v2461 = vld [vmem:[#allocation8 + $0x118] sm:$0xff]
    %v2462 = vld [vmem:[#allocation8 + $0x120] sm:$0xff]
    %v2463 = vld [vmem:[#allocation8 + $0x128] sm:$0xff]
    %v2464 = vld [vmem:[#allocation8 + $0x130] sm:$0xff]
    %v2465 = vld [vmem:[#allocation8 + $0x138] sm:$0xff]
    %v2466 = vld [vmem:[#allocation8 + $0x140] sm:$0xff]
    %v2467 = vld [vmem:[#allocation8 + $0x148] sm:$0xff]
    %v2468 = vld [vmem:[#allocation8 + $0x150] sm:$0xff]
    %v2469 = vld [vmem:[#allocation8 + $0x158] sm:$0xff]
    %v2470 = vld [vmem:[#allocation8 + $0x160] sm:$0xff]
    %v2471 = vld [vmem:[#allocation8 + $0x168] sm:$0xff]
    %v2472 = vld [vmem:[#allocation8 + $0x170] sm:$0xff]
    %v2473 = vld [vmem:[#allocation8 + $0x178] sm:$0xff]
    %v2474 = vld [vmem:[#allocation8 + $0x180] sm:$0xff]
    %v2475 = vld [vmem:[#allocation8 + $0x188] sm:$0xff]
    %v2476 = vld [vmem:[#allocation8 + $0x190] sm:$0xff]
    %v2477 = vld [vmem:[#allocation8 + $0x198] sm:$0xff]
    %v2478 = vld [vmem:[#allocation8 + $0x1a0] sm:$0xff]
    %v2479 = vld [vmem:[#allocation8 + $0x1a8] sm:$0xff]
    %v2480 = vld [vmem:[#allocation8 + $0x1b0] sm:$0xff]
    %v2481 = vld [vmem:[#allocation8 + $0x1b8] sm:$0xff]
    %v2482 = vld [vmem:[#allocation8 + $0x1c0] sm:$0xff]
    %v2483 = vld [vmem:[#allocation8 + $0x1c8] sm:$0xff]
    %v2484 = vld [vmem:[#allocation8 + $0x1d0] sm:$0xff]
    %v2485 = vld [vmem:[#allocation8 + $0x1d8] sm:$0xff]
    %v2486 = vld [vmem:[#allocation8 + $0x1e0] sm:$0xff]
    %v2487 = vld [vmem:[#allocation8 + $0x1e8] sm:$0xff]
    %v2488 = vld [vmem:[#allocation8 + $0x1f0] sm:$0xff]
    %v2489 = vld [vmem:[#allocation8 + $0x1f8] sm:$0xff]
    %v2490 = vld [vmem:[#allocation8 + $0x200] sm:$0xff]
    %v2491 = vld [vmem:[#allocation8 + $0x208] sm:$0xff]
    %v2492 = vld [vmem:[#allocation8 + $0x210] sm:$0xff]
    %v2493 = vld [vmem:[#allocation8 + $0x218] sm:$0xff]
    %v2494 = vld [vmem:[#allocation8 + $0x220] sm:$0xff]
    %v2495 = vld [vmem:[#allocation8 + $0x228] sm:$0xff]
    %v2496 = vld [vmem:[#allocation8 + $0x230] sm:$0xff]
    %v2497 = vld [vmem:[#allocation8 + $0x238] sm:$0xff]
    %v2498 = vld [vmem:[#allocation8 + $0x240] sm:$0xff]
    %v2499 = vld [vmem:[#allocation8 + $0x248] sm:$0xff]
    %v2500 = vld [vmem:[#allocation8 + $0x250] sm:$0xff]
    %v2501 = vld [vmem:[#allocation8 + $0x258] sm:$0xff]
    %v2502 = vld [vmem:[#allocation8 + $0x260] sm:$0xff]
    %v2503 = vld [vmem:[#allocation8 + $0x268] sm:$0xff]
    %v2504 = vld [vmem:[#allocation8 + $0x270] sm:$0xff]
    %v2505 = vld [vmem:[#allocation8 + $0x278] sm:$0xff]
    %v2506 = vld [vmem:[#allocation8 + $0x280] sm:$0xff]
    %v2507 = vld [vmem:[#allocation8 + $0x288] sm:$0xff]
    %v2508 = vld [vmem:[#allocation8 + $0x290] sm:$0xff]
    %v2509 = vld [vmem:[#allocation8 + $0x298] sm:$0xff]
    %v2510 = vld [vmem:[#allocation8 + $0x2a0] sm:$0xff]
    %v2511 = vld [vmem:[#allocation8 + $0x2a8] sm:$0xff]
    %v2512 = vld [vmem:[#allocation8 + $0x2b0] sm:$0xff]
    %v2513 = vld [vmem:[#allocation8 + $0x2b8] sm:$0xff]
    %v2514 = vld [vmem:[#allocation8 + $0x2c0] sm:$0xff]
    %v2515 = vld [vmem:[#allocation8 + $0x2c8] sm:$0xff]
    %v2516 = vld [vmem:[#allocation8 + $0x2d0] sm:$0xff]
    %v2517 = vld [vmem:[#allocation8 + $0x2d8] sm:$0xff]
    %v2518 = vld [vmem:[#allocation8 + $0x2e0] sm:$0xff]
    %v2519 = vld [vmem:[#allocation8 + $0x2e8] sm:$0xff]
    %v2520 = vld [vmem:[#allocation8 + $0x2f0] sm:$0xff]
    %v2521 = vld [vmem:[#allocation8 + $0x2f8] sm:$0xff]
    %v2522 = vld [vmem:[#allocation8 + $0x300] sm:$0xff]
    %v2523 = vld [vmem:[#allocation8 + $0x308] sm:$0xff]
    %v2524 = vld [vmem:[#allocation8 + $0x310] sm:$0xff]
    %v2525 = vld [vmem:[#allocation8 + $0x318] sm:$0xff]
    %v2526 = vld [vmem:[#allocation8 + $0x320] sm:$0xff]
    %v2527 = vld [vmem:[#allocation8 + $0x328] sm:$0xff]
    %v2528 = vld [vmem:[#allocation8 + $0x330] sm:$0xff]
    %v2529 = vld [vmem:[#allocation8 + $0x338] sm:$0xff]
    %v2530 = vld [vmem:[#allocation8 + $0x340] sm:$0xff]
    %v2531 = vld [vmem:[#allocation8 + $0x348] sm:$0xff]
    %v2532 = vld [vmem:[#allocation8 + $0x350] sm:$0xff]
    %v2533 = vld [vmem:[#allocation8 + $0x358] sm:$0xff]
    %v2534 = vld [vmem:[#allocation8 + $0x360] sm:$0xff]
    %v2535 = vld [vmem:[#allocation8 + $0x368] sm:$0xff]
    %v2536 = vld [vmem:[#allocation8 + $0x370] sm:$0xff]
    %v2537 = vld [vmem:[#allocation8 + $0x378] sm:$0xff]
    %v2538 = vld [vmem:[#allocation8 + $0x380] sm:$0xff]
    %v2539 = vld [vmem:[#allocation8 + $0x388] sm:$0xff]
    %v2540 = vld [vmem:[#allocation8 + $0x390] sm:$0xff]
    %v2541 = vld [vmem:[#allocation8 + $0x398] sm:$0xff]
    %v2542 = vld [vmem:[#allocation8 + $0x3a0] sm:$0xff]
    %v2543 = vld [vmem:[#allocation8 + $0x3a8] sm:$0xff]
    %v2544 = vld [vmem:[#allocation8 + $0x3b0] sm:$0xff]
    %v2545 = vld [vmem:[#allocation8 + $0x3b8] sm:$0xff]
    %v2546 = vld [vmem:[#allocation8 + $0x3c0] sm:$0xff]
    %v2547 = vld [vmem:[#allocation8 + $0x3c8] sm:$0xff]
    %v2548 = vld [vmem:[#allocation8 + $0x3d0] sm:$0xff]
    %v2549 = vld [vmem:[#allocation8 + $0x3d8] sm:$0xff]
    %v2550 = vld [vmem:[#allocation8 + $0x3e0] sm:$0xff]
    %v2551 = vld [vmem:[#allocation8 + $0x3e8] sm:$0xff]
    %v2552 = vld [vmem:[#allocation8 + $0x3f0] sm:$0xff]
    %v2553 = vld [vmem:[#allocation8 + $0x3f8] sm:$0xff]
    %v2554 = vld [vmem:[#allocation8 + $0x400] sm:$0xff]
    %v2555 = vld [vmem:[#allocation8 + $0x408] sm:$0xff]
    %v2556 = vld [vmem:[#allocation8 + $0x410] sm:$0xff]
    %v2557 = vld [vmem:[#allocation8 + $0x418] sm:$0xff]
    %v2558 = vld [vmem:[#allocation8 + $0x420] sm:$0xff]
    %v2559 = vld [vmem:[#allocation8 + $0x428] sm:$0xff]
    %v2560 = vld [vmem:[#allocation8 + $0x430] sm:$0xff]
    %v2561 = vld [vmem:[#allocation8 + $0x438] sm:$0xff]
    %v2562 = vld [vmem:[#allocation8 + $0x440] sm:$0xff]
    %v2563 = vld [vmem:[#allocation8 + $0x448] sm:$0xff]
    %v2564 = vld [vmem:[#allocation8 + $0x450] sm:$0xff]
    %v2565 = vld [vmem:[#allocation8 + $0x458] sm:$0xff]
    %v2566 = vld [vmem:[#allocation8 + $0x460] sm:$0xff]
    %v2567 = vld [vmem:[#allocation8 + $0x468] sm:$0xff]
    %v2568 = vld [vmem:[#allocation8 + $0x470] sm:$0xff]
    %v2569 = vld [vmem:[#allocation8 + $0x478] sm:$0xff]
    %v2570 = vld [vmem:[#allocation8 + $0x480] sm:$0xff]
    %v2571 = vld [vmem:[#allocation8 + $0x488] sm:$0xff]
    %v2572 = vld [vmem:[#allocation8 + $0x490] sm:$0xff]
    %v2573 = vld [vmem:[#allocation8 + $0x498] sm:$0xff]
    %v2574 = vld [vmem:[#allocation8 + $0x4a0] sm:$0xff]
    %v2575 = vld [vmem:[#allocation8 + $0x4a8] sm:$0xff]
    %v2576 = vld [vmem:[#allocation8 + $0x4b0] sm:$0xff]
    %v2577 = vld [vmem:[#allocation8 + $0x4b8] sm:$0xff]
    %v2578 = vld [vmem:[#allocation8 + $0x4c0] sm:$0xff]
    %v2579 = vld [vmem:[#allocation8 + $0x4c8] sm:$0xff]
    %v2580 = vld [vmem:[#allocation8 + $0x4d0] sm:$0xff]
    %v2581 = vld [vmem:[#allocation8 + $0x4d8] sm:$0xff]
    %v2582 = vld [vmem:[#allocation8 + $0x4e0] sm:$0xff]
    %v2583 = vld [vmem:[#allocation8 + $0x4e8] sm:$0xff]
    %v2584 = vld [vmem:[#allocation8 + $0x4f0] sm:$0xff]
    %v2585 = vld [vmem:[#allocation8 + $0x4f8] sm:$0xff]
    %v2586 = vld [vmem:[#allocation8 + $0x500] sm:$0xff]
    %v2587 = vld [vmem:[#allocation8 + $0x508] sm:$0xff]
    %v2588 = vld [vmem:[#allocation8 + $0x510] sm:$0xff]
    %v2589 = vld [vmem:[#allocation8 + $0x518] sm:$0xff]
    %v2590 = vld [vmem:[#allocation8 + $0x520] sm:$0xff]
    %v2591 = vld [vmem:[#allocation8 + $0x528] sm:$0xff]
    %v2592 = vld [vmem:[#allocation8 + $0x530] sm:$0xff]
    %v2593 = vld [vmem:[#allocation8 + $0x538] sm:$0xff]
    %v2594 = vld [vmem:[#allocation8 + $0x540] sm:$0xff]
    %v2595 = vld [vmem:[#allocation8 + $0x548] sm:$0xff]
    %v2596 = vld [vmem:[#allocation8 + $0x550] sm:$0xff]
    %v2597 = vld [vmem:[#allocation8 + $0x558] sm:$0xff]
    %v2598 = vld [vmem:[#allocation8 + $0x560] sm:$0xff]
    %v2599 = vld [vmem:[#allocation8 + $0x568] sm:$0xff]
    %v2600 = vld [vmem:[#allocation8 + $0x570] sm:$0xff]
    %v2601 = vld [vmem:[#allocation8 + $0x578] sm:$0xff]
    %v2602 = vld [vmem:[#allocation8 + $0x580] sm:$0xff]
    %v2603 = vld [vmem:[#allocation8 + $0x588] sm:$0xff]
    %v2604 = vld [vmem:[#allocation8 + $0x590] sm:$0xff]
    %v2605 = vld [vmem:[#allocation8 + $0x598] sm:$0xff]
    %v2606 = vld [vmem:[#allocation8 + $0x5a0] sm:$0xff]
    %v2607 = vld [vmem:[#allocation8 + $0x5a8] sm:$0xff]
    %v2608 = vld [vmem:[#allocation8 + $0x5b0] sm:$0xff]
    %v2609 = vld [vmem:[#allocation8 + $0x5b8] sm:$0xff]
    %v2610 = vld [vmem:[#allocation8 + $0x5c0] sm:$0xff]
    %v2611 = vld [vmem:[#allocation8 + $0x5c8] sm:$0xff]
    %v2612 = vld [vmem:[#allocation8 + $0x5d0] sm:$0xff]
    %v2613 = vld [vmem:[#allocation8 + $0x5d8] sm:$0xff]
    %v2614 = vld [vmem:[#allocation8 + $0x5e0] sm:$0xff]
    %v2615 = vld [vmem:[#allocation8 + $0x5e8] sm:$0xff]
    %v2616 = vld [vmem:[#allocation8 + $0x5f0] sm:$0xff]
    %v2617 = vld [vmem:[#allocation8 + $0x5f8] sm:$0xff]
    %v2618 = vld [vmem:[#allocation8 + $0x600] sm:$0xff]
    %v2619 = vld [vmem:[#allocation8 + $0x608] sm:$0xff]
    %v2620 = vld [vmem:[#allocation8 + $0x610] sm:$0xff]
    %v2621 = vld [vmem:[#allocation8 + $0x618] sm:$0xff]
    %v2622 = vld [vmem:[#allocation8 + $0x620] sm:$0xff]
    %v2623 = vld [vmem:[#allocation8 + $0x628] sm:$0xff]
    %v2624 = vld [vmem:[#allocation8 + $0x630] sm:$0xff]
    %v2625 = vld [vmem:[#allocation8 + $0x638] sm:$0xff]
    %v2626 = vld [vmem:[#allocation8 + $0x640] sm:$0xff]
    %v2627 = vld [vmem:[#allocation8 + $0x648] sm:$0xff]
    %v2628 = vld [vmem:[#allocation8 + $0x650] sm:$0xff]
    %v2629 = vld [vmem:[#allocation8 + $0x658] sm:$0xff]
    %v2630 = vld [vmem:[#allocation8 + $0x660] sm:$0xff]
    %v2631 = vld [vmem:[#allocation8 + $0x668] sm:$0xff]
    %v2632 = vld [vmem:[#allocation8 + $0x670] sm:$0xff]
    %v2633 = vld [vmem:[#allocation8 + $0x678] sm:$0xff]
    %v2634 = vld [vmem:[#allocation8 + $0x680] sm:$0xff]
    %v2635 = vld [vmem:[#allocation8 + $0x688] sm:$0xff]
    %v2636 = vld [vmem:[#allocation8 + $0x690] sm:$0xff]
    %v2637 = vld [vmem:[#allocation8 + $0x698] sm:$0xff]
    %v2638 = vld [vmem:[#allocation8 + $0x6a0] sm:$0xff]
    %v2639 = vld [vmem:[#allocation8 + $0x6a8] sm:$0xff]
    %v2640 = vld [vmem:[#allocation8 + $0x6b0] sm:$0xff]
    %v2641 = vld [vmem:[#allocation8 + $0x6b8] sm:$0xff]
    %v2642 = vld [vmem:[#allocation8 + $0x6c0] sm:$0xff]
    %v2643 = vld [vmem:[#allocation8 + $0x6c8] sm:$0xff]
    %v2644 = vld [vmem:[#allocation8 + $0x6d0] sm:$0xff]
    %v2645 = vld [vmem:[#allocation8 + $0x6d8] sm:$0xff]
    %v2646 = vld [vmem:[#allocation8 + $0x6e0] sm:$0xff]
    %v2647 = vld [vmem:[#allocation8 + $0x6e8] sm:$0xff]
    %v2648 = vld [vmem:[#allocation8 + $0x6f0] sm:$0xff]
    %v2649 = vld [vmem:[#allocation8 + $0x6f8] sm:$0xff]
    %v2650 = vld [vmem:[#allocation8 + $0x700] sm:$0xff]
    %v2651 = vld [vmem:[#allocation8 + $0x708] sm:$0xff]
    %v2652 = vld [vmem:[#allocation8 + $0x710] sm:$0xff]
    %v2653 = vld [vmem:[#allocation8 + $0x718] sm:$0xff]
    %v2654 = vld [vmem:[#allocation8 + $0x720] sm:$0xff]
    %v2655 = vld [vmem:[#allocation8 + $0x728] sm:$0xff]
    %v2656 = vld [vmem:[#allocation8 + $0x730] sm:$0xff]
    %v2657 = vld [vmem:[#allocation8 + $0x738] sm:$0xff]
    %v2658 = vld [vmem:[#allocation8 + $0x740] sm:$0xff]
    %v2659 = vld [vmem:[#allocation8 + $0x748] sm:$0xff]
    %v2660 = vld [vmem:[#allocation8 + $0x750] sm:$0xff]
    %v2661 = vld [vmem:[#allocation8 + $0x758] sm:$0xff]
    %v2662 = vld [vmem:[#allocation8 + $0x760] sm:$0xff]
    %v2663 = vld [vmem:[#allocation8 + $0x768] sm:$0xff]
    %v2664 = vld [vmem:[#allocation8 + $0x770] sm:$0xff]
    %v2665 = vld [vmem:[#allocation8 + $0x778] sm:$0xff]
    %v2666 = vld [vmem:[#allocation8 + $0x780] sm:$0xff]
    %v2667 = vld [vmem:[#allocation8 + $0x788] sm:$0xff]
    %v2668 = vld [vmem:[#allocation8 + $0x790] sm:$0xff]
    %v2669 = vld [vmem:[#allocation8 + $0x798] sm:$0xff]
    %v2670 = vld [vmem:[#allocation8 + $0x7a0] sm:$0xff]
    %v2671 = vld [vmem:[#allocation8 + $0x7a8] sm:$0xff]
    %v2672 = vld [vmem:[#allocation8 + $0x7b0] sm:$0xff]
    %v2673 = vld [vmem:[#allocation8 + $0x7b8] sm:$0xff]
    %v2674 = vld [vmem:[#allocation8 + $0x7c0] sm:$0xff]
    %v2675 = vld [vmem:[#allocation8 + $0x7c8] sm:$0xff]
    %v2676 = vld [vmem:[#allocation8 + $0x7d0] sm:$0xff]
    %v2677 = vld [vmem:[#allocation8 + $0x7d8] sm:$0xff]
    %v2678 = vld [vmem:[#allocation8 + $0x7e0] sm:$0xff]
    %v2679 = vld [vmem:[#allocation8 + $0x7e8] sm:$0xff]
    %v2680 = vld [vmem:[#allocation8 + $0x7f0] sm:$0xff]
    %v2681 = vld [vmem:[#allocation8 + $0x7f8] sm:$0xff]
    %v2682 = vld [vmem:[#allocation8 + $0x800] sm:$0xff]
    %v2683 = vld [vmem:[#allocation8 + $0x808] sm:$0xff]
    %v2684 = vld [vmem:[#allocation8 + $0x810] sm:$0xff]
    %v2685 = vld [vmem:[#allocation8 + $0x818] sm:$0xff]
    %v2686 = vld [vmem:[#allocation8 + $0x820] sm:$0xff]
    %v2687 = vld [vmem:[#allocation8 + $0x828] sm:$0xff]
    %v2688 = vld [vmem:[#allocation8 + $0x830] sm:$0xff]
    %v2689 = vld [vmem:[#allocation8 + $0x838] sm:$0xff]
    %v2690 = vld [vmem:[#allocation8 + $0x840] sm:$0xff]
    %v2691 = vld [vmem:[#allocation8 + $0x848] sm:$0xff]
    %v2692 = vld [vmem:[#allocation8 + $0x850] sm:$0xff]
    %v2693 = vld [vmem:[#allocation8 + $0x858] sm:$0xff]
    %v2694 = vld [vmem:[#allocation8 + $0x860] sm:$0xff]
    %v2695 = vld [vmem:[#allocation8 + $0x868] sm:$0xff]
    %v2696 = vld [vmem:[#allocation8 + $0x870] sm:$0xff]
    %v2697 = vld [vmem:[#allocation8 + $0x878] sm:$0xff]
    %v2698 = vld [vmem:[#allocation8 + $0x880] sm:$0xff]
    %v2699 = vld [vmem:[#allocation8 + $0x888] sm:$0xff]
    %v2700 = vld [vmem:[#allocation8 + $0x890] sm:$0xff]
    %v2701 = vld [vmem:[#allocation8 + $0x898] sm:$0xff]
    %v2702 = vld [vmem:[#allocation8 + $0x8a0] sm:$0xff]
    %v2703 = vld [vmem:[#allocation8 + $0x8a8] sm:$0xff]
    %v2704 = vld [vmem:[#allocation8 + $0x8b0] sm:$0xff]
    %v2705 = vld [vmem:[#allocation8 + $0x8b8] sm:$0xff]
    %v2706 = vld [vmem:[#allocation8 + $0x8c0] sm:$0xff]
    %v2707 = vld [vmem:[#allocation8 + $0x8c8] sm:$0xff]
    %v2708 = vld [vmem:[#allocation8 + $0x8d0] sm:$0xff]
    %v2709 = vld [vmem:[#allocation8 + $0x8d8] sm:$0xff]
    %v2710 = vld [vmem:[#allocation8 + $0x8e0] sm:$0xff]
    %v2711 = vld [vmem:[#allocation8 + $0x8e8] sm:$0xff]
    %v2712 = vld [vmem:[#allocation8 + $0x8f0] sm:$0xff]
    %v2713 = vld [vmem:[#allocation8 + $0x8f8] sm:$0xff]
    %v2714 = vld [vmem:[#allocation8 + $0x900] sm:$0xff]
    %v2715 = vld [vmem:[#allocation8 + $0x908] sm:$0xff]
    %v2716 = vld [vmem:[#allocation8 + $0x910] sm:$0xff]
    %v2717 = vld [vmem:[#allocation8 + $0x918] sm:$0xff]
    %v2718 = vld [vmem:[#allocation8 + $0x920] sm:$0xff]
    %v2719 = vld [vmem:[#allocation8 + $0x928] sm:$0xff]
    %v2720 = vld [vmem:[#allocation8 + $0x930] sm:$0xff]
    %v2721 = vld [vmem:[#allocation8 + $0x938] sm:$0xff]
    %v2722 = vld [vmem:[#allocation8 + $0x940] sm:$0xff]
    %v2723 = vld [vmem:[#allocation8 + $0x948] sm:$0xff]
    %v2724 = vld [vmem:[#allocation8 + $0x950] sm:$0xff]
    %v2725 = vld [vmem:[#allocation8 + $0x958] sm:$0xff]
    %v2726 = vld [vmem:[#allocation8 + $0x960] sm:$0xff]
    %v2727 = vld [vmem:[#allocation8 + $0x968] sm:$0xff]
    %v2728 = vld [vmem:[#allocation8 + $0x970] sm:$0xff]
    %v2729 = vld [vmem:[#allocation8 + $0x978] sm:$0xff]
    %v2730 = vld [vmem:[#allocation8 + $0x980] sm:$0xff]
    %v2731 = vld [vmem:[#allocation8 + $0x988] sm:$0xff]
    %v2732 = vld [vmem:[#allocation8 + $0x990] sm:$0xff]
    %v2733 = vld [vmem:[#allocation8 + $0x998] sm:$0xff]
    %v2734 = vld [vmem:[#allocation8 + $0x9a0] sm:$0xff]
    %v2735 = vld [vmem:[#allocation8 + $0x9a8] sm:$0xff]
    %v2736 = vld [vmem:[#allocation8 + $0x9b0] sm:$0xff]
    %v2737 = vld [vmem:[#allocation8 + $0x9b8] sm:$0xff]
    %v2738 = vld [vmem:[#allocation8 + $0x9c0] sm:$0xff]
    %v2739 = vld [vmem:[#allocation8 + $0x9c8] sm:$0xff]
    %v2740 = vld [vmem:[#allocation8 + $0x9d0] sm:$0xff]
    %v2741 = vld [vmem:[#allocation8 + $0x9d8] sm:$0xff]
    %v2742 = vld [vmem:[#allocation8 + $0x9e0] sm:$0xff]
    %v2743 = vld [vmem:[#allocation8 + $0x9e8] sm:$0xff]
    %v2744 = vld [vmem:[#allocation8 + $0x9f0] sm:$0xff]
    %v2745 = vld [vmem:[#allocation8 + $0x9f8] sm:$0xff]
    %v2746 = vld [vmem:[#allocation8 + $0xa00] sm:$0xff]
    %v2747 = vld [vmem:[#allocation8 + $0xa08] sm:$0xff]
    %v2748 = vld [vmem:[#allocation8 + $0xa10] sm:$0xff]
    %v2749 = vld [vmem:[#allocation8 + $0xa18] sm:$0xff]
    %v2750 = vld [vmem:[#allocation8 + $0xa20] sm:$0xff]
    %v2751 = vld [vmem:[#allocation8 + $0xa28] sm:$0xff]
    %v2752 = vld [vmem:[#allocation8 + $0xa30] sm:$0xff]
    %v2753 = vld [vmem:[#allocation8 + $0xa38] sm:$0xff]
    %v2754 = vld [vmem:[#allocation8 + $0xa40] sm:$0xff]
    %v2755 = vld [vmem:[#allocation8 + $0xa48] sm:$0xff]
    %v2756 = vld [vmem:[#allocation8 + $0xa50] sm:$0xff]
    %v2757 = vld [vmem:[#allocation8 + $0xa58] sm:$0xff]
    %v2758 = vld [vmem:[#allocation8 + $0xa60] sm:$0xff]
    %v2759 = vld [vmem:[#allocation8 + $0xa68] sm:$0xff]
    %v2760 = vld [vmem:[#allocation8 + $0xa70] sm:$0xff]
    %v2761 = vld [vmem:[#allocation8 + $0xa78] sm:$0xff]
    %v2762 = vld [vmem:[#allocation8 + $0xa80] sm:$0xff]
    %v2763 = vld [vmem:[#allocation8 + $0xa88] sm:$0xff]
    %v2764 = vld [vmem:[#allocation8 + $0xa90] sm:$0xff]
    %v2765 = vld [vmem:[#allocation8 + $0xa98] sm:$0xff]
    %v2766 = vld [vmem:[#allocation8 + $0xaa0] sm:$0xff]
    %v2767 = vld [vmem:[#allocation8 + $0xaa8] sm:$0xff]
    %v2768 = vld [vmem:[#allocation8 + $0xab0] sm:$0xff]
    %v2769 = vld [vmem:[#allocation8 + $0xab8] sm:$0xff]
    %v2770 = vld [vmem:[#allocation8 + $0xac0] sm:$0xff]
    %v2771 = vld [vmem:[#allocation8 + $0xac8] sm:$0xff]
    %v2772 = vld [vmem:[#allocation8 + $0xad0] sm:$0xff]
    %v2773 = vld [vmem:[#allocation8 + $0xad8] sm:$0xff]
    %v2774 = vld [vmem:[#allocation8 + $0xae0] sm:$0xff]
    %v2775 = vld [vmem:[#allocation8 + $0xae8] sm:$0xff]
    %v2776 = vld [vmem:[#allocation8 + $0xaf0] sm:$0xff]
    %v2777 = vld [vmem:[#allocation8 + $0xaf8] sm:$0xff]
    %v2778 = vld [vmem:[#allocation8 + $0xb00] sm:$0xff]
    %v2779 = vld [vmem:[#allocation8 + $0xb08] sm:$0xff]
    %v2780 = vld [vmem:[#allocation8 + $0xb10] sm:$0xff]
    %v2781 = vld [vmem:[#allocation8 + $0xb18] sm:$0xff]
    %v2782 = vld [vmem:[#allocation8 + $0xb20] sm:$0xff]
    %v2783 = vld [vmem:[#allocation8 + $0xb28] sm:$0xff]
    %v2784 = vld [vmem:[#allocation8 + $0xb30] sm:$0xff]
    %v2785 = vld [vmem:[#allocation8 + $0xb38] sm:$0xff]
    %v2786 = vld [vmem:[#allocation8 + $0xb40] sm:$0xff]
    %v2787 = vld [vmem:[#allocation8 + $0xb48] sm:$0xff]
    %v2788 = vld [vmem:[#allocation8 + $0xb50] sm:$0xff]
    %v2789 = vld [vmem:[#allocation8 + $0xb58] sm:$0xff]
    %v2790 = vld [vmem:[#allocation8 + $0xb60] sm:$0xff]
    %v2791 = vld [vmem:[#allocation8 + $0xb68] sm:$0xff]
    %v2792 = vld [vmem:[#allocation8 + $0xb70] sm:$0xff]
    %v2793 = vld [vmem:[#allocation8 + $0xb78] sm:$0xff]
    %v2794 = vld [vmem:[#allocation8 + $0xb80] sm:$0xff]
    %v2795 = vld [vmem:[#allocation8 + $0xb88] sm:$0xff]
    %v2796 = vld [vmem:[#allocation8 + $0xb90] sm:$0xff]
    %v2797 = vld [vmem:[#allocation8 + $0xb98] sm:$0xff]
    %v2798 = vld [vmem:[#allocation8 + $0xba0] sm:$0xff]
    %v2799 = vld [vmem:[#allocation8 + $0xba8] sm:$0xff]
    %v2800 = vld [vmem:[#allocation8 + $0xbb0] sm:$0xff]
    %v2801 = vld [vmem:[#allocation8 + $0xbb8] sm:$0xff]
    %v2802 = vld [vmem:[#allocation8 + $0xbc0] sm:$0xff]
    %v2803 = vld [vmem:[#allocation8 + $0xbc8] sm:$0xff]
    %v2804 = vld [vmem:[#allocation8 + $0xbd0] sm:$0xff]
    %v2805 = vld [vmem:[#allocation8 + $0xbd8] sm:$0xff]
    %v2806 = vld [vmem:[#allocation8 + $0xbe0] sm:$0xff]
    %v2807 = vld [vmem:[#allocation8 + $0xbe8] sm:$0xff]
    %v2808 = vld [vmem:[#allocation8 + $0xbf0] sm:$0xff]
    %v2809 = vld [vmem:[#allocation8 + $0xbf8] sm:$0xff]
    %v2810 = vld [vmem:[#allocation8 + $0xc00] sm:$0xff]
    %v2811 = vld [vmem:[#allocation8 + $0xc08] sm:$0xff]
    %v2812 = vld [vmem:[#allocation8 + $0xc10] sm:$0xff]
    %v2813 = vld [vmem:[#allocation8 + $0xc18] sm:$0xff]
    %v2814 = vld [vmem:[#allocation8 + $0xc20] sm:$0xff]
    %v2815 = vld [vmem:[#allocation8 + $0xc28] sm:$0xff]
    %v2816 = vld [vmem:[#allocation8 + $0xc30] sm:$0xff]
    %v2817 = vld [vmem:[#allocation8 + $0xc38] sm:$0xff]
    %v2818 = vld [vmem:[#allocation8 + $0xc40] sm:$0xff]
    %v2819 = vld [vmem:[#allocation8 + $0xc48] sm:$0xff]
    %v2820 = vld [vmem:[#allocation8 + $0xc50] sm:$0xff]
    %v2821 = vld [vmem:[#allocation8 + $0xc58] sm:$0xff]
    %v2822 = vld [vmem:[#allocation8 + $0xc60] sm:$0xff]
    %v2823 = vld [vmem:[#allocation8 + $0xc68] sm:$0xff]
    %v2824 = vld [vmem:[#allocation8 + $0xc70] sm:$0xff]
    %v2825 = vld [vmem:[#allocation8 + $0xc78] sm:$0xff]
    %v2826 = vld [vmem:[#allocation8 + $0xc80] sm:$0xff]
    %v2827 = vld [vmem:[#allocation8 + $0xc88] sm:$0xff]
    %v2828 = vld [vmem:[#allocation8 + $0xc90] sm:$0xff]
    %v2829 = vld [vmem:[#allocation8 + $0xc98] sm:$0xff]
    %v2830 = vld [vmem:[#allocation8 + $0xca0] sm:$0xff]
    %v2831 = vld [vmem:[#allocation8 + $0xca8] sm:$0xff]
    %v2832 = vld [vmem:[#allocation8 + $0xcb0] sm:$0xff]
    %v2833 = vld [vmem:[#allocation8 + $0xcb8] sm:$0xff]
    %v2834 = vld [vmem:[#allocation8 + $0xcc0] sm:$0xff]
    %v2835 = vld [vmem:[#allocation8 + $0xcc8] sm:$0xff]
    %v2836 = vld [vmem:[#allocation8 + $0xcd0] sm:$0xff]
    %v2837 = vld [vmem:[#allocation8 + $0xcd8] sm:$0xff]
    %v2838 = vld [vmem:[#allocation8 + $0xce0] sm:$0xff]
    %v2839 = vld [vmem:[#allocation8 + $0xce8] sm:$0xff]
    %v2840 = vld [vmem:[#allocation8 + $0xcf0] sm:$0xff]
    %v2841 = vld [vmem:[#allocation8 + $0xcf8] sm:$0xff]
    %v2842 = vld [vmem:[#allocation8 + $0xd00] sm:$0xff]
    %v2843 = vld [vmem:[#allocation8 + $0xd08] sm:$0xff]
    %v2844 = vld [vmem:[#allocation8 + $0xd10] sm:$0xff]
    %v2845 = vld [vmem:[#allocation8 + $0xd18] sm:$0xff]
    %v2846 = vld [vmem:[#allocation8 + $0xd20] sm:$0xff]
    %v2847 = vld [vmem:[#allocation8 + $0xd28] sm:$0xff]
    %v2848 = vld [vmem:[#allocation8 + $0xd30] sm:$0xff]
    %v2849 = vld [vmem:[#allocation8 + $0xd38] sm:$0xff]
    %v2850 = vld [vmem:[#allocation8 + $0xd40] sm:$0xff]
    %v2851 = vld [vmem:[#allocation8 + $0xd48] sm:$0xff]
    %v2852 = vld [vmem:[#allocation8 + $0xd50] sm:$0xff]
    %v2853 = vld [vmem:[#allocation8 + $0xd58] sm:$0xff]
    %v2854 = vld [vmem:[#allocation8 + $0xd60] sm:$0xff]
    %v2855 = vld [vmem:[#allocation8 + $0xd68] sm:$0xff]
    %v2856 = vld [vmem:[#allocation8 + $0xd70] sm:$0xff]
    %v2857 = vld [vmem:[#allocation8 + $0xd78] sm:$0xff]
    %v2858 = vld [vmem:[#allocation8 + $0xd80] sm:$0xff]
    %v2859 = vld [vmem:[#allocation8 + $0xd88] sm:$0xff]
    %v2860 = vld [vmem:[#allocation8 + $0xd90] sm:$0xff]
    %v2861 = vld [vmem:[#allocation8 + $0xd98] sm:$0xff]
    %v2862 = vld [vmem:[#allocation8 + $0xda0] sm:$0xff]
    %v2863 = vld [vmem:[#allocation8 + $0xda8] sm:$0xff]
    %v2864 = vld [vmem:[#allocation8 + $0xdb0] sm:$0xff]
    %v2865 = vld [vmem:[#allocation8 + $0xdb8] sm:$0xff]
    %v2866 = vld [vmem:[#allocation8 + $0xdc0] sm:$0xff]
    %v2867 = vld [vmem:[#allocation8 + $0xdc8] sm:$0xff]
    %v2868 = vld [vmem:[#allocation8 + $0xdd0] sm:$0xff]
    %v2869 = vld [vmem:[#allocation8 + $0xdd8] sm:$0xff]
    %v2870 = vld [vmem:[#allocation8 + $0xde0] sm:$0xff]
    %v2871 = vld [vmem:[#allocation8 + $0xde8] sm:$0xff]
    %v2872 = vld [vmem:[#allocation8 + $0xdf0] sm:$0xff]
    %v2873 = vld [vmem:[#allocation8 + $0xdf8] sm:$0xff]
    %v2874 = vld [vmem:[#allocation8 + $0xe00] sm:$0xff]
    %v2875 = vld [vmem:[#allocation8 + $0xe08] sm:$0xff]
    %v2876 = vld [vmem:[#allocation8 + $0xe10] sm:$0xff]
    %v2877 = vld [vmem:[#allocation8 + $0xe18] sm:$0xff]
    %v2878 = vld [vmem:[#allocation8 + $0xe20] sm:$0xff]
    %v2879 = vld [vmem:[#allocation8 + $0xe28] sm:$0xff]
    %v2880 = vld [vmem:[#allocation8 + $0xe30] sm:$0xff]
    %v2881 = vld [vmem:[#allocation8 + $0xe38] sm:$0xff]
    %v2882 = vld [vmem:[#allocation8 + $0xe40] sm:$0xff]
    %v2883 = vld [vmem:[#allocation8 + $0xe48] sm:$0xff]
    %v2884 = vld [vmem:[#allocation8 + $0xe50] sm:$0xff]
    %v2885 = vld [vmem:[#allocation8 + $0xe58] sm:$0xff]
    %v2886 = vld [vmem:[#allocation8 + $0xe60] sm:$0xff]
    %v2887 = vld [vmem:[#allocation8 + $0xe68] sm:$0xff]
    %v2888 = vld [vmem:[#allocation8 + $0xe70] sm:$0xff]
    %v2889 = vld [vmem:[#allocation8 + $0xe78] sm:$0xff]
    %v2890 = vld [vmem:[#allocation8 + $0xe80] sm:$0xff]
    %v2891 = vld [vmem:[#allocation8 + $0xe88] sm:$0xff]
    %v2892 = vld [vmem:[#allocation8 + $0xe90] sm:$0xff]
    %v2893 = vld [vmem:[#allocation8 + $0xe98] sm:$0xff]
    %v2894 = vld [vmem:[#allocation8 + $0xea0] sm:$0xff]
    %v2895 = vld [vmem:[#allocation8 + $0xea8] sm:$0xff]
    %v2896 = vld [vmem:[#allocation8 + $0xeb0] sm:$0xff]
    %v2897 = vld [vmem:[#allocation8 + $0xeb8] sm:$0xff]
    %v2898 = vld [vmem:[#allocation8 + $0xec0] sm:$0xff]
    %v2899 = vld [vmem:[#allocation8 + $0xec8] sm:$0xff]
    %v2900 = vld [vmem:[#allocation8 + $0xed0] sm:$0xff]
    %v2901 = vld [vmem:[#allocation8 + $0xed8] sm:$0xff]
    %v2902 = vld [vmem:[#allocation8 + $0xee0] sm:$0xff]
    %v2903 = vld [vmem:[#allocation8 + $0xee8] sm:$0xff]
    %v2904 = vld [vmem:[#allocation8 + $0xef0] sm:$0xff]
    %v2905 = vld [vmem:[#allocation8 + $0xef8] sm:$0xff]
    %v2906 = vld [vmem:[#allocation8 + $0xf00] sm:$0xff]
    %v2907 = vld [vmem:[#allocation8 + $0xf08] sm:$0xff]
    %v2908 = vld [vmem:[#allocation8 + $0xf10] sm:$0xff]
    %v2909 = vld [vmem:[#allocation8 + $0xf18] sm:$0xff]
    %v2910 = vld [vmem:[#allocation8 + $0xf20] sm:$0xff]
    %v2911 = vld [vmem:[#allocation8 + $0xf28] sm:$0xff]
    %v2912 = vld [vmem:[#allocation8 + $0xf30] sm:$0xff]
    %v2913 = vld [vmem:[#allocation8 + $0xf38] sm:$0xff]
    %v2914 = vld [vmem:[#allocation8 + $0xf40] sm:$0xff]
    %v2915 = vld [vmem:[#allocation8 + $0xf48] sm:$0xff]
    %v2916 = vld [vmem:[#allocation8 + $0xf50] sm:$0xff]
    %v2917 = vld [vmem:[#allocation8 + $0xf58] sm:$0xff]
    %v2918 = vld [vmem:[#allocation8 + $0xf60] sm:$0xff]
    %v2919 = vld [vmem:[#allocation8 + $0xf68] sm:$0xff]
    %v2920 = vld [vmem:[#allocation8 + $0xf70] sm:$0xff]
    %v2921 = vld [vmem:[#allocation8 + $0xf78] sm:$0xff]
    %v2922 = vld [vmem:[#allocation8 + $0xf80] sm:$0xff]
    %v2923 = vld [vmem:[#allocation8 + $0xf88] sm:$0xff]
    %v2924 = vld [vmem:[#allocation8 + $0xf90] sm:$0xff]
    %v2925 = vld [vmem:[#allocation8 + $0xf98] sm:$0xff]
    %v2926 = vld [vmem:[#allocation8 + $0xfa0] sm:$0xff]
    %v2927 = vld [vmem:[#allocation8 + $0xfa8] sm:$0xff]
    %v2928 = vld [vmem:[#allocation8 + $0xfb0] sm:$0xff]
    %v2929 = vld [vmem:[#allocation8 + $0xfb8] sm:$0xff]
    %v2930 = vld [vmem:[#allocation8 + $0xfc0] sm:$0xff]
    %v2931 = vld [vmem:[#allocation8 + $0xfc8] sm:$0xff]
    %v2932 = vld [vmem:[#allocation8 + $0xfd0] sm:$0xff]
    %v2933 = vld [vmem:[#allocation8 + $0xfd8] sm:$0xff]
    %v2934 = vld [vmem:[#allocation8 + $0xfe0] sm:$0xff]
    %v2935 = vld [vmem:[#allocation8 + $0xfe8] sm:$0xff]
    %v2936 = vld [vmem:[#allocation8 + $0xff0] sm:$0xff]
    %v2937 = vld [vmem:[#allocation8 + $0xff8] sm:$0xff]
    %v3450 = vunpack.c.l.b16 %v2426
    %v3451 = vunpack.c.h.b16 %v2426
    %v3452 = vunpack.c.l.b16 %v2427
    %v3453 = vunpack.c.h.b16 %v2427
    %v3454 = vunpack.c.l.b16 %v2428
    %v3455 = vunpack.c.h.b16 %v2428
    %v3456 = vunpack.c.l.b16 %v2429
    %v3457 = vunpack.c.h.b16 %v2429
    %v3458 = vunpack.c.l.b16 %v2430
    %v3459 = vunpack.c.h.b16 %v2430
    %v3460 = vunpack.c.l.b16 %v2431
    %v3461 = vunpack.c.h.b16 %v2431
    %v3462 = vunpack.c.l.b16 %v2432
    %v3463 = vunpack.c.h.b16 %v2432
    %v3464 = vunpack.c.l.b16 %v2433
    %v3465 = vunpack.c.h.b16 %v2433
    %v3466 = vunpack.c.l.b16 %v2434
    %v3467 = vunpack.c.h.b16 %v2434
    %v3468 = vunpack.c.l.b16 %v2435
    %v3469 = vunpack.c.h.b16 %v2435
    %v3470 = vunpack.c.l.b16 %v2436
    %v3471 = vunpack.c.h.b16 %v2436
    %v3472 = vunpack.c.l.b16 %v2437
    %v3473 = vunpack.c.h.b16 %v2437
    %v3474 = vunpack.c.l.b16 %v2438
    %v3475 = vunpack.c.h.b16 %v2438
    %v3476 = vunpack.c.l.b16 %v2439
    %v3477 = vunpack.c.h.b16 %v2439
    %v3478 = vunpack.c.l.b16 %v2440
    %v3479 = vunpack.c.h.b16 %v2440
    %v3480 = vunpack.c.l.b16 %v2441
    %v3481 = vunpack.c.h.b16 %v2441
    %v3482 = vunpack.c.l.b16 %v2442
    %v3483 = vunpack.c.h.b16 %v2442
    %v3484 = vunpack.c.l.b16 %v2443
    %v3485 = vunpack.c.h.b16 %v2443
    %v3486 = vunpack.c.l.b16 %v2444
    %v3487 = vunpack.c.h.b16 %v2444
    %v3488 = vunpack.c.l.b16 %v2445
    %v3489 = vunpack.c.h.b16 %v2445
    %v3490 = vunpack.c.l.b16 %v2446
    %v3491 = vunpack.c.h.b16 %v2446
    %v3492 = vunpack.c.l.b16 %v2447
    %v3493 = vunpack.c.h.b16 %v2447
    %v3494 = vunpack.c.l.b16 %v2448
    %v3495 = vunpack.c.h.b16 %v2448
    %v3496 = vunpack.c.l.b16 %v2449
    %v3497 = vunpack.c.h.b16 %v2449
    %v3498 = vunpack.c.l.b16 %v2450
    %v3499 = vunpack.c.h.b16 %v2450
    %v3500 = vunpack.c.l.b16 %v2451
    %v3501 = vunpack.c.h.b16 %v2451
    %v3502 = vunpack.c.l.b16 %v2452
    %v3503 = vunpack.c.h.b16 %v2452
    %v3504 = vunpack.c.l.b16 %v2453
    %v3505 = vunpack.c.h.b16 %v2453
    %v3506 = vunpack.c.l.b16 %v2454
    %v3507 = vunpack.c.h.b16 %v2454
    %v3508 = vunpack.c.l.b16 %v2455
    %v3509 = vunpack.c.h.b16 %v2455
    %v3510 = vunpack.c.l.b16 %v2456
    %v3511 = vunpack.c.h.b16 %v2456
    %v3512 = vunpack.c.l.b16 %v2457
    %v3513 = vunpack.c.h.b16 %v2457
    %v3514 = vunpack.c.l.b16 %v2458
    %v3515 = vunpack.c.h.b16 %v2458
    %v3516 = vunpack.c.l.b16 %v2459
    %v3517 = vunpack.c.h.b16 %v2459
    %v3518 = vunpack.c.l.b16 %v2460
    %v3519 = vunpack.c.h.b16 %v2460
    %v3520 = vunpack.c.l.b16 %v2461
    %v3521 = vunpack.c.h.b16 %v2461
    %v3522 = vunpack.c.l.b16 %v2462
    %v3523 = vunpack.c.h.b16 %v2462
    %v3524 = vunpack.c.l.b16 %v2463
    %v3525 = vunpack.c.h.b16 %v2463
    %v3526 = vunpack.c.l.b16 %v2464
    %v3527 = vunpack.c.h.b16 %v2464
    %v3528 = vunpack.c.l.b16 %v2465
    %v3529 = vunpack.c.h.b16 %v2465
    %v3530 = vunpack.c.l.b16 %v2466
    %v3531 = vunpack.c.h.b16 %v2466
    %v3532 = vunpack.c.l.b16 %v2467
    %v3533 = vunpack.c.h.b16 %v2467
    %v3534 = vunpack.c.l.b16 %v2468
    %v3535 = vunpack.c.h.b16 %v2468
    %v3536 = vunpack.c.l.b16 %v2469
    %v3537 = vunpack.c.h.b16 %v2469
    %v3538 = vunpack.c.l.b16 %v2470
    %v3539 = vunpack.c.h.b16 %v2470
    %v3540 = vunpack.c.l.b16 %v2471
    %v3541 = vunpack.c.h.b16 %v2471
    %v3542 = vunpack.c.l.b16 %v2472
    %v3543 = vunpack.c.h.b16 %v2472
    %v3544 = vunpack.c.l.b16 %v2473
    %v3545 = vunpack.c.h.b16 %v2473
    %v3546 = vunpack.c.l.b16 %v2474
    %v3547 = vunpack.c.h.b16 %v2474
    %v3548 = vunpack.c.l.b16 %v2475
    %v3549 = vunpack.c.h.b16 %v2475
    %v3550 = vunpack.c.l.b16 %v2476
    %v3551 = vunpack.c.h.b16 %v2476
    %v3552 = vunpack.c.l.b16 %v2477
    %v3553 = vunpack.c.h.b16 %v2477
    %v3554 = vunpack.c.l.b16 %v2478
    %v3555 = vunpack.c.h.b16 %v2478
    %v3556 = vunpack.c.l.b16 %v2479
    %v3557 = vunpack.c.h.b16 %v2479
    %v3558 = vunpack.c.l.b16 %v2480
    %v3559 = vunpack.c.h.b16 %v2480
    %v3560 = vunpack.c.l.b16 %v2481
    %v3561 = vunpack.c.h.b16 %v2481
    %v3562 = vunpack.c.l.b16 %v2482
    %v3563 = vunpack.c.h.b16 %v2482
    %v3564 = vunpack.c.l.b16 %v2483
    %v3565 = vunpack.c.h.b16 %v2483
    %v3566 = vunpack.c.l.b16 %v2484
    %v3567 = vunpack.c.h.b16 %v2484
    %v3568 = vunpack.c.l.b16 %v2485
    %v3569 = vunpack.c.h.b16 %v2485
    %v3570 = vunpack.c.l.b16 %v2486
    %v3571 = vunpack.c.h.b16 %v2486
    %v3572 = vunpack.c.l.b16 %v2487
    %v3573 = vunpack.c.h.b16 %v2487
    %v3574 = vunpack.c.l.b16 %v2488
    %v3575 = vunpack.c.h.b16 %v2488
    %v3576 = vunpack.c.l.b16 %v2489
    %v3577 = vunpack.c.h.b16 %v2489
    %v3578 = vunpack.c.l.b16 %v2490
    %v3579 = vunpack.c.h.b16 %v2490
    %v3580 = vunpack.c.l.b16 %v2491
    %v3581 = vunpack.c.h.b16 %v2491
    %v3582 = vunpack.c.l.b16 %v2492
    %v3583 = vunpack.c.h.b16 %v2492
    %v3584 = vunpack.c.l.b16 %v2493
    %v3585 = vunpack.c.h.b16 %v2493
    %v3586 = vunpack.c.l.b16 %v2494
    %v3587 = vunpack.c.h.b16 %v2494
    %v3588 = vunpack.c.l.b16 %v2495
    %v3589 = vunpack.c.h.b16 %v2495
    %v3590 = vunpack.c.l.b16 %v2496
    %v3591 = vunpack.c.h.b16 %v2496
    %v3592 = vunpack.c.l.b16 %v2497
    %v3593 = vunpack.c.h.b16 %v2497
    %v3594 = vunpack.c.l.b16 %v2498
    %v3595 = vunpack.c.h.b16 %v2498
    %v3596 = vunpack.c.l.b16 %v2499
    %v3597 = vunpack.c.h.b16 %v2499
    %v3598 = vunpack.c.l.b16 %v2500
    %v3599 = vunpack.c.h.b16 %v2500
    %v3600 = vunpack.c.l.b16 %v2501
    %v3601 = vunpack.c.h.b16 %v2501
    %v3602 = vunpack.c.l.b16 %v2502
    %v3603 = vunpack.c.h.b16 %v2502
    %v3604 = vunpack.c.l.b16 %v2503
    %v3605 = vunpack.c.h.b16 %v2503
    %v3606 = vunpack.c.l.b16 %v2504
    %v3607 = vunpack.c.h.b16 %v2504
    %v3608 = vunpack.c.l.b16 %v2505
    %v3609 = vunpack.c.h.b16 %v2505
    %v3610 = vunpack.c.l.b16 %v2506
    %v3611 = vunpack.c.h.b16 %v2506
    %v3612 = vunpack.c.l.b16 %v2507
    %v3613 = vunpack.c.h.b16 %v2507
    %v3614 = vunpack.c.l.b16 %v2508
    %v3615 = vunpack.c.h.b16 %v2508
    %v3616 = vunpack.c.l.b16 %v2509
    %v3617 = vunpack.c.h.b16 %v2509
    %v3618 = vunpack.c.l.b16 %v2510
    %v3619 = vunpack.c.h.b16 %v2510
    %v3620 = vunpack.c.l.b16 %v2511
    %v3621 = vunpack.c.h.b16 %v2511
    %v3622 = vunpack.c.l.b16 %v2512
    %v3623 = vunpack.c.h.b16 %v2512
    %v3624 = vunpack.c.l.b16 %v2513
    %v3625 = vunpack.c.h.b16 %v2513
    %v3626 = vunpack.c.l.b16 %v2514
    %v3627 = vunpack.c.h.b16 %v2514
    %v3628 = vunpack.c.l.b16 %v2515
    %v3629 = vunpack.c.h.b16 %v2515
    %v3630 = vunpack.c.l.b16 %v2516
    %v3631 = vunpack.c.h.b16 %v2516
    %v3632 = vunpack.c.l.b16 %v2517
    %v3633 = vunpack.c.h.b16 %v2517
    %v3634 = vunpack.c.l.b16 %v2518
    %v3635 = vunpack.c.h.b16 %v2518
    %v3636 = vunpack.c.l.b16 %v2519
    %v3637 = vunpack.c.h.b16 %v2519
    %v3638 = vunpack.c.l.b16 %v2520
    %v3639 = vunpack.c.h.b16 %v2520
    %v3640 = vunpack.c.l.b16 %v2521
    %v3641 = vunpack.c.h.b16 %v2521
    %v3642 = vunpack.c.l.b16 %v2522
    %v3643 = vunpack.c.h.b16 %v2522
    %v3644 = vunpack.c.l.b16 %v2523
    %v3645 = vunpack.c.h.b16 %v2523
    %v3646 = vunpack.c.l.b16 %v2524
    %v3647 = vunpack.c.h.b16 %v2524
    %v3648 = vunpack.c.l.b16 %v2525
    %v3649 = vunpack.c.h.b16 %v2525
    %v3650 = vunpack.c.l.b16 %v2526
    %v3651 = vunpack.c.h.b16 %v2526
    %v3652 = vunpack.c.l.b16 %v2527
    %v3653 = vunpack.c.h.b16 %v2527
    %v3654 = vunpack.c.l.b16 %v2528
    %v3655 = vunpack.c.h.b16 %v2528
    %v3656 = vunpack.c.l.b16 %v2529
    %v3657 = vunpack.c.h.b16 %v2529
    %v3658 = vunpack.c.l.b16 %v2530
    %v3659 = vunpack.c.h.b16 %v2530
    %v3660 = vunpack.c.l.b16 %v2531
    %v3661 = vunpack.c.h.b16 %v2531
    %v3662 = vunpack.c.l.b16 %v2532
    %v3663 = vunpack.c.h.b16 %v2532
    %v3664 = vunpack.c.l.b16 %v2533
    %v3665 = vunpack.c.h.b16 %v2533
    %v3666 = vunpack.c.l.b16 %v2534
    %v3667 = vunpack.c.h.b16 %v2534
    %v3668 = vunpack.c.l.b16 %v2535
    %v3669 = vunpack.c.h.b16 %v2535
    %v3670 = vunpack.c.l.b16 %v2536
    %v3671 = vunpack.c.h.b16 %v2536
    %v3672 = vunpack.c.l.b16 %v2537
    %v3673 = vunpack.c.h.b16 %v2537
    %v3674 = vunpack.c.l.b16 %v2538
    %v3675 = vunpack.c.h.b16 %v2538
    %v3676 = vunpack.c.l.b16 %v2539
    %v3677 = vunpack.c.h.b16 %v2539
    %v3678 = vunpack.c.l.b16 %v2540
    %v3679 = vunpack.c.h.b16 %v2540
    %v3680 = vunpack.c.l.b16 %v2541
    %v3681 = vunpack.c.h.b16 %v2541
    %v3682 = vunpack.c.l.b16 %v2542
    %v3683 = vunpack.c.h.b16 %v2542
    %v3684 = vunpack.c.l.b16 %v2543
    %v3685 = vunpack.c.h.b16 %v2543
    %v3686 = vunpack.c.l.b16 %v2544
    %v3687 = vunpack.c.h.b16 %v2544
    %v3688 = vunpack.c.l.b16 %v2545
    %v3689 = vunpack.c.h.b16 %v2545
    %v3690 = vunpack.c.l.b16 %v2546
    %v3691 = vunpack.c.h.b16 %v2546
    %v3692 = vunpack.c.l.b16 %v2547
    %v3693 = vunpack.c.h.b16 %v2547
    %v3694 = vunpack.c.l.b16 %v2548
    %v3695 = vunpack.c.h.b16 %v2548
    %v3696 = vunpack.c.l.b16 %v2549
    %v3697 = vunpack.c.h.b16 %v2549
    %v3698 = vunpack.c.l.b16 %v2550
    %v3699 = vunpack.c.h.b16 %v2550
    %v3700 = vunpack.c.l.b16 %v2551
    %v3701 = vunpack.c.h.b16 %v2551
    %v3702 = vunpack.c.l.b16 %v2552
    %v3703 = vunpack.c.h.b16 %v2552
    %v3704 = vunpack.c.l.b16 %v2553
    %v3705 = vunpack.c.h.b16 %v2553
    %v3706 = vunpack.c.l.b16 %v2554
    %v3707 = vunpack.c.h.b16 %v2554
    %v3708 = vunpack.c.l.b16 %v2555
    %v3709 = vunpack.c.h.b16 %v2555
    %v3710 = vunpack.c.l.b16 %v2556
    %v3711 = vunpack.c.h.b16 %v2556
    %v3712 = vunpack.c.l.b16 %v2557
    %v3713 = vunpack.c.h.b16 %v2557
    %v3714 = vunpack.c.l.b16 %v2558
    %v3715 = vunpack.c.h.b16 %v2558
    %v3716 = vunpack.c.l.b16 %v2559
    %v3717 = vunpack.c.h.b16 %v2559
    %v3718 = vunpack.c.l.b16 %v2560
    %v3719 = vunpack.c.h.b16 %v2560
    %v3720 = vunpack.c.l.b16 %v2561
    %v3721 = vunpack.c.h.b16 %v2561
    %v3722 = vunpack.c.l.b16 %v2562
    %v3723 = vunpack.c.h.b16 %v2562
    %v3724 = vunpack.c.l.b16 %v2563
    %v3725 = vunpack.c.h.b16 %v2563
    %v3726 = vunpack.c.l.b16 %v2564
    %v3727 = vunpack.c.h.b16 %v2564
    %v3728 = vunpack.c.l.b16 %v2565
    %v3729 = vunpack.c.h.b16 %v2565
    %v3730 = vunpack.c.l.b16 %v2566
    %v3731 = vunpack.c.h.b16 %v2566
    %v3732 = vunpack.c.l.b16 %v2567
    %v3733 = vunpack.c.h.b16 %v2567
    %v3734 = vunpack.c.l.b16 %v2568
    %v3735 = vunpack.c.h.b16 %v2568
    %v3736 = vunpack.c.l.b16 %v2569
    %v3737 = vunpack.c.h.b16 %v2569
    %v3738 = vunpack.c.l.b16 %v2570
    %v3739 = vunpack.c.h.b16 %v2570
    %v3740 = vunpack.c.l.b16 %v2571
    %v3741 = vunpack.c.h.b16 %v2571
    %v3742 = vunpack.c.l.b16 %v2572
    %v3743 = vunpack.c.h.b16 %v2572
    %v3744 = vunpack.c.l.b16 %v2573
    %v3745 = vunpack.c.h.b16 %v2573
    %v3746 = vunpack.c.l.b16 %v2574
    %v3747 = vunpack.c.h.b16 %v2574
    %v3748 = vunpack.c.l.b16 %v2575
    %v3749 = vunpack.c.h.b16 %v2575
    %v3750 = vunpack.c.l.b16 %v2576
    %v3751 = vunpack.c.h.b16 %v2576
    %v3752 = vunpack.c.l.b16 %v2577
    %v3753 = vunpack.c.h.b16 %v2577
    %v3754 = vunpack.c.l.b16 %v2578
    %v3755 = vunpack.c.h.b16 %v2578
    %v3756 = vunpack.c.l.b16 %v2579
    %v3757 = vunpack.c.h.b16 %v2579
    %v3758 = vunpack.c.l.b16 %v2580
    %v3759 = vunpack.c.h.b16 %v2580
    %v3760 = vunpack.c.l.b16 %v2581
    %v3761 = vunpack.c.h.b16 %v2581
    %v3762 = vunpack.c.l.b16 %v2582
    %v3763 = vunpack.c.h.b16 %v2582
    %v3764 = vunpack.c.l.b16 %v2583
    %v3765 = vunpack.c.h.b16 %v2583
    %v3766 = vunpack.c.l.b16 %v2584
    %v3767 = vunpack.c.h.b16 %v2584
    %v3768 = vunpack.c.l.b16 %v2585
    %v3769 = vunpack.c.h.b16 %v2585
    %v3770 = vunpack.c.l.b16 %v2586
    %v3771 = vunpack.c.h.b16 %v2586
    %v3772 = vunpack.c.l.b16 %v2587
    %v3773 = vunpack.c.h.b16 %v2587
    %v3774 = vunpack.c.l.b16 %v2588
    %v3775 = vunpack.c.h.b16 %v2588
    %v3776 = vunpack.c.l.b16 %v2589
    %v3777 = vunpack.c.h.b16 %v2589
    %v3778 = vunpack.c.l.b16 %v2590
    %v3779 = vunpack.c.h.b16 %v2590
    %v3780 = vunpack.c.l.b16 %v2591
    %v3781 = vunpack.c.h.b16 %v2591
    %v3782 = vunpack.c.l.b16 %v2592
    %v3783 = vunpack.c.h.b16 %v2592
    %v3784 = vunpack.c.l.b16 %v2593
    %v3785 = vunpack.c.h.b16 %v2593
    %v3786 = vunpack.c.l.b16 %v2594
    %v3787 = vunpack.c.h.b16 %v2594
    %v3788 = vunpack.c.l.b16 %v2595
    %v3789 = vunpack.c.h.b16 %v2595
    %v3790 = vunpack.c.l.b16 %v2596
    %v3791 = vunpack.c.h.b16 %v2596
    %v3792 = vunpack.c.l.b16 %v2597
    %v3793 = vunpack.c.h.b16 %v2597
    %v3794 = vunpack.c.l.b16 %v2598
    %v3795 = vunpack.c.h.b16 %v2598
    %v3796 = vunpack.c.l.b16 %v2599
    %v3797 = vunpack.c.h.b16 %v2599
    %v3798 = vunpack.c.l.b16 %v2600
    %v3799 = vunpack.c.h.b16 %v2600
    %v3800 = vunpack.c.l.b16 %v2601
    %v3801 = vunpack.c.h.b16 %v2601
    %v3802 = vunpack.c.l.b16 %v2602
    %v3803 = vunpack.c.h.b16 %v2602
    %v3804 = vunpack.c.l.b16 %v2603
    %v3805 = vunpack.c.h.b16 %v2603
    %v3806 = vunpack.c.l.b16 %v2604
    %v3807 = vunpack.c.h.b16 %v2604
    %v3808 = vunpack.c.l.b16 %v2605
    %v3809 = vunpack.c.h.b16 %v2605
    %v3810 = vunpack.c.l.b16 %v2606
    %v3811 = vunpack.c.h.b16 %v2606
    %v3812 = vunpack.c.l.b16 %v2607
    %v3813 = vunpack.c.h.b16 %v2607
    %v3814 = vunpack.c.l.b16 %v2608
    %v3815 = vunpack.c.h.b16 %v2608
    %v3816 = vunpack.c.l.b16 %v2609
    %v3817 = vunpack.c.h.b16 %v2609
    %v3818 = vunpack.c.l.b16 %v2610
    %v3819 = vunpack.c.h.b16 %v2610
    %v3820 = vunpack.c.l.b16 %v2611
    %v3821 = vunpack.c.h.b16 %v2611
    %v3822 = vunpack.c.l.b16 %v2612
    %v3823 = vunpack.c.h.b16 %v2612
    %v3824 = vunpack.c.l.b16 %v2613
    %v3825 = vunpack.c.h.b16 %v2613
    %v3826 = vunpack.c.l.b16 %v2614
    %v3827 = vunpack.c.h.b16 %v2614
    %v3828 = vunpack.c.l.b16 %v2615
    %v3829 = vunpack.c.h.b16 %v2615
    %v3830 = vunpack.c.l.b16 %v2616
    %v3831 = vunpack.c.h.b16 %v2616
    %v3832 = vunpack.c.l.b16 %v2617
    %v3833 = vunpack.c.h.b16 %v2617
    %v3834 = vunpack.c.l.b16 %v2618
    %v3835 = vunpack.c.h.b16 %v2618
    %v3836 = vunpack.c.l.b16 %v2619
    %v3837 = vunpack.c.h.b16 %v2619
    %v3838 = vunpack.c.l.b16 %v2620
    %v3839 = vunpack.c.h.b16 %v2620
    %v3840 = vunpack.c.l.b16 %v2621
    %v3841 = vunpack.c.h.b16 %v2621
    %v3842 = vunpack.c.l.b16 %v2622
    %v3843 = vunpack.c.h.b16 %v2622
    %v3844 = vunpack.c.l.b16 %v2623
    %v3845 = vunpack.c.h.b16 %v2623
    %v3846 = vunpack.c.l.b16 %v2624
    %v3847 = vunpack.c.h.b16 %v2624
    %v3848 = vunpack.c.l.b16 %v2625
    %v3849 = vunpack.c.h.b16 %v2625
    %v3850 = vunpack.c.l.b16 %v2626
    %v3851 = vunpack.c.h.b16 %v2626
    %v3852 = vunpack.c.l.b16 %v2627
    %v3853 = vunpack.c.h.b16 %v2627
    %v3854 = vunpack.c.l.b16 %v2628
    %v3855 = vunpack.c.h.b16 %v2628
    %v3856 = vunpack.c.l.b16 %v2629
    %v3857 = vunpack.c.h.b16 %v2629
    %v3858 = vunpack.c.l.b16 %v2630
    %v3859 = vunpack.c.h.b16 %v2630
    %v3860 = vunpack.c.l.b16 %v2631
    %v3861 = vunpack.c.h.b16 %v2631
    %v3862 = vunpack.c.l.b16 %v2632
    %v3863 = vunpack.c.h.b16 %v2632
    %v3864 = vunpack.c.l.b16 %v2633
    %v3865 = vunpack.c.h.b16 %v2633
    %v3866 = vunpack.c.l.b16 %v2634
    %v3867 = vunpack.c.h.b16 %v2634
    %v3868 = vunpack.c.l.b16 %v2635
    %v3869 = vunpack.c.h.b16 %v2635
    %v3870 = vunpack.c.l.b16 %v2636
    %v3871 = vunpack.c.h.b16 %v2636
    %v3872 = vunpack.c.l.b16 %v2637
    %v3873 = vunpack.c.h.b16 %v2637
    %v3874 = vunpack.c.l.b16 %v2638
    %v3875 = vunpack.c.h.b16 %v2638
    %v3876 = vunpack.c.l.b16 %v2639
    %v3877 = vunpack.c.h.b16 %v2639
    %v3878 = vunpack.c.l.b16 %v2640
    %v3879 = vunpack.c.h.b16 %v2640
    %v3880 = vunpack.c.l.b16 %v2641
    %v3881 = vunpack.c.h.b16 %v2641
    %v3882 = vunpack.c.l.b16 %v2642
    %v3883 = vunpack.c.h.b16 %v2642
    %v3884 = vunpack.c.l.b16 %v2643
    %v3885 = vunpack.c.h.b16 %v2643
    %v3886 = vunpack.c.l.b16 %v2644
    %v3887 = vunpack.c.h.b16 %v2644
    %v3888 = vunpack.c.l.b16 %v2645
    %v3889 = vunpack.c.h.b16 %v2645
    %v3890 = vunpack.c.l.b16 %v2646
    %v3891 = vunpack.c.h.b16 %v2646
    %v3892 = vunpack.c.l.b16 %v2647
    %v3893 = vunpack.c.h.b16 %v2647
    %v3894 = vunpack.c.l.b16 %v2648
    %v3895 = vunpack.c.h.b16 %v2648
    %v3896 = vunpack.c.l.b16 %v2649
    %v3897 = vunpack.c.h.b16 %v2649
    %v3898 = vunpack.c.l.b16 %v2650
    %v3899 = vunpack.c.h.b16 %v2650
    %v3900 = vunpack.c.l.b16 %v2651
    %v3901 = vunpack.c.h.b16 %v2651
    %v3902 = vunpack.c.l.b16 %v2652
    %v3903 = vunpack.c.h.b16 %v2652
    %v3904 = vunpack.c.l.b16 %v2653
    %v3905 = vunpack.c.h.b16 %v2653
    %v3906 = vunpack.c.l.b16 %v2654
    %v3907 = vunpack.c.h.b16 %v2654
    %v3908 = vunpack.c.l.b16 %v2655
    %v3909 = vunpack.c.h.b16 %v2655
    %v3910 = vunpack.c.l.b16 %v2656
    %v3911 = vunpack.c.h.b16 %v2656
    %v3912 = vunpack.c.l.b16 %v2657
    %v3913 = vunpack.c.h.b16 %v2657
    %v3914 = vunpack.c.l.b16 %v2658
    %v3915 = vunpack.c.h.b16 %v2658
    %v3916 = vunpack.c.l.b16 %v2659
    %v3917 = vunpack.c.h.b16 %v2659
    %v3918 = vunpack.c.l.b16 %v2660
    %v3919 = vunpack.c.h.b16 %v2660
    %v3920 = vunpack.c.l.b16 %v2661
    %v3921 = vunpack.c.h.b16 %v2661
    %v3922 = vunpack.c.l.b16 %v2662
    %v3923 = vunpack.c.h.b16 %v2662
    %v3924 = vunpack.c.l.b16 %v2663
    %v3925 = vunpack.c.h.b16 %v2663
    %v3926 = vunpack.c.l.b16 %v2664
    %v3927 = vunpack.c.h.b16 %v2664
    %v3928 = vunpack.c.l.b16 %v2665
    %v3929 = vunpack.c.h.b16 %v2665
    %v3930 = vunpack.c.l.b16 %v2666
    %v3931 = vunpack.c.h.b16 %v2666
    %v3932 = vunpack.c.l.b16 %v2667
    %v3933 = vunpack.c.h.b16 %v2667
    %v3934 = vunpack.c.l.b16 %v2668
    %v3935 = vunpack.c.h.b16 %v2668
    %v3936 = vunpack.c.l.b16 %v2669
    %v3937 = vunpack.c.h.b16 %v2669
    %v3938 = vunpack.c.l.b16 %v2670
    %v3939 = vunpack.c.h.b16 %v2670
    %v3940 = vunpack.c.l.b16 %v2671
    %v3941 = vunpack.c.h.b16 %v2671
    %v3942 = vunpack.c.l.b16 %v2672
    %v3943 = vunpack.c.h.b16 %v2672
    %v3944 = vunpack.c.l.b16 %v2673
    %v3945 = vunpack.c.h.b16 %v2673
    %v3946 = vunpack.c.l.b16 %v2674
    %v3947 = vunpack.c.h.b16 %v2674
    %v3948 = vunpack.c.l.b16 %v2675
    %v3949 = vunpack.c.h.b16 %v2675
    %v3950 = vunpack.c.l.b16 %v2676
    %v3951 = vunpack.c.h.b16 %v2676
    %v3952 = vunpack.c.l.b16 %v2677
    %v3953 = vunpack.c.h.b16 %v2677
    %v3954 = vunpack.c.l.b16 %v2678
    %v3955 = vunpack.c.h.b16 %v2678
    %v3956 = vunpack.c.l.b16 %v2679
    %v3957 = vunpack.c.h.b16 %v2679
    %v3958 = vunpack.c.l.b16 %v2680
    %v3959 = vunpack.c.h.b16 %v2680
    %v3960 = vunpack.c.l.b16 %v2681
    %v3961 = vunpack.c.h.b16 %v2681
    %v3962 = vunpack.c.l.b16 %v2682
    %v3963 = vunpack.c.h.b16 %v2682
    %v3964 = vunpack.c.l.b16 %v2683
    %v3965 = vunpack.c.h.b16 %v2683
    %v3966 = vunpack.c.l.b16 %v2684
    %v3967 = vunpack.c.h.b16 %v2684
    %v3968 = vunpack.c.l.b16 %v2685
    %v3969 = vunpack.c.h.b16 %v2685
    %v3970 = vunpack.c.l.b16 %v2686
    %v3971 = vunpack.c.h.b16 %v2686
    %v3972 = vunpack.c.l.b16 %v2687
    %v3973 = vunpack.c.h.b16 %v2687
    %v3974 = vunpack.c.l.b16 %v2688
    %v3975 = vunpack.c.h.b16 %v2688
    %v3976 = vunpack.c.l.b16 %v2689
    %v3977 = vunpack.c.h.b16 %v2689
    %v3978 = vunpack.c.l.b16 %v2690
    %v3979 = vunpack.c.h.b16 %v2690
    %v3980 = vunpack.c.l.b16 %v2691
    %v3981 = vunpack.c.h.b16 %v2691
    %v3982 = vunpack.c.l.b16 %v2692
    %v3983 = vunpack.c.h.b16 %v2692
    %v3984 = vunpack.c.l.b16 %v2693
    %v3985 = vunpack.c.h.b16 %v2693
    %v3986 = vunpack.c.l.b16 %v2694
    %v3987 = vunpack.c.h.b16 %v2694
    %v3988 = vunpack.c.l.b16 %v2695
    %v3989 = vunpack.c.h.b16 %v2695
    %v3990 = vunpack.c.l.b16 %v2696
    %v3991 = vunpack.c.h.b16 %v2696
    %v3992 = vunpack.c.l.b16 %v2697
    %v3993 = vunpack.c.h.b16 %v2697
    %v3994 = vunpack.c.l.b16 %v2698
    %v3995 = vunpack.c.h.b16 %v2698
    %v3996 = vunpack.c.l.b16 %v2699
    %v3997 = vunpack.c.h.b16 %v2699
    %v3998 = vunpack.c.l.b16 %v2700
    %v3999 = vunpack.c.h.b16 %v2700
    %v4000 = vunpack.c.l.b16 %v2701
    %v4001 = vunpack.c.h.b16 %v2701
    %v4002 = vunpack.c.l.b16 %v2702
    %v4003 = vunpack.c.h.b16 %v2702
    %v4004 = vunpack.c.l.b16 %v2703
    %v4005 = vunpack.c.h.b16 %v2703
    %v4006 = vunpack.c.l.b16 %v2704
    %v4007 = vunpack.c.h.b16 %v2704
    %v4008 = vunpack.c.l.b16 %v2705
    %v4009 = vunpack.c.h.b16 %v2705
    %v4010 = vunpack.c.l.b16 %v2706
    %v4011 = vunpack.c.h.b16 %v2706
    %v4012 = vunpack.c.l.b16 %v2707
    %v4013 = vunpack.c.h.b16 %v2707
    %v4014 = vunpack.c.l.b16 %v2708
    %v4015 = vunpack.c.h.b16 %v2708
    %v4016 = vunpack.c.l.b16 %v2709
    %v4017 = vunpack.c.h.b16 %v2709
    %v4018 = vunpack.c.l.b16 %v2710
    %v4019 = vunpack.c.h.b16 %v2710
    %v4020 = vunpack.c.l.b16 %v2711
    %v4021 = vunpack.c.h.b16 %v2711
    %v4022 = vunpack.c.l.b16 %v2712
    %v4023 = vunpack.c.h.b16 %v2712
    %v4024 = vunpack.c.l.b16 %v2713
    %v4025 = vunpack.c.h.b16 %v2713
    %v4026 = vunpack.c.l.b16 %v2714
    %v4027 = vunpack.c.h.b16 %v2714
    %v4028 = vunpack.c.l.b16 %v2715
    %v4029 = vunpack.c.h.b16 %v2715
    %v4030 = vunpack.c.l.b16 %v2716
    %v4031 = vunpack.c.h.b16 %v2716
    %v4032 = vunpack.c.l.b16 %v2717
    %v4033 = vunpack.c.h.b16 %v2717
    %v4034 = vunpack.c.l.b16 %v2718
    %v4035 = vunpack.c.h.b16 %v2718
    %v4036 = vunpack.c.l.b16 %v2719
    %v4037 = vunpack.c.h.b16 %v2719
    %v4038 = vunpack.c.l.b16 %v2720
    %v4039 = vunpack.c.h.b16 %v2720
    %v4040 = vunpack.c.l.b16 %v2721
    %v4041 = vunpack.c.h.b16 %v2721
    %v4042 = vunpack.c.l.b16 %v2722
    %v4043 = vunpack.c.h.b16 %v2722
    %v4044 = vunpack.c.l.b16 %v2723
    %v4045 = vunpack.c.h.b16 %v2723
    %v4046 = vunpack.c.l.b16 %v2724
    %v4047 = vunpack.c.h.b16 %v2724
    %v4048 = vunpack.c.l.b16 %v2725
    %v4049 = vunpack.c.h.b16 %v2725
    %v4050 = vunpack.c.l.b16 %v2726
    %v4051 = vunpack.c.h.b16 %v2726
    %v4052 = vunpack.c.l.b16 %v2727
    %v4053 = vunpack.c.h.b16 %v2727
    %v4054 = vunpack.c.l.b16 %v2728
    %v4055 = vunpack.c.h.b16 %v2728
    %v4056 = vunpack.c.l.b16 %v2729
    %v4057 = vunpack.c.h.b16 %v2729
    %v4058 = vunpack.c.l.b16 %v2730
    %v4059 = vunpack.c.h.b16 %v2730
    %v4060 = vunpack.c.l.b16 %v2731
    %v4061 = vunpack.c.h.b16 %v2731
    %v4062 = vunpack.c.l.b16 %v2732
    %v4063 = vunpack.c.h.b16 %v2732
    %v4064 = vunpack.c.l.b16 %v2733
    %v4065 = vunpack.c.h.b16 %v2733
    %v4066 = vunpack.c.l.b16 %v2734
    %v4067 = vunpack.c.h.b16 %v2734
    %v4068 = vunpack.c.l.b16 %v2735
    %v4069 = vunpack.c.h.b16 %v2735
    %v4070 = vunpack.c.l.b16 %v2736
    %v4071 = vunpack.c.h.b16 %v2736
    %v4072 = vunpack.c.l.b16 %v2737
    %v4073 = vunpack.c.h.b16 %v2737
    %v4074 = vunpack.c.l.b16 %v2738
    %v4075 = vunpack.c.h.b16 %v2738
    %v4076 = vunpack.c.l.b16 %v2739
    %v4077 = vunpack.c.h.b16 %v2739
    %v4078 = vunpack.c.l.b16 %v2740
    %v4079 = vunpack.c.h.b16 %v2740
    %v4080 = vunpack.c.l.b16 %v2741
    %v4081 = vunpack.c.h.b16 %v2741
    %v4082 = vunpack.c.l.b16 %v2742
    %v4083 = vunpack.c.h.b16 %v2742
    %v4084 = vunpack.c.l.b16 %v2743
    %v4085 = vunpack.c.h.b16 %v2743
    %v4086 = vunpack.c.l.b16 %v2744
    %v4087 = vunpack.c.h.b16 %v2744
    %v4088 = vunpack.c.l.b16 %v2745
    %v4089 = vunpack.c.h.b16 %v2745
    %v4090 = vunpack.c.l.b16 %v2746
    %v4091 = vunpack.c.h.b16 %v2746
    %v4092 = vunpack.c.l.b16 %v2747
    %v4093 = vunpack.c.h.b16 %v2747
    %v4094 = vunpack.c.l.b16 %v2748
    %v4095 = vunpack.c.h.b16 %v2748
    %v4096 = vunpack.c.l.b16 %v2749
    %v4097 = vunpack.c.h.b16 %v2749
    %v4098 = vunpack.c.l.b16 %v2750
    %v4099 = vunpack.c.h.b16 %v2750
    %v4100 = vunpack.c.l.b16 %v2751
    %v4101 = vunpack.c.h.b16 %v2751
    %v4102 = vunpack.c.l.b16 %v2752
    %v4103 = vunpack.c.h.b16 %v2752
    %v4104 = vunpack.c.l.b16 %v2753
    %v4105 = vunpack.c.h.b16 %v2753
    %v4106 = vunpack.c.l.b16 %v2754
    %v4107 = vunpack.c.h.b16 %v2754
    %v4108 = vunpack.c.l.b16 %v2755
    %v4109 = vunpack.c.h.b16 %v2755
    %v4110 = vunpack.c.l.b16 %v2756
    %v4111 = vunpack.c.h.b16 %v2756
    %v4112 = vunpack.c.l.b16 %v2757
    %v4113 = vunpack.c.h.b16 %v2757
    %v4114 = vunpack.c.l.b16 %v2758
    %v4115 = vunpack.c.h.b16 %v2758
    %v4116 = vunpack.c.l.b16 %v2759
    %v4117 = vunpack.c.h.b16 %v2759
    %v4118 = vunpack.c.l.b16 %v2760
    %v4119 = vunpack.c.h.b16 %v2760
    %v4120 = vunpack.c.l.b16 %v2761
    %v4121 = vunpack.c.h.b16 %v2761
    %v4122 = vunpack.c.l.b16 %v2762
    %v4123 = vunpack.c.h.b16 %v2762
    %v4124 = vunpack.c.l.b16 %v2763
    %v4125 = vunpack.c.h.b16 %v2763
    %v4126 = vunpack.c.l.b16 %v2764
    %v4127 = vunpack.c.h.b16 %v2764
    %v4128 = vunpack.c.l.b16 %v2765
    %v4129 = vunpack.c.h.b16 %v2765
    %v4130 = vunpack.c.l.b16 %v2766
    %v4131 = vunpack.c.h.b16 %v2766
    %v4132 = vunpack.c.l.b16 %v2767
    %v4133 = vunpack.c.h.b16 %v2767
    %v4134 = vunpack.c.l.b16 %v2768
    %v4135 = vunpack.c.h.b16 %v2768
    %v4136 = vunpack.c.l.b16 %v2769
    %v4137 = vunpack.c.h.b16 %v2769
    %v4138 = vunpack.c.l.b16 %v2770
    %v4139 = vunpack.c.h.b16 %v2770
    %v4140 = vunpack.c.l.b16 %v2771
    %v4141 = vunpack.c.h.b16 %v2771
    %v4142 = vunpack.c.l.b16 %v2772
    %v4143 = vunpack.c.h.b16 %v2772
    %v4144 = vunpack.c.l.b16 %v2773
    %v4145 = vunpack.c.h.b16 %v2773
    %v4146 = vunpack.c.l.b16 %v2774
    %v4147 = vunpack.c.h.b16 %v2774
    %v4148 = vunpack.c.l.b16 %v2775
    %v4149 = vunpack.c.h.b16 %v2775
    %v4150 = vunpack.c.l.b16 %v2776
    %v4151 = vunpack.c.h.b16 %v2776
    %v4152 = vunpack.c.l.b16 %v2777
    %v4153 = vunpack.c.h.b16 %v2777
    %v4154 = vunpack.c.l.b16 %v2778
    %v4155 = vunpack.c.h.b16 %v2778
    %v4156 = vunpack.c.l.b16 %v2779
    %v4157 = vunpack.c.h.b16 %v2779
    %v4158 = vunpack.c.l.b16 %v2780
    %v4159 = vunpack.c.h.b16 %v2780
    %v4160 = vunpack.c.l.b16 %v2781
    %v4161 = vunpack.c.h.b16 %v2781
    %v4162 = vunpack.c.l.b16 %v2782
    %v4163 = vunpack.c.h.b16 %v2782
    %v4164 = vunpack.c.l.b16 %v2783
    %v4165 = vunpack.c.h.b16 %v2783
    %v4166 = vunpack.c.l.b16 %v2784
    %v4167 = vunpack.c.h.b16 %v2784
    %v4168 = vunpack.c.l.b16 %v2785
    %v4169 = vunpack.c.h.b16 %v2785
    %v4170 = vunpack.c.l.b16 %v2786
    %v4171 = vunpack.c.h.b16 %v2786
    %v4172 = vunpack.c.l.b16 %v2787
    %v4173 = vunpack.c.h.b16 %v2787
    %v4174 = vunpack.c.l.b16 %v2788
    %v4175 = vunpack.c.h.b16 %v2788
    %v4176 = vunpack.c.l.b16 %v2789
    %v4177 = vunpack.c.h.b16 %v2789
    %v4178 = vunpack.c.l.b16 %v2790
    %v4179 = vunpack.c.h.b16 %v2790
    %v4180 = vunpack.c.l.b16 %v2791
    %v4181 = vunpack.c.h.b16 %v2791
    %v4182 = vunpack.c.l.b16 %v2792
    %v4183 = vunpack.c.h.b16 %v2792
    %v4184 = vunpack.c.l.b16 %v2793
    %v4185 = vunpack.c.h.b16 %v2793
    %v4186 = vunpack.c.l.b16 %v2794
    %v4187 = vunpack.c.h.b16 %v2794
    %v4188 = vunpack.c.l.b16 %v2795
    %v4189 = vunpack.c.h.b16 %v2795
    %v4190 = vunpack.c.l.b16 %v2796
    %v4191 = vunpack.c.h.b16 %v2796
    %v4192 = vunpack.c.l.b16 %v2797
    %v4193 = vunpack.c.h.b16 %v2797
    %v4194 = vunpack.c.l.b16 %v2798
    %v4195 = vunpack.c.h.b16 %v2798
    %v4196 = vunpack.c.l.b16 %v2799
    %v4197 = vunpack.c.h.b16 %v2799
    %v4198 = vunpack.c.l.b16 %v2800
    %v4199 = vunpack.c.h.b16 %v2800
    %v4200 = vunpack.c.l.b16 %v2801
    %v4201 = vunpack.c.h.b16 %v2801
    %v4202 = vunpack.c.l.b16 %v2802
    %v4203 = vunpack.c.h.b16 %v2802
    %v4204 = vunpack.c.l.b16 %v2803
    %v4205 = vunpack.c.h.b16 %v2803
    %v4206 = vunpack.c.l.b16 %v2804
    %v4207 = vunpack.c.h.b16 %v2804
    %v4208 = vunpack.c.l.b16 %v2805
    %v4209 = vunpack.c.h.b16 %v2805
    %v4210 = vunpack.c.l.b16 %v2806
    %v4211 = vunpack.c.h.b16 %v2806
    %v4212 = vunpack.c.l.b16 %v2807
    %v4213 = vunpack.c.h.b16 %v2807
    %v4214 = vunpack.c.l.b16 %v2808
    %v4215 = vunpack.c.h.b16 %v2808
    %v4216 = vunpack.c.l.b16 %v2809
    %v4217 = vunpack.c.h.b16 %v2809
    %v4218 = vunpack.c.l.b16 %v2810
    %v4219 = vunpack.c.h.b16 %v2810
    %v4220 = vunpack.c.l.b16 %v2811
    %v4221 = vunpack.c.h.b16 %v2811
    %v4222 = vunpack.c.l.b16 %v2812
    %v4223 = vunpack.c.h.b16 %v2812
    %v4224 = vunpack.c.l.b16 %v2813
    %v4225 = vunpack.c.h.b16 %v2813
    %v4226 = vunpack.c.l.b16 %v2814
    %v4227 = vunpack.c.h.b16 %v2814
    %v4228 = vunpack.c.l.b16 %v2815
    %v4229 = vunpack.c.h.b16 %v2815
    %v4230 = vunpack.c.l.b16 %v2816
    %v4231 = vunpack.c.h.b16 %v2816
    %v4232 = vunpack.c.l.b16 %v2817
    %v4233 = vunpack.c.h.b16 %v2817
    %v4234 = vunpack.c.l.b16 %v2818
    %v4235 = vunpack.c.h.b16 %v2818
    %v4236 = vunpack.c.l.b16 %v2819
    %v4237 = vunpack.c.h.b16 %v2819
    %v4238 = vunpack.c.l.b16 %v2820
    %v4239 = vunpack.c.h.b16 %v2820
    %v4240 = vunpack.c.l.b16 %v2821
    %v4241 = vunpack.c.h.b16 %v2821
    %v4242 = vunpack.c.l.b16 %v2822
    %v4243 = vunpack.c.h.b16 %v2822
    %v4244 = vunpack.c.l.b16 %v2823
    %v4245 = vunpack.c.h.b16 %v2823
    %v4246 = vunpack.c.l.b16 %v2824
    %v4247 = vunpack.c.h.b16 %v2824
    %v4248 = vunpack.c.l.b16 %v2825
    %v4249 = vunpack.c.h.b16 %v2825
    %v4250 = vunpack.c.l.b16 %v2826
    %v4251 = vunpack.c.h.b16 %v2826
    %v4252 = vunpack.c.l.b16 %v2827
    %v4253 = vunpack.c.h.b16 %v2827
    %v4254 = vunpack.c.l.b16 %v2828
    %v4255 = vunpack.c.h.b16 %v2828
    %v4256 = vunpack.c.l.b16 %v2829
    %v4257 = vunpack.c.h.b16 %v2829
    %v4258 = vunpack.c.l.b16 %v2830
    %v4259 = vunpack.c.h.b16 %v2830
    %v4260 = vunpack.c.l.b16 %v2831
    %v4261 = vunpack.c.h.b16 %v2831
    %v4262 = vunpack.c.l.b16 %v2832
    %v4263 = vunpack.c.h.b16 %v2832
    %v4264 = vunpack.c.l.b16 %v2833
    %v4265 = vunpack.c.h.b16 %v2833
    %v4266 = vunpack.c.l.b16 %v2834
    %v4267 = vunpack.c.h.b16 %v2834
    %v4268 = vunpack.c.l.b16 %v2835
    %v4269 = vunpack.c.h.b16 %v2835
    %v4270 = vunpack.c.l.b16 %v2836
    %v4271 = vunpack.c.h.b16 %v2836
    %v4272 = vunpack.c.l.b16 %v2837
    %v4273 = vunpack.c.h.b16 %v2837
    %v4274 = vunpack.c.l.b16 %v2838
    %v4275 = vunpack.c.h.b16 %v2838
    %v4276 = vunpack.c.l.b16 %v2839
    %v4277 = vunpack.c.h.b16 %v2839
    %v4278 = vunpack.c.l.b16 %v2840
    %v4279 = vunpack.c.h.b16 %v2840
    %v4280 = vunpack.c.l.b16 %v2841
    %v4281 = vunpack.c.h.b16 %v2841
    %v4282 = vunpack.c.l.b16 %v2842
    %v4283 = vunpack.c.h.b16 %v2842
    %v4284 = vunpack.c.l.b16 %v2843
    %v4285 = vunpack.c.h.b16 %v2843
    %v4286 = vunpack.c.l.b16 %v2844
    %v4287 = vunpack.c.h.b16 %v2844
    %v4288 = vunpack.c.l.b16 %v2845
    %v4289 = vunpack.c.h.b16 %v2845
    %v4290 = vunpack.c.l.b16 %v2846
    %v4291 = vunpack.c.h.b16 %v2846
    %v4292 = vunpack.c.l.b16 %v2847
    %v4293 = vunpack.c.h.b16 %v2847
    %v4294 = vunpack.c.l.b16 %v2848
    %v4295 = vunpack.c.h.b16 %v2848
    %v4296 = vunpack.c.l.b16 %v2849
    %v4297 = vunpack.c.h.b16 %v2849
    %v4298 = vunpack.c.l.b16 %v2850
    %v4299 = vunpack.c.h.b16 %v2850
    %v4300 = vunpack.c.l.b16 %v2851
    %v4301 = vunpack.c.h.b16 %v2851
    %v4302 = vunpack.c.l.b16 %v2852
    %v4303 = vunpack.c.h.b16 %v2852
    %v4304 = vunpack.c.l.b16 %v2853
    %v4305 = vunpack.c.h.b16 %v2853
    %v4306 = vunpack.c.l.b16 %v2854
    %v4307 = vunpack.c.h.b16 %v2854
    %v4308 = vunpack.c.l.b16 %v2855
    %v4309 = vunpack.c.h.b16 %v2855
    %v4310 = vunpack.c.l.b16 %v2856
    %v4311 = vunpack.c.h.b16 %v2856
    %v4312 = vunpack.c.l.b16 %v2857
    %v4313 = vunpack.c.h.b16 %v2857
    %v4314 = vunpack.c.l.b16 %v2858
    %v4315 = vunpack.c.h.b16 %v2858
    %v4316 = vunpack.c.l.b16 %v2859
    %v4317 = vunpack.c.h.b16 %v2859
    %v4318 = vunpack.c.l.b16 %v2860
    %v4319 = vunpack.c.h.b16 %v2860
    %v4320 = vunpack.c.l.b16 %v2861
    %v4321 = vunpack.c.h.b16 %v2861
    %v4322 = vunpack.c.l.b16 %v2862
    %v4323 = vunpack.c.h.b16 %v2862
    %v4324 = vunpack.c.l.b16 %v2863
    %v4325 = vunpack.c.h.b16 %v2863
    %v4326 = vunpack.c.l.b16 %v2864
    %v4327 = vunpack.c.h.b16 %v2864
    %v4328 = vunpack.c.l.b16 %v2865
    %v4329 = vunpack.c.h.b16 %v2865
    %v4330 = vunpack.c.l.b16 %v2866
    %v4331 = vunpack.c.h.b16 %v2866
    %v4332 = vunpack.c.l.b16 %v2867
    %v4333 = vunpack.c.h.b16 %v2867
    %v4334 = vunpack.c.l.b16 %v2868
    %v4335 = vunpack.c.h.b16 %v2868
    %v4336 = vunpack.c.l.b16 %v2869
    %v4337 = vunpack.c.h.b16 %v2869
    %v4338 = vunpack.c.l.b16 %v2870
    %v4339 = vunpack.c.h.b16 %v2870
    %v4340 = vunpack.c.l.b16 %v2871
    %v4341 = vunpack.c.h.b16 %v2871
    %v4342 = vunpack.c.l.b16 %v2872
    %v4343 = vunpack.c.h.b16 %v2872
    %v4344 = vunpack.c.l.b16 %v2873
    %v4345 = vunpack.c.h.b16 %v2873
    %v4346 = vunpack.c.l.b16 %v2874
    %v4347 = vunpack.c.h.b16 %v2874
    %v4348 = vunpack.c.l.b16 %v2875
    %v4349 = vunpack.c.h.b16 %v2875
    %v4350 = vunpack.c.l.b16 %v2876
    %v4351 = vunpack.c.h.b16 %v2876
    %v4352 = vunpack.c.l.b16 %v2877
    %v4353 = vunpack.c.h.b16 %v2877
    %v4354 = vunpack.c.l.b16 %v2878
    %v4355 = vunpack.c.h.b16 %v2878
    %v4356 = vunpack.c.l.b16 %v2879
    %v4357 = vunpack.c.h.b16 %v2879
    %v4358 = vunpack.c.l.b16 %v2880
    %v4359 = vunpack.c.h.b16 %v2880
    %v4360 = vunpack.c.l.b16 %v2881
    %v4361 = vunpack.c.h.b16 %v2881
    %v4362 = vunpack.c.l.b16 %v2882
    %v4363 = vunpack.c.h.b16 %v2882
    %v4364 = vunpack.c.l.b16 %v2883
    %v4365 = vunpack.c.h.b16 %v2883
    %v4366 = vunpack.c.l.b16 %v2884
    %v4367 = vunpack.c.h.b16 %v2884
    %v4368 = vunpack.c.l.b16 %v2885
    %v4369 = vunpack.c.h.b16 %v2885
    %v4370 = vunpack.c.l.b16 %v2886
    %v4371 = vunpack.c.h.b16 %v2886
    %v4372 = vunpack.c.l.b16 %v2887
    %v4373 = vunpack.c.h.b16 %v2887
    %v4374 = vunpack.c.l.b16 %v2888
    %v4375 = vunpack.c.h.b16 %v2888
    %v4376 = vunpack.c.l.b16 %v2889
    %v4377 = vunpack.c.h.b16 %v2889
    %v4378 = vunpack.c.l.b16 %v2890
    %v4379 = vunpack.c.h.b16 %v2890
    %v4380 = vunpack.c.l.b16 %v2891
    %v4381 = vunpack.c.h.b16 %v2891
    %v4382 = vunpack.c.l.b16 %v2892
    %v4383 = vunpack.c.h.b16 %v2892
    %v4384 = vunpack.c.l.b16 %v2893
    %v4385 = vunpack.c.h.b16 %v2893
    %v4386 = vunpack.c.l.b16 %v2894
    %v4387 = vunpack.c.h.b16 %v2894
    %v4388 = vunpack.c.l.b16 %v2895
    %v4389 = vunpack.c.h.b16 %v2895
    %v4390 = vunpack.c.l.b16 %v2896
    %v4391 = vunpack.c.h.b16 %v2896
    %v4392 = vunpack.c.l.b16 %v2897
    %v4393 = vunpack.c.h.b16 %v2897
    %v4394 = vunpack.c.l.b16 %v2898
    %v4395 = vunpack.c.h.b16 %v2898
    %v4396 = vunpack.c.l.b16 %v2899
    %v4397 = vunpack.c.h.b16 %v2899
    %v4398 = vunpack.c.l.b16 %v2900
    %v4399 = vunpack.c.h.b16 %v2900
    %v4400 = vunpack.c.l.b16 %v2901
    %v4401 = vunpack.c.h.b16 %v2901
    %v4402 = vunpack.c.l.b16 %v2902
    %v4403 = vunpack.c.h.b16 %v2902
    %v4404 = vunpack.c.l.b16 %v2903
    %v4405 = vunpack.c.h.b16 %v2903
    %v4406 = vunpack.c.l.b16 %v2904
    %v4407 = vunpack.c.h.b16 %v2904
    %v4408 = vunpack.c.l.b16 %v2905
    %v4409 = vunpack.c.h.b16 %v2905
    %v4410 = vunpack.c.l.b16 %v2906
    %v4411 = vunpack.c.h.b16 %v2906
    %v4412 = vunpack.c.l.b16 %v2907
    %v4413 = vunpack.c.h.b16 %v2907
    %v4414 = vunpack.c.l.b16 %v2908
    %v4415 = vunpack.c.h.b16 %v2908
    %v4416 = vunpack.c.l.b16 %v2909
    %v4417 = vunpack.c.h.b16 %v2909
    %v4418 = vunpack.c.l.b16 %v2910
    %v4419 = vunpack.c.h.b16 %v2910
    %v4420 = vunpack.c.l.b16 %v2911
    %v4421 = vunpack.c.h.b16 %v2911
    %v4422 = vunpack.c.l.b16 %v2912
    %v4423 = vunpack.c.h.b16 %v2912
    %v4424 = vunpack.c.l.b16 %v2913
    %v4425 = vunpack.c.h.b16 %v2913
    %v4426 = vunpack.c.l.b16 %v2914
    %v4427 = vunpack.c.h.b16 %v2914
    %v4428 = vunpack.c.l.b16 %v2915
    %v4429 = vunpack.c.h.b16 %v2915
    %v4430 = vunpack.c.l.b16 %v2916
    %v4431 = vunpack.c.h.b16 %v2916
    %v4432 = vunpack.c.l.b16 %v2917
    %v4433 = vunpack.c.h.b16 %v2917
    %v4434 = vunpack.c.l.b16 %v2918
    %v4435 = vunpack.c.h.b16 %v2918
    %v4436 = vunpack.c.l.b16 %v2919
    %v4437 = vunpack.c.h.b16 %v2919
    %v4438 = vunpack.c.l.b16 %v2920
    %v4439 = vunpack.c.h.b16 %v2920
    %v4440 = vunpack.c.l.b16 %v2921
    %v4441 = vunpack.c.h.b16 %v2921
    %v4442 = vunpack.c.l.b16 %v2922
    %v4443 = vunpack.c.h.b16 %v2922
    %v4444 = vunpack.c.l.b16 %v2923
    %v4445 = vunpack.c.h.b16 %v2923
    %v4446 = vunpack.c.l.b16 %v2924
    %v4447 = vunpack.c.h.b16 %v2924
    %v4448 = vunpack.c.l.b16 %v2925
    %v4449 = vunpack.c.h.b16 %v2925
    %v4450 = vunpack.c.l.b16 %v2926
    %v4451 = vunpack.c.h.b16 %v2926
    %v4452 = vunpack.c.l.b16 %v2927
    %v4453 = vunpack.c.h.b16 %v2927
    %v4454 = vunpack.c.l.b16 %v2928
    %v4455 = vunpack.c.h.b16 %v2928
    %v4456 = vunpack.c.l.b16 %v2929
    %v4457 = vunpack.c.h.b16 %v2929
    %v4458 = vunpack.c.l.b16 %v2930
    %v4459 = vunpack.c.h.b16 %v2930
    %v4460 = vunpack.c.l.b16 %v2931
    %v4461 = vunpack.c.h.b16 %v2931
    %v4462 = vunpack.c.l.b16 %v2932
    %v4463 = vunpack.c.h.b16 %v2932
    %v4464 = vunpack.c.l.b16 %v2933
    %v4465 = vunpack.c.h.b16 %v2933
    %v4466 = vunpack.c.l.b16 %v2934
    %v4467 = vunpack.c.h.b16 %v2934
    %v4468 = vunpack.c.l.b16 %v2935
    %v4469 = vunpack.c.h.b16 %v2935
    %v4470 = vunpack.c.l.b16 %v2936
    %v4471 = vunpack.c.h.b16 %v2936
    %v4472 = vunpack.c.l.b16 %v2937
    %v4473 = vunpack.c.h.b16 %v2937
    %v4474 = vpack.c.b16 %v3458, %v3450
    %v4475 = vpack.c.b16 %v3459, %v3451
    %v4476 = vpack.c.b16 %v3460, %v3452
    %v4477 = vpack.c.b16 %v3461, %v3453
    %v4478 = vpack.c.b16 %v3462, %v3454
    %v4479 = vpack.c.b16 %v3463, %v3455
    %v4480 = vpack.c.b16 %v3464, %v3456
    %v4481 = vpack.c.b16 %v3465, %v3457
    %v4482 = vpack.c.b16 %v3474, %v3466
    %v4483 = vpack.c.b16 %v3475, %v3467
    %v4484 = vpack.c.b16 %v3476, %v3468
    %v4485 = vpack.c.b16 %v3477, %v3469
    %v4486 = vpack.c.b16 %v3478, %v3470
    %v4487 = vpack.c.b16 %v3479, %v3471
    %v4488 = vpack.c.b16 %v3480, %v3472
    %v4489 = vpack.c.b16 %v3481, %v3473
    %v4490 = vpack.c.b16 %v3490, %v3482
    %v4491 = vpack.c.b16 %v3491, %v3483
    %v4492 = vpack.c.b16 %v3492, %v3484
    %v4493 = vpack.c.b16 %v3493, %v3485
    %v4494 = vpack.c.b16 %v3494, %v3486
    %v4495 = vpack.c.b16 %v3495, %v3487
    %v4496 = vpack.c.b16 %v3496, %v3488
    %v4497 = vpack.c.b16 %v3497, %v3489
    %v4498 = vpack.c.b16 %v3506, %v3498
    %v4499 = vpack.c.b16 %v3507, %v3499
    %v4500 = vpack.c.b16 %v3508, %v3500
    %v4501 = vpack.c.b16 %v3509, %v3501
    %v4502 = vpack.c.b16 %v3510, %v3502
    %v4503 = vpack.c.b16 %v3511, %v3503
    %v4504 = vpack.c.b16 %v3512, %v3504
    %v4505 = vpack.c.b16 %v3513, %v3505
    %v4506 = vpack.c.b16 %v3522, %v3514
    %v4507 = vpack.c.b16 %v3523, %v3515
    %v4508 = vpack.c.b16 %v3524, %v3516
    %v4509 = vpack.c.b16 %v3525, %v3517
    %v4510 = vpack.c.b16 %v3526, %v3518
    %v4511 = vpack.c.b16 %v3527, %v3519
    %v4512 = vpack.c.b16 %v3528, %v3520
    %v4513 = vpack.c.b16 %v3529, %v3521
    %v4514 = vpack.c.b16 %v3538, %v3530
    %v4515 = vpack.c.b16 %v3539, %v3531
    %v4516 = vpack.c.b16 %v3540, %v3532
    %v4517 = vpack.c.b16 %v3541, %v3533
    %v4518 = vpack.c.b16 %v3542, %v3534
    %v4519 = vpack.c.b16 %v3543, %v3535
    %v4520 = vpack.c.b16 %v3544, %v3536
    %v4521 = vpack.c.b16 %v3545, %v3537
    %v4522 = vpack.c.b16 %v3554, %v3546
    %v4523 = vpack.c.b16 %v3555, %v3547
    %v4524 = vpack.c.b16 %v3556, %v3548
    %v4525 = vpack.c.b16 %v3557, %v3549
    %v4526 = vpack.c.b16 %v3558, %v3550
    %v4527 = vpack.c.b16 %v3559, %v3551
    %v4528 = vpack.c.b16 %v3560, %v3552
    %v4529 = vpack.c.b16 %v3561, %v3553
    %v4530 = vpack.c.b16 %v3570, %v3562
    %v4531 = vpack.c.b16 %v3571, %v3563
    %v4532 = vpack.c.b16 %v3572, %v3564
    %v4533 = vpack.c.b16 %v3573, %v3565
    %v4534 = vpack.c.b16 %v3574, %v3566
    %v4535 = vpack.c.b16 %v3575, %v3567
    %v4536 = vpack.c.b16 %v3576, %v3568
    %v4537 = vpack.c.b16 %v3577, %v3569
    %v4538 = vpack.c.b16 %v3586, %v3578
    %v4539 = vpack.c.b16 %v3587, %v3579
    %v4540 = vpack.c.b16 %v3588, %v3580
    %v4541 = vpack.c.b16 %v3589, %v3581
    %v4542 = vpack.c.b16 %v3590, %v3582
    %v4543 = vpack.c.b16 %v3591, %v3583
    %v4544 = vpack.c.b16 %v3592, %v3584
    %v4545 = vpack.c.b16 %v3593, %v3585
    %v4546 = vpack.c.b16 %v3602, %v3594
    %v4547 = vpack.c.b16 %v3603, %v3595
    %v4548 = vpack.c.b16 %v3604, %v3596
    %v4549 = vpack.c.b16 %v3605, %v3597
    %v4550 = vpack.c.b16 %v3606, %v3598
    %v4551 = vpack.c.b16 %v3607, %v3599
    %v4552 = vpack.c.b16 %v3608, %v3600
    %v4553 = vpack.c.b16 %v3609, %v3601
    %v4554 = vpack.c.b16 %v3618, %v3610
    %v4555 = vpack.c.b16 %v3619, %v3611
    %v4556 = vpack.c.b16 %v3620, %v3612
    %v4557 = vpack.c.b16 %v3621, %v3613
    %v4558 = vpack.c.b16 %v3622, %v3614
    %v4559 = vpack.c.b16 %v3623, %v3615
    %v4560 = vpack.c.b16 %v3624, %v3616
    %v4561 = vpack.c.b16 %v3625, %v3617
    %v4562 = vpack.c.b16 %v3634, %v3626
    %v4563 = vpack.c.b16 %v3635, %v3627
    %v4564 = vpack.c.b16 %v3636, %v3628
    %v4565 = vpack.c.b16 %v3637, %v3629
    %v4566 = vpack.c.b16 %v3638, %v3630
    %v4567 = vpack.c.b16 %v3639, %v3631
    %v4568 = vpack.c.b16 %v3640, %v3632
    %v4569 = vpack.c.b16 %v3641, %v3633
    %v4570 = vpack.c.b16 %v3650, %v3642
    %v4571 = vpack.c.b16 %v3651, %v3643
    %v4572 = vpack.c.b16 %v3652, %v3644
    %v4573 = vpack.c.b16 %v3653, %v3645
    %v4574 = vpack.c.b16 %v3654, %v3646
    %v4575 = vpack.c.b16 %v3655, %v3647
    %v4576 = vpack.c.b16 %v3656, %v3648
    %v4577 = vpack.c.b16 %v3657, %v3649
    %v4578 = vpack.c.b16 %v3666, %v3658
    %v4579 = vpack.c.b16 %v3667, %v3659
    %v4580 = vpack.c.b16 %v3668, %v3660
    %v4581 = vpack.c.b16 %v3669, %v3661
    %v4582 = vpack.c.b16 %v3670, %v3662
    %v4583 = vpack.c.b16 %v3671, %v3663
    %v4584 = vpack.c.b16 %v3672, %v3664
    %v4585 = vpack.c.b16 %v3673, %v3665
    %v4586 = vpack.c.b16 %v3682, %v3674
    %v4587 = vpack.c.b16 %v3683, %v3675
    %v4588 = vpack.c.b16 %v3684, %v3676
    %v4589 = vpack.c.b16 %v3685, %v3677
    %v4590 = vpack.c.b16 %v3686, %v3678
    %v4591 = vpack.c.b16 %v3687, %v3679
    %v4592 = vpack.c.b16 %v3688, %v3680
    %v4593 = vpack.c.b16 %v3689, %v3681
    %v4594 = vpack.c.b16 %v3698, %v3690
    %v4595 = vpack.c.b16 %v3699, %v3691
    %v4596 = vpack.c.b16 %v3700, %v3692
    %v4597 = vpack.c.b16 %v3701, %v3693
    %v4598 = vpack.c.b16 %v3702, %v3694
    %v4599 = vpack.c.b16 %v3703, %v3695
    %v4600 = vpack.c.b16 %v3704, %v3696
    %v4601 = vpack.c.b16 %v3705, %v3697
    %v4602 = vpack.c.b16 %v3714, %v3706
    %v4603 = vpack.c.b16 %v3715, %v3707
    %v4604 = vpack.c.b16 %v3716, %v3708
    %v4605 = vpack.c.b16 %v3717, %v3709
    %v4606 = vpack.c.b16 %v3718, %v3710
    %v4607 = vpack.c.b16 %v3719, %v3711
    %v4608 = vpack.c.b16 %v3720, %v3712
    %v4609 = vpack.c.b16 %v3721, %v3713
    %v4610 = vpack.c.b16 %v3730, %v3722
    %v4611 = vpack.c.b16 %v3731, %v3723
    %v4612 = vpack.c.b16 %v3732, %v3724
    %v4613 = vpack.c.b16 %v3733, %v3725
    %v4614 = vpack.c.b16 %v3734, %v3726
    %v4615 = vpack.c.b16 %v3735, %v3727
    %v4616 = vpack.c.b16 %v3736, %v3728
    %v4617 = vpack.c.b16 %v3737, %v3729
    %v4618 = vpack.c.b16 %v3746, %v3738
    %v4619 = vpack.c.b16 %v3747, %v3739
    %v4620 = vpack.c.b16 %v3748, %v3740
    %v4621 = vpack.c.b16 %v3749, %v3741
    %v4622 = vpack.c.b16 %v3750, %v3742
    %v4623 = vpack.c.b16 %v3751, %v3743
    %v4624 = vpack.c.b16 %v3752, %v3744
    %v4625 = vpack.c.b16 %v3753, %v3745
    %v4626 = vpack.c.b16 %v3762, %v3754
    %v4627 = vpack.c.b16 %v3763, %v3755
    %v4628 = vpack.c.b16 %v3764, %v3756
    %v4629 = vpack.c.b16 %v3765, %v3757
    %v4630 = vpack.c.b16 %v3766, %v3758
    %v4631 = vpack.c.b16 %v3767, %v3759
    %v4632 = vpack.c.b16 %v3768, %v3760
    %v4633 = vpack.c.b16 %v3769, %v3761
    %v4634 = vpack.c.b16 %v3778, %v3770
    %v4635 = vpack.c.b16 %v3779, %v3771
    %v4636 = vpack.c.b16 %v3780, %v3772
    %v4637 = vpack.c.b16 %v3781, %v3773
    %v4638 = vpack.c.b16 %v3782, %v3774
    %v4639 = vpack.c.b16 %v3783, %v3775
    %v4640 = vpack.c.b16 %v3784, %v3776
    %v4641 = vpack.c.b16 %v3785, %v3777
    %v4642 = vpack.c.b16 %v3794, %v3786
    %v4643 = vpack.c.b16 %v3795, %v3787
    %v4644 = vpack.c.b16 %v3796, %v3788
    %v4645 = vpack.c.b16 %v3797, %v3789
    %v4646 = vpack.c.b16 %v3798, %v3790
    %v4647 = vpack.c.b16 %v3799, %v3791
    %v4648 = vpack.c.b16 %v3800, %v3792
    %v4649 = vpack.c.b16 %v3801, %v3793
    %v4650 = vpack.c.b16 %v3810, %v3802
    %v4651 = vpack.c.b16 %v3811, %v3803
    %v4652 = vpack.c.b16 %v3812, %v3804
    %v4653 = vpack.c.b16 %v3813, %v3805
    %v4654 = vpack.c.b16 %v3814, %v3806
    %v4655 = vpack.c.b16 %v3815, %v3807
    %v4656 = vpack.c.b16 %v3816, %v3808
    %v4657 = vpack.c.b16 %v3817, %v3809
    %v4658 = vpack.c.b16 %v3826, %v3818
    %v4659 = vpack.c.b16 %v3827, %v3819
    %v4660 = vpack.c.b16 %v3828, %v3820
    %v4661 = vpack.c.b16 %v3829, %v3821
    %v4662 = vpack.c.b16 %v3830, %v3822
    %v4663 = vpack.c.b16 %v3831, %v3823
    %v4664 = vpack.c.b16 %v3832, %v3824
    %v4665 = vpack.c.b16 %v3833, %v3825
    %v4666 = vpack.c.b16 %v3842, %v3834
    %v4667 = vpack.c.b16 %v3843, %v3835
    %v4668 = vpack.c.b16 %v3844, %v3836
    %v4669 = vpack.c.b16 %v3845, %v3837
    %v4670 = vpack.c.b16 %v3846, %v3838
    %v4671 = vpack.c.b16 %v3847, %v3839
    %v4672 = vpack.c.b16 %v3848, %v3840
    %v4673 = vpack.c.b16 %v3849, %v3841
    %v4674 = vpack.c.b16 %v3858, %v3850
    %v4675 = vpack.c.b16 %v3859, %v3851
    %v4676 = vpack.c.b16 %v3860, %v3852
    %v4677 = vpack.c.b16 %v3861, %v3853
    %v4678 = vpack.c.b16 %v3862, %v3854
    %v4679 = vpack.c.b16 %v3863, %v3855
    %v4680 = vpack.c.b16 %v3864, %v3856
    %v4681 = vpack.c.b16 %v3865, %v3857
    %v4682 = vpack.c.b16 %v3874, %v3866
    %v4683 = vpack.c.b16 %v3875, %v3867
    %v4684 = vpack.c.b16 %v3876, %v3868
    %v4685 = vpack.c.b16 %v3877, %v3869
    %v4686 = vpack.c.b16 %v3878, %v3870
    %v4687 = vpack.c.b16 %v3879, %v3871
    %v4688 = vpack.c.b16 %v3880, %v3872
    %v4689 = vpack.c.b16 %v3881, %v3873
    %v4690 = vpack.c.b16 %v3890, %v3882
    %v4691 = vpack.c.b16 %v3891, %v3883
    %v4692 = vpack.c.b16 %v3892, %v3884
    %v4693 = vpack.c.b16 %v3893, %v3885
    %v4694 = vpack.c.b16 %v3894, %v3886
    %v4695 = vpack.c.b16 %v3895, %v3887
    %v4696 = vpack.c.b16 %v3896, %v3888
    %v4697 = vpack.c.b16 %v3897, %v3889
    %v4698 = vpack.c.b16 %v3906, %v3898
    %v4699 = vpack.c.b16 %v3907, %v3899
    %v4700 = vpack.c.b16 %v3908, %v3900
    %v4701 = vpack.c.b16 %v3909, %v3901
    %v4702 = vpack.c.b16 %v3910, %v3902
    %v4703 = vpack.c.b16 %v3911, %v3903
    %v4704 = vpack.c.b16 %v3912, %v3904
    %v4705 = vpack.c.b16 %v3913, %v3905
    %v4706 = vpack.c.b16 %v3922, %v3914
    %v4707 = vpack.c.b16 %v3923, %v3915
    %v4708 = vpack.c.b16 %v3924, %v3916
    %v4709 = vpack.c.b16 %v3925, %v3917
    %v4710 = vpack.c.b16 %v3926, %v3918
    %v4711 = vpack.c.b16 %v3927, %v3919
    %v4712 = vpack.c.b16 %v3928, %v3920
    %v4713 = vpack.c.b16 %v3929, %v3921
    %v4714 = vpack.c.b16 %v3938, %v3930
    %v4715 = vpack.c.b16 %v3939, %v3931
    %v4716 = vpack.c.b16 %v3940, %v3932
    %v4717 = vpack.c.b16 %v3941, %v3933
    %v4718 = vpack.c.b16 %v3942, %v3934
    %v4719 = vpack.c.b16 %v3943, %v3935
    %v4720 = vpack.c.b16 %v3944, %v3936
    %v4721 = vpack.c.b16 %v3945, %v3937
    %v4722 = vpack.c.b16 %v3954, %v3946
    %v4723 = vpack.c.b16 %v3955, %v3947
    %v4724 = vpack.c.b16 %v3956, %v3948
    %v4725 = vpack.c.b16 %v3957, %v3949
    %v4726 = vpack.c.b16 %v3958, %v3950
    %v4727 = vpack.c.b16 %v3959, %v3951
    %v4728 = vpack.c.b16 %v3960, %v3952
    %v4729 = vpack.c.b16 %v3961, %v3953
    %v4730 = vpack.c.b16 %v3970, %v3962
    %v4731 = vpack.c.b16 %v3971, %v3963
    %v4732 = vpack.c.b16 %v3972, %v3964
    %v4733 = vpack.c.b16 %v3973, %v3965
    %v4734 = vpack.c.b16 %v3974, %v3966
    %v4735 = vpack.c.b16 %v3975, %v3967
    %v4736 = vpack.c.b16 %v3976, %v3968
    %v4737 = vpack.c.b16 %v3977, %v3969
    %v4738 = vpack.c.b16 %v3986, %v3978
    %v4739 = vpack.c.b16 %v3987, %v3979
    %v4740 = vpack.c.b16 %v3988, %v3980
    %v4741 = vpack.c.b16 %v3989, %v3981
    %v4742 = vpack.c.b16 %v3990, %v3982
    %v4743 = vpack.c.b16 %v3991, %v3983
    %v4744 = vpack.c.b16 %v3992, %v3984
    %v4745 = vpack.c.b16 %v3993, %v3985
    %v4746 = vpack.c.b16 %v4002, %v3994
    %v4747 = vpack.c.b16 %v4003, %v3995
    %v4748 = vpack.c.b16 %v4004, %v3996
    %v4749 = vpack.c.b16 %v4005, %v3997
    %v4750 = vpack.c.b16 %v4006, %v3998
    %v4751 = vpack.c.b16 %v4007, %v3999
    %v4752 = vpack.c.b16 %v4008, %v4000
    %v4753 = vpack.c.b16 %v4009, %v4001
    %v4754 = vpack.c.b16 %v4018, %v4010
    %v4755 = vpack.c.b16 %v4019, %v4011
    %v4756 = vpack.c.b16 %v4020, %v4012
    %v4757 = vpack.c.b16 %v4021, %v4013
    %v4758 = vpack.c.b16 %v4022, %v4014
    %v4759 = vpack.c.b16 %v4023, %v4015
    %v4760 = vpack.c.b16 %v4024, %v4016
    %v4761 = vpack.c.b16 %v4025, %v4017
    %v4762 = vpack.c.b16 %v4034, %v4026
    %v4763 = vpack.c.b16 %v4035, %v4027
    %v4764 = vpack.c.b16 %v4036, %v4028
    %v4765 = vpack.c.b16 %v4037, %v4029
    %v4766 = vpack.c.b16 %v4038, %v4030
    %v4767 = vpack.c.b16 %v4039, %v4031
    %v4768 = vpack.c.b16 %v4040, %v4032
    %v4769 = vpack.c.b16 %v4041, %v4033
    %v4770 = vpack.c.b16 %v4050, %v4042
    %v4771 = vpack.c.b16 %v4051, %v4043
    %v4772 = vpack.c.b16 %v4052, %v4044
    %v4773 = vpack.c.b16 %v4053, %v4045
    %v4774 = vpack.c.b16 %v4054, %v4046
    %v4775 = vpack.c.b16 %v4055, %v4047
    %v4776 = vpack.c.b16 %v4056, %v4048
    %v4777 = vpack.c.b16 %v4057, %v4049
    %v4778 = vpack.c.b16 %v4066, %v4058
    %v4779 = vpack.c.b16 %v4067, %v4059
    %v4780 = vpack.c.b16 %v4068, %v4060
    %v4781 = vpack.c.b16 %v4069, %v4061
    %v4782 = vpack.c.b16 %v4070, %v4062
    %v4783 = vpack.c.b16 %v4071, %v4063
    %v4784 = vpack.c.b16 %v4072, %v4064
    %v4785 = vpack.c.b16 %v4073, %v4065
    %v4786 = vpack.c.b16 %v4082, %v4074
    %v4787 = vpack.c.b16 %v4083, %v4075
    %v4788 = vpack.c.b16 %v4084, %v4076
    %v4789 = vpack.c.b16 %v4085, %v4077
    %v4790 = vpack.c.b16 %v4086, %v4078
    %v4791 = vpack.c.b16 %v4087, %v4079
    %v4792 = vpack.c.b16 %v4088, %v4080
    %v4793 = vpack.c.b16 %v4089, %v4081
    %v4794 = vpack.c.b16 %v4098, %v4090
    %v4795 = vpack.c.b16 %v4099, %v4091
    %v4796 = vpack.c.b16 %v4100, %v4092
    %v4797 = vpack.c.b16 %v4101, %v4093
    %v4798 = vpack.c.b16 %v4102, %v4094
    %v4799 = vpack.c.b16 %v4103, %v4095
    %v4800 = vpack.c.b16 %v4104, %v4096
    %v4801 = vpack.c.b16 %v4105, %v4097
    %v4802 = vpack.c.b16 %v4114, %v4106
    %v4803 = vpack.c.b16 %v4115, %v4107
    %v4804 = vpack.c.b16 %v4116, %v4108
    %v4805 = vpack.c.b16 %v4117, %v4109
    %v4806 = vpack.c.b16 %v4118, %v4110
    %v4807 = vpack.c.b16 %v4119, %v4111
    %v4808 = vpack.c.b16 %v4120, %v4112
    %v4809 = vpack.c.b16 %v4121, %v4113
    %v4810 = vpack.c.b16 %v4130, %v4122
    %v4811 = vpack.c.b16 %v4131, %v4123
    %v4812 = vpack.c.b16 %v4132, %v4124
    %v4813 = vpack.c.b16 %v4133, %v4125
    %v4814 = vpack.c.b16 %v4134, %v4126
    %v4815 = vpack.c.b16 %v4135, %v4127
    %v4816 = vpack.c.b16 %v4136, %v4128
    %v4817 = vpack.c.b16 %v4137, %v4129
    %v4818 = vpack.c.b16 %v4146, %v4138
    %v4819 = vpack.c.b16 %v4147, %v4139
    %v4820 = vpack.c.b16 %v4148, %v4140
    %v4821 = vpack.c.b16 %v4149, %v4141
    %v4822 = vpack.c.b16 %v4150, %v4142
    %v4823 = vpack.c.b16 %v4151, %v4143
    %v4824 = vpack.c.b16 %v4152, %v4144
    %v4825 = vpack.c.b16 %v4153, %v4145
    %v4826 = vpack.c.b16 %v4162, %v4154
    %v4827 = vpack.c.b16 %v4163, %v4155
    %v4828 = vpack.c.b16 %v4164, %v4156
    %v4829 = vpack.c.b16 %v4165, %v4157
    %v4830 = vpack.c.b16 %v4166, %v4158
    %v4831 = vpack.c.b16 %v4167, %v4159
    %v4832 = vpack.c.b16 %v4168, %v4160
    %v4833 = vpack.c.b16 %v4169, %v4161
    %v4834 = vpack.c.b16 %v4178, %v4170
    %v4835 = vpack.c.b16 %v4179, %v4171
    %v4836 = vpack.c.b16 %v4180, %v4172
    %v4837 = vpack.c.b16 %v4181, %v4173
    %v4838 = vpack.c.b16 %v4182, %v4174
    %v4839 = vpack.c.b16 %v4183, %v4175
    %v4840 = vpack.c.b16 %v4184, %v4176
    %v4841 = vpack.c.b16 %v4185, %v4177
    %v4842 = vpack.c.b16 %v4194, %v4186
    %v4843 = vpack.c.b16 %v4195, %v4187
    %v4844 = vpack.c.b16 %v4196, %v4188
    %v4845 = vpack.c.b16 %v4197, %v4189
    %v4846 = vpack.c.b16 %v4198, %v4190
    %v4847 = vpack.c.b16 %v4199, %v4191
    %v4848 = vpack.c.b16 %v4200, %v4192
    %v4849 = vpack.c.b16 %v4201, %v4193
    %v4850 = vpack.c.b16 %v4210, %v4202
    %v4851 = vpack.c.b16 %v4211, %v4203
    %v4852 = vpack.c.b16 %v4212, %v4204
    %v4853 = vpack.c.b16 %v4213, %v4205
    %v4854 = vpack.c.b16 %v4214, %v4206
    %v4855 = vpack.c.b16 %v4215, %v4207
    %v4856 = vpack.c.b16 %v4216, %v4208
    %v4857 = vpack.c.b16 %v4217, %v4209
    %v4858 = vpack.c.b16 %v4226, %v4218
    %v4859 = vpack.c.b16 %v4227, %v4219
    %v4860 = vpack.c.b16 %v4228, %v4220
    %v4861 = vpack.c.b16 %v4229, %v4221
    %v4862 = vpack.c.b16 %v4230, %v4222
    %v4863 = vpack.c.b16 %v4231, %v4223
    %v4864 = vpack.c.b16 %v4232, %v4224
    %v4865 = vpack.c.b16 %v4233, %v4225
    %v4866 = vpack.c.b16 %v4242, %v4234
    %v4867 = vpack.c.b16 %v4243, %v4235
    %v4868 = vpack.c.b16 %v4244, %v4236
    %v4869 = vpack.c.b16 %v4245, %v4237
    %v4870 = vpack.c.b16 %v4246, %v4238
    %v4871 = vpack.c.b16 %v4247, %v4239
    %v4872 = vpack.c.b16 %v4248, %v4240
    %v4873 = vpack.c.b16 %v4249, %v4241
    %v4874 = vpack.c.b16 %v4258, %v4250
    %v4875 = vpack.c.b16 %v4259, %v4251
    %v4876 = vpack.c.b16 %v4260, %v4252
    %v4877 = vpack.c.b16 %v4261, %v4253
    %v4878 = vpack.c.b16 %v4262, %v4254
    %v4879 = vpack.c.b16 %v4263, %v4255
    %v4880 = vpack.c.b16 %v4264, %v4256
    %v4881 = vpack.c.b16 %v4265, %v4257
    %v4882 = vpack.c.b16 %v4274, %v4266
    %v4883 = vpack.c.b16 %v4275, %v4267
    %v4884 = vpack.c.b16 %v4276, %v4268
    %v4885 = vpack.c.b16 %v4277, %v4269
    %v4886 = vpack.c.b16 %v4278, %v4270
    %v4887 = vpack.c.b16 %v4279, %v4271
    %v4888 = vpack.c.b16 %v4280, %v4272
    %v4889 = vpack.c.b16 %v4281, %v4273
    %v4890 = vpack.c.b16 %v4290, %v4282
    %v4891 = vpack.c.b16 %v4291, %v4283
    %v4892 = vpack.c.b16 %v4292, %v4284
    %v4893 = vpack.c.b16 %v4293, %v4285
    %v4894 = vpack.c.b16 %v4294, %v4286
    %v4895 = vpack.c.b16 %v4295, %v4287
    %v4896 = vpack.c.b16 %v4296, %v4288
    %v4897 = vpack.c.b16 %v4297, %v4289
    %v4898 = vpack.c.b16 %v4306, %v4298
    %v4899 = vpack.c.b16 %v4307, %v4299
    %v4900 = vpack.c.b16 %v4308, %v4300
    %v4901 = vpack.c.b16 %v4309, %v4301
    %v4902 = vpack.c.b16 %v4310, %v4302
    %v4903 = vpack.c.b16 %v4311, %v4303
    %v4904 = vpack.c.b16 %v4312, %v4304
    %v4905 = vpack.c.b16 %v4313, %v4305
    %v4906 = vpack.c.b16 %v4322, %v4314
    %v4907 = vpack.c.b16 %v4323, %v4315
    %v4908 = vpack.c.b16 %v4324, %v4316
    %v4909 = vpack.c.b16 %v4325, %v4317
    %v4910 = vpack.c.b16 %v4326, %v4318
    %v4911 = vpack.c.b16 %v4327, %v4319
    %v4912 = vpack.c.b16 %v4328, %v4320
    %v4913 = vpack.c.b16 %v4329, %v4321
    %v4914 = vpack.c.b16 %v4338, %v4330
    %v4915 = vpack.c.b16 %v4339, %v4331
    %v4916 = vpack.c.b16 %v4340, %v4332
    %v4917 = vpack.c.b16 %v4341, %v4333
    %v4918 = vpack.c.b16 %v4342, %v4334
    %v4919 = vpack.c.b16 %v4343, %v4335
    %v4920 = vpack.c.b16 %v4344, %v4336
    %v4921 = vpack.c.b16 %v4345, %v4337
    %v4922 = vpack.c.b16 %v4354, %v4346
    %v4923 = vpack.c.b16 %v4355, %v4347
    %v4924 = vpack.c.b16 %v4356, %v4348
    %v4925 = vpack.c.b16 %v4357, %v4349
    %v4926 = vpack.c.b16 %v4358, %v4350
    %v4927 = vpack.c.b16 %v4359, %v4351
    %v4928 = vpack.c.b16 %v4360, %v4352
    %v4929 = vpack.c.b16 %v4361, %v4353
    %v4930 = vpack.c.b16 %v4370, %v4362
    %v4931 = vpack.c.b16 %v4371, %v4363
    %v4932 = vpack.c.b16 %v4372, %v4364
    %v4933 = vpack.c.b16 %v4373, %v4365
    %v4934 = vpack.c.b16 %v4374, %v4366
    %v4935 = vpack.c.b16 %v4375, %v4367
    %v4936 = vpack.c.b16 %v4376, %v4368
    %v4937 = vpack.c.b16 %v4377, %v4369
    %v4938 = vpack.c.b16 %v4386, %v4378
    %v4939 = vpack.c.b16 %v4387, %v4379
    %v4940 = vpack.c.b16 %v4388, %v4380
    %v4941 = vpack.c.b16 %v4389, %v4381
    %v4942 = vpack.c.b16 %v4390, %v4382
    %v4943 = vpack.c.b16 %v4391, %v4383
    %v4944 = vpack.c.b16 %v4392, %v4384
    %v4945 = vpack.c.b16 %v4393, %v4385
    %v4946 = vpack.c.b16 %v4402, %v4394
    %v4947 = vpack.c.b16 %v4403, %v4395
    %v4948 = vpack.c.b16 %v4404, %v4396
    %v4949 = vpack.c.b16 %v4405, %v4397
    %v4950 = vpack.c.b16 %v4406, %v4398
    %v4951 = vpack.c.b16 %v4407, %v4399
    %v4952 = vpack.c.b16 %v4408, %v4400
    %v4953 = vpack.c.b16 %v4409, %v4401
    %v4954 = vpack.c.b16 %v4418, %v4410
    %v4955 = vpack.c.b16 %v4419, %v4411
    %v4956 = vpack.c.b16 %v4420, %v4412
    %v4957 = vpack.c.b16 %v4421, %v4413
    %v4958 = vpack.c.b16 %v4422, %v4414
    %v4959 = vpack.c.b16 %v4423, %v4415
    %v4960 = vpack.c.b16 %v4424, %v4416
    %v4961 = vpack.c.b16 %v4425, %v4417
    %v4962 = vpack.c.b16 %v4434, %v4426
    %v4963 = vpack.c.b16 %v4435, %v4427
    %v4964 = vpack.c.b16 %v4436, %v4428
    %v4965 = vpack.c.b16 %v4437, %v4429
    %v4966 = vpack.c.b16 %v4438, %v4430
    %v4967 = vpack.c.b16 %v4439, %v4431
    %v4968 = vpack.c.b16 %v4440, %v4432
    %v4969 = vpack.c.b16 %v4441, %v4433
    %v4970 = vpack.c.b16 %v4450, %v4442
    %v4971 = vpack.c.b16 %v4451, %v4443
    %v4972 = vpack.c.b16 %v4452, %v4444
    %v4973 = vpack.c.b16 %v4453, %v4445
    %v4974 = vpack.c.b16 %v4454, %v4446
    %v4975 = vpack.c.b16 %v4455, %v4447
    %v4976 = vpack.c.b16 %v4456, %v4448
    %v4977 = vpack.c.b16 %v4457, %v4449
    %v4978 = vpack.c.b16 %v4466, %v4458
    %v4979 = vpack.c.b16 %v4467, %v4459
    %v4980 = vpack.c.b16 %v4468, %v4460
    %v4981 = vpack.c.b16 %v4469, %v4461
    %v4982 = vpack.c.b16 %v4470, %v4462
    %v4983 = vpack.c.b16 %v4471, %v4463
    %v4984 = vpack.c.b16 %v4472, %v4464
    %v4985 = vpack.c.b16 %v4473, %v4465
    %5498 = vmatprep.subr.bf16.mxu0 %v4531
    %5499 = vmatpush1.bf16.msra.mxu0 %v4530
    %5500 = vmatprep.subr.bf16.mxu0 %v4523
    %5501 = vmatpush1.bf16.msra.mxu0 %v4522
    %5502 = vmatprep.subr.bf16.mxu0 %v4515
    %5503 = vmatpush1.bf16.msra.mxu0 %v4514
    %5504 = vmatprep.subr.bf16.mxu0 %v4507
    %5505 = vmatpush1.bf16.msra.mxu0 %v4506
    %5506 = vmatprep.subr.bf16.mxu0 %v4499
    %5507 = vmatpush1.bf16.msra.mxu0 %v4498
    %5508 = vmatprep.subr.bf16.mxu0 %v4491
    %5509 = vmatpush1.bf16.msra.mxu0 %v4490
    %5510 = vmatprep.subr.bf16.mxu0 %v4483
    %5511 = vmatpush1.bf16.msra.mxu0 %v4482
    %5512 = vmatprep.subr.bf16.mxu0 %v4475
    %5513 = vmatpush1.bf16.msra.mxu0 %v4474
    %5514 = vmatprep.subr.bf16.mxu0 %v4595
    %5515 = vmatpush2.bf16.msra.mxu0 %v4594
    %5516 = vmatprep.subr.bf16.mxu0 %v4587
    %5517 = vmatpush2.bf16.msra.mxu0 %v4586
    %5518 = vmatprep.subr.bf16.mxu0 %v4579
    %5519 = vmatpush2.bf16.msra.mxu0 %v4578
    %5520 = vmatprep.subr.bf16.mxu0 %v4571
    %5521 = vmatpush2.bf16.msra.mxu0 %v4570
    %5522 = vmatprep.subr.bf16.mxu0 %v4563
    %5523 = vmatpush2.bf16.msra.mxu0 %v4562
    %5524 = vmatprep.subr.bf16.mxu0 %v4555
    %5525 = vmatpush2.bf16.msra.mxu0 %v4554
    %5526 = vmatprep.subr.bf16.mxu0 %v4547
    %5527 = vmatpush2.bf16.msra.mxu0 %v4546
    %5528 = vmatprep.subr.bf16.mxu0 %v4539
    %5529 = vmatpush2.bf16.msra.mxu0 %v4538
    %5530 = vmatprep.mubr.bf16.mxu0 %v2419
    %5531 = vmatmul.mubr.bf16.gmra.mxu0 %v2418
    %v5532 = vpop.f32.mrf.mxu0
    %v5533 = vadd.f32 0.0, %v5532
    %v5534 = vpop.f32.mrf.mxu0
    %v5535 = vadd.f32 0.0, %v5534
    %v5536 = vpop.f32.mrf.mxu0
    %v5537 = vpop.f32.mrf.mxu0
    %5538 = vdwg.mxu0
    %5539 = vmatprep.subr.bf16.mxu0 %v4659
    %5540 = vmatpush1.bf16.msra.mxu0 %v4658
    %5541 = vmatprep.subr.bf16.mxu0 %v4651
    %5542 = vmatpush1.bf16.msra.mxu0 %v4650
    %5543 = vmatprep.subr.bf16.mxu0 %v4643
    %5544 = vmatpush1.bf16.msra.mxu0 %v4642
    %5545 = vmatprep.subr.bf16.mxu0 %v4635
    %5546 = vmatpush1.bf16.msra.mxu0 %v4634
    %5547 = vmatprep.subr.bf16.mxu0 %v4627
    %5548 = vmatpush1.bf16.msra.mxu0 %v4626
    %5549 = vmatprep.subr.bf16.mxu0 %v4619
    %5550 = vmatpush1.bf16.msra.mxu0 %v4618
    %5551 = vmatprep.subr.bf16.mxu0 %v4611
    %5552 = vmatpush1.bf16.msra.mxu0 %v4610
    %5553 = vmatprep.subr.bf16.mxu0 %v4603
    %5554 = vmatpush1.bf16.msra.mxu0 %v4602
    %5555 = vmatprep.subr.bf16.mxu0 %v4723
    %5556 = vmatpush2.bf16.msra.mxu0 %v4722
    %5557 = vmatprep.subr.bf16.mxu0 %v4715
    %5558 = vmatpush2.bf16.msra.mxu0 %v4714
    %5559 = vmatprep.subr.bf16.mxu0 %v4707
    %5560 = vmatpush2.bf16.msra.mxu0 %v4706
    %5561 = vmatprep.subr.bf16.mxu0 %v4699
    %5562 = vmatpush2.bf16.msra.mxu0 %v4698
    %5563 = vmatprep.subr.bf16.mxu0 %v4691
    %5564 = vmatpush2.bf16.msra.mxu0 %v4690
    %5565 = vmatprep.subr.bf16.mxu0 %v4683
    %5566 = vmatpush2.bf16.msra.mxu0 %v4682
    %5567 = vmatprep.subr.bf16.mxu0 %v4675
    %5568 = vmatpush2.bf16.msra.mxu0 %v4674
    %5569 = vmatprep.subr.bf16.mxu0 %v4667
    %5570 = vmatpush2.bf16.msra.mxu0 %v4666
    %5571 = vmatprep.mubr.bf16.mxu0 %v2421
    %5572 = vmatmul.mubr.bf16.gmra.mxu0 %v2420
    %v5573 = vpop.f32.mrf.mxu0
    %v5574 = vadd.f32 %v5533, %v5573
    %v5575 = vpop.f32.mrf.mxu0
    %v5576 = vadd.f32 %v5535, %v5575
    %v5577 = vpop.f32.mrf.mxu0
    %v5578 = vpop.f32.mrf.mxu0
    %5579 = vdwg.mxu0
    %5580 = vmatprep.subr.bf16.mxu0 %v4787
    %5581 = vmatpush1.bf16.msra.mxu0 %v4786
    %5582 = vmatprep.subr.bf16.mxu0 %v4779
    %5583 = vmatpush1.bf16.msra.mxu0 %v4778
    %5584 = vmatprep.subr.bf16.mxu0 %v4771
    %5585 = vmatpush1.bf16.msra.mxu0 %v4770
    %5586 = vmatprep.subr.bf16.mxu0 %v4763
    %5587 = vmatpush1.bf16.msra.mxu0 %v4762
    %5588 = vmatprep.subr.bf16.mxu0 %v4755
    %5589 = vmatpush1.bf16.msra.mxu0 %v4754
    %5590 = vmatprep.subr.bf16.mxu0 %v4747
    %5591 = vmatpush1.bf16.msra.mxu0 %v4746
    %5592 = vmatprep.subr.bf16.mxu0 %v4739
    %5593 = vmatpush1.bf16.msra.mxu0 %v4738
    %5594 = vmatprep.subr.bf16.mxu0 %v4731
    %5595 = vmatpush1.bf16.msra.mxu0 %v4730
    %5596 = vmatprep.subr.bf16.mxu0 %v4851
    %5597 = vmatpush2.bf16.msra.mxu0 %v4850
    %5598 = vmatprep.subr.bf16.mxu0 %v4843
    %5599 = vmatpush2.bf16.msra.mxu0 %v4842
    %5600 = vmatprep.subr.bf16.mxu0 %v4835
    %5601 = vmatpush2.bf16.msra.mxu0 %v4834
    %5602 = vmatprep.subr.bf16.mxu0 %v4827
    %5603 = vmatpush2.bf16.msra.mxu0 %v4826
    %5604 = vmatprep.subr.bf16.mxu0 %v4819
    %5605 = vmatpush2.bf16.msra.mxu0 %v4818
    %5606 = vmatprep.subr.bf16.mxu0 %v4811
    %5607 = vmatpush2.bf16.msra.mxu0 %v4810
    %5608 = vmatprep.subr.bf16.mxu0 %v4803
    %5609 = vmatpush2.bf16.msra.mxu0 %v4802
    %5610 = vmatprep.subr.bf16.mxu0 %v4795
    %5611 = vmatpush2.bf16.msra.mxu0 %v4794
    %5612 = vmatprep.mubr.bf16.mxu0 %v2423
    %5613 = vmatmul.mubr.bf16.gmra.mxu0 %v2422
    %v5614 = vpop.f32.mrf.mxu0
    %v5615 = vadd.f32 %v5574, %v5614
    %v5616 = vpop.f32.mrf.mxu0
    %v5617 = vadd.f32 %v5576, %v5616
    %v5618 = vpop.f32.mrf.mxu0
    %v5619 = vpop.f32.mrf.mxu0
    %5620 = vdwg.mxu0
    %5621 = vmatprep.subr.bf16.mxu0 %v4915
    %5622 = vmatpush1.bf16.msra.mxu0 %v4914
    %5623 = vmatprep.subr.bf16.mxu0 %v4907
    %5624 = vmatpush1.bf16.msra.mxu0 %v4906
    %5625 = vmatprep.subr.bf16.mxu0 %v4899
    %5626 = vmatpush1.bf16.msra.mxu0 %v4898
    %5627 = vmatprep.subr.bf16.mxu0 %v4891
    %5628 = vmatpush1.bf16.msra.mxu0 %v4890
    %5629 = vmatprep.subr.bf16.mxu0 %v4883
    %5630 = vmatpush1.bf16.msra.mxu0 %v4882
    %5631 = vmatprep.subr.bf16.mxu0 %v4875
    %5632 = vmatpush1.bf16.msra.mxu0 %v4874
    %5633 = vmatprep.subr.bf16.mxu0 %v4867
    %5634 = vmatpush1.bf16.msra.mxu0 %v4866
    %5635 = vmatprep.subr.bf16.mxu0 %v4859
    %5636 = vmatpush1.bf16.msra.mxu0 %v4858
    %5637 = vmatprep.subr.bf16.mxu0 %v4979
    %5638 = vmatpush2.bf16.msra.mxu0 %v4978
    %5639 = vmatprep.subr.bf16.mxu0 %v4971
    %5640 = vmatpush2.bf16.msra.mxu0 %v4970
    %5641 = vmatprep.subr.bf16.mxu0 %v4963
    %5642 = vmatpush2.bf16.msra.mxu0 %v4962
    %5643 = vmatprep.subr.bf16.mxu0 %v4955
    %5644 = vmatpush2.bf16.msra.mxu0 %v4954
    %5645 = vmatprep.subr.bf16.mxu0 %v4947
    %5646 = vmatpush2.bf16.msra.mxu0 %v4946
    %5647 = vmatprep.subr.bf16.mxu0 %v4939
    %5648 = vmatpush2.bf16.msra.mxu0 %v4938
    %5649 = vmatprep.subr.bf16.mxu0 %v4931
    %5650 = vmatpush2.bf16.msra.mxu0 %v4930
    %5651 = vmatprep.subr.bf16.mxu0 %v4923
    %5652 = vmatpush2.bf16.msra.mxu0 %v4922
    %5653 = vmatprep.mubr.bf16.mxu0 %v2425
    %5654 = vmatmul.mubr.bf16.gmra.mxu0 %v2424
    %v5655 = vpop.f32.mrf.mxu0
    %v5656 = vadd.f32 %v5615, %v5655
    %v5657 = vpop.f32.mrf.mxu0
    %v5658 = vadd.f32 %v5617, %v5657
    %v5659 = vpop.f32.mrf.mxu0
    %v5660 = vpop.f32.mrf.mxu0
    %5661 = vdwg.mxu0
    %5662 = vmatprep.subr.bf16.mxu0 %v4533
    %5663 = vmatpush1.bf16.msra.mxu0 %v4532
    %5664 = vmatprep.subr.bf16.mxu0 %v4525
    %5665 = vmatpush1.bf16.msra.mxu0 %v4524
    %5666 = vmatprep.subr.bf16.mxu0 %v4517
    %5667 = vmatpush1.bf16.msra.mxu0 %v4516
    %5668 = vmatprep.subr.bf16.mxu0 %v4509
    %5669 = vmatpush1.bf16.msra.mxu0 %v4508
    %5670 = vmatprep.subr.bf16.mxu0 %v4501
    %5671 = vmatpush1.bf16.msra.mxu0 %v4500
    %5672 = vmatprep.subr.bf16.mxu0 %v4493
    %5673 = vmatpush1.bf16.msra.mxu0 %v4492
    %5674 = vmatprep.subr.bf16.mxu0 %v4485
    %5675 = vmatpush1.bf16.msra.mxu0 %v4484
    %5676 = vmatprep.subr.bf16.mxu0 %v4477
    %5677 = vmatpush1.bf16.msra.mxu0 %v4476
    %5678 = vmatprep.subr.bf16.mxu0 %v4597
    %5679 = vmatpush2.bf16.msra.mxu0 %v4596
    %5680 = vmatprep.subr.bf16.mxu0 %v4589
    %5681 = vmatpush2.bf16.msra.mxu0 %v4588
    %5682 = vmatprep.subr.bf16.mxu0 %v4581
    %5683 = vmatpush2.bf16.msra.mxu0 %v4580
    %5684 = vmatprep.subr.bf16.mxu0 %v4573
    %5685 = vmatpush2.bf16.msra.mxu0 %v4572
    %5686 = vmatprep.subr.bf16.mxu0 %v4565
    %5687 = vmatpush2.bf16.msra.mxu0 %v4564
    %5688 = vmatprep.subr.bf16.mxu0 %v4557
    %5689 = vmatpush2.bf16.msra.mxu0 %v4556
    %5690 = vmatprep.subr.bf16.mxu0 %v4549
    %5691 = vmatpush2.bf16.msra.mxu0 %v4548
    %5692 = vmatprep.subr.bf16.mxu0 %v4541
    %5693 = vmatpush2.bf16.msra.mxu0 %v4540
    %5694 = vmatprep.mubr.bf16.mxu0 %v2419
    %5695 = vmatmul.mubr.bf16.gmra.mxu0 %v2418
    %v5696 = vpop.f32.mrf.mxu0
    %v5697 = vadd.f32 0.0, %v5696
    %v5698 = vpop.f32.mrf.mxu0
    %v5699 = vadd.f32 0.0, %v5698
    %v5700 = vpop.f32.mrf.mxu0
    %v5701 = vpop.f32.mrf.mxu0
    %5702 = vdwg.mxu0
    %5703 = vmatprep.subr.bf16.mxu0 %v4661
    %5704 = vmatpush1.bf16.msra.mxu0 %v4660
    %5705 = vmatprep.subr.bf16.mxu0 %v4653
    %5706 = vmatpush1.bf16.msra.mxu0 %v4652
    %5707 = vmatprep.subr.bf16.mxu0 %v4645
    %5708 = vmatpush1.bf16.msra.mxu0 %v4644
    %5709 = vmatprep.subr.bf16.mxu0 %v4637
    %5710 = vmatpush1.bf16.msra.mxu0 %v4636
    %5711 = vmatprep.subr.bf16.mxu0 %v4629
    %5712 = vmatpush1.bf16.msra.mxu0 %v4628
    %5713 = vmatprep.subr.bf16.mxu0 %v4621
    %5714 = vmatpush1.bf16.msra.mxu0 %v4620
    %5715 = vmatprep.subr.bf16.mxu0 %v4613
    %5716 = vmatpush1.bf16.msra.mxu0 %v4612
    %5717 = vmatprep.subr.bf16.mxu0 %v4605
    %5718 = vmatpush1.bf16.msra.mxu0 %v4604
    %5719 = vmatprep.subr.bf16.mxu0 %v4725
    %5720 = vmatpush2.bf16.msra.mxu0 %v4724
    %5721 = vmatprep.subr.bf16.mxu0 %v4717
    %5722 = vmatpush2.bf16.msra.mxu0 %v4716
    %5723 = vmatprep.subr.bf16.mxu0 %v4709
    %5724 = vmatpush2.bf16.msra.mxu0 %v4708
    %5725 = vmatprep.subr.bf16.mxu0 %v4701
    %5726 = vmatpush2.bf16.msra.mxu0 %v4700
    %5727 = vmatprep.subr.bf16.mxu0 %v4693
    %5728 = vmatpush2.bf16.msra.mxu0 %v4692
    %5729 = vmatprep.subr.bf16.mxu0 %v4685
    %5730 = vmatpush2.bf16.msra.mxu0 %v4684
    %5731 = vmatprep.subr.bf16.mxu0 %v4677
    %5732 = vmatpush2.bf16.msra.mxu0 %v4676
    %5733 = vmatprep.subr.bf16.mxu0 %v4669
    %5734 = vmatpush2.bf16.msra.mxu0 %v4668
    %5735 = vmatprep.mubr.bf16.mxu0 %v2421
    %5736 = vmatmul.mubr.bf16.gmra.mxu0 %v2420
    %v5737 = vpop.f32.mrf.mxu0
    %v5738 = vadd.f32 %v5697, %v5737
    %v5739 = vpop.f32.mrf.mxu0
    %v5740 = vadd.f32 %v5699, %v5739
    %v5741 = vpop.f32.mrf.mxu0
    %v5742 = vpop.f32.mrf.mxu0
    %5743 = vdwg.mxu0
    %5744 = vmatprep.subr.bf16.mxu0 %v4789
    %5745 = vmatpush1.bf16.msra.mxu0 %v4788
    %5746 = vmatprep.subr.bf16.mxu0 %v4781
    %5747 = vmatpush1.bf16.msra.mxu0 %v4780
    %5748 = vmatprep.subr.bf16.mxu0 %v4773
    %5749 = vmatpush1.bf16.msra.mxu0 %v4772
    %5750 = vmatprep.subr.bf16.mxu0 %v4765
    %5751 = vmatpush1.bf16.msra.mxu0 %v4764
    %5752 = vmatprep.subr.bf16.mxu0 %v4757
    %5753 = vmatpush1.bf16.msra.mxu0 %v4756
    %5754 = vmatprep.subr.bf16.mxu0 %v4749
    %5755 = vmatpush1.bf16.msra.mxu0 %v4748
    %5756 = vmatprep.subr.bf16.mxu0 %v4741
    %5757 = vmatpush1.bf16.msra.mxu0 %v4740
    %5758 = vmatprep.subr.bf16.mxu0 %v4733
    %5759 = vmatpush1.bf16.msra.mxu0 %v4732
    %5760 = vmatprep.subr.bf16.mxu0 %v4853
    %5761 = vmatpush2.bf16.msra.mxu0 %v4852
    %5762 = vmatprep.subr.bf16.mxu0 %v4845
    %5763 = vmatpush2.bf16.msra.mxu0 %v4844
    %5764 = vmatprep.subr.bf16.mxu0 %v4837
    %5765 = vmatpush2.bf16.msra.mxu0 %v4836
    %5766 = vmatprep.subr.bf16.mxu0 %v4829
    %5767 = vmatpush2.bf16.msra.mxu0 %v4828
    %5768 = vmatprep.subr.bf16.mxu0 %v4821
    %5769 = vmatpush2.bf16.msra.mxu0 %v4820
    %5770 = vmatprep.subr.bf16.mxu0 %v4813
    %5771 = vmatpush2.bf16.msra.mxu0 %v4812
    %5772 = vmatprep.subr.bf16.mxu0 %v4805
    %5773 = vmatpush2.bf16.msra.mxu0 %v4804
    %5774 = vmatprep.subr.bf16.mxu0 %v4797
    %5775 = vmatpush2.bf16.msra.mxu0 %v4796
    %5776 = vmatprep.mubr.bf16.mxu0 %v2423
    %5777 = vmatmul.mubr.bf16.gmra.mxu0 %v2422
    %v5778 = vpop.f32.mrf.mxu0
    %v5779 = vadd.f32 %v5738, %v5778
    %v5780 = vpop.f32.mrf.mxu0
    %v5781 = vadd.f32 %v5740, %v5780
    %v5782 = vpop.f32.mrf.mxu0
    %v5783 = vpop.f32.mrf.mxu0
    %5784 = vdwg.mxu0
    %5785 = vmatprep.subr.bf16.mxu0 %v4917
    %5786 = vmatpush1.bf16.msra.mxu0 %v4916
    %5787 = vmatprep.subr.bf16.mxu0 %v4909
    %5788 = vmatpush1.bf16.msra.mxu0 %v4908
    %5789 = vmatprep.subr.bf16.mxu0 %v4901
    %5790 = vmatpush1.bf16.msra.mxu0 %v4900
    %5791 = vmatprep.subr.bf16.mxu0 %v4893
    %5792 = vmatpush1.bf16.msra.mxu0 %v4892
    %5793 = vmatprep.subr.bf16.mxu0 %v4885
    %5794 = vmatpush1.bf16.msra.mxu0 %v4884
    %5795 = vmatprep.subr.bf16.mxu0 %v4877
    %5796 = vmatpush1.bf16.msra.mxu0 %v4876
    %5797 = vmatprep.subr.bf16.mxu0 %v4869
    %5798 = vmatpush1.bf16.msra.mxu0 %v4868
    %5799 = vmatprep.subr.bf16.mxu0 %v4861
    %5800 = vmatpush1.bf16.msra.mxu0 %v4860
    %5801 = vmatprep.subr.bf16.mxu0 %v4981
    %5802 = vmatpush2.bf16.msra.mxu0 %v4980
    %5803 = vmatprep.subr.bf16.mxu0 %v4973
    %5804 = vmatpush2.bf16.msra.mxu0 %v4972
    %5805 = vmatprep.subr.bf16.mxu0 %v4965
    %5806 = vmatpush2.bf16.msra.mxu0 %v4964
    %5807 = vmatprep.subr.bf16.mxu0 %v4957
    %5808 = vmatpush2.bf16.msra.mxu0 %v4956
    %5809 = vmatprep.subr.bf16.mxu0 %v4949
    %5810 = vmatpush2.bf16.msra.mxu0 %v4948
    %5811 = vmatprep.subr.bf16.mxu0 %v4941
    %5812 = vmatpush2.bf16.msra.mxu0 %v4940
    %5813 = vmatprep.subr.bf16.mxu0 %v4933
    %5814 = vmatpush2.bf16.msra.mxu0 %v4932
    %5815 = vmatprep.subr.bf16.mxu0 %v4925
    %5816 = vmatpush2.bf16.msra.mxu0 %v4924
    %5817 = vmatprep.mubr.bf16.mxu0 %v2425
    %5818 = vmatmul.mubr.bf16.gmra.mxu0 %v2424
    %v5819 = vpop.f32.mrf.mxu0
    %v5820 = vadd.f32 %v5779, %v5819
    %v5821 = vpop.f32.mrf.mxu0
    %v5822 = vadd.f32 %v5781, %v5821
    %v5823 = vpop.f32.mrf.mxu0
    %v5824 = vpop.f32.mrf.mxu0
    %5825 = vdwg.mxu0
    %5826 = vmatprep.subr.bf16.mxu0 %v4535
    %5827 = vmatpush1.bf16.msra.mxu0 %v4534
    %5828 = vmatprep.subr.bf16.mxu0 %v4527
    %5829 = vmatpush1.bf16.msra.mxu0 %v4526
    %5830 = vmatprep.subr.bf16.mxu0 %v4519
    %5831 = vmatpush1.bf16.msra.mxu0 %v4518
    %5832 = vmatprep.subr.bf16.mxu0 %v4511
    %5833 = vmatpush1.bf16.msra.mxu0 %v4510
    %5834 = vmatprep.subr.bf16.mxu0 %v4503
    %5835 = vmatpush1.bf16.msra.mxu0 %v4502
    %5836 = vmatprep.subr.bf16.mxu0 %v4495
    %5837 = vmatpush1.bf16.msra.mxu0 %v4494
    %5838 = vmatprep.subr.bf16.mxu0 %v4487
    %5839 = vmatpush1.bf16.msra.mxu0 %v4486
    %5840 = vmatprep.subr.bf16.mxu0 %v4479
    %5841 = vmatpush1.bf16.msra.mxu0 %v4478
    %5842 = vmatprep.subr.bf16.mxu0 %v4599
    %5843 = vmatpush2.bf16.msra.mxu0 %v4598
    %5844 = vmatprep.subr.bf16.mxu0 %v4591
    %5845 = vmatpush2.bf16.msra.mxu0 %v4590
    %5846 = vmatprep.subr.bf16.mxu0 %v4583
    %5847 = vmatpush2.bf16.msra.mxu0 %v4582
    %5848 = vmatprep.subr.bf16.mxu0 %v4575
    %5849 = vmatpush2.bf16.msra.mxu0 %v4574
    %5850 = vmatprep.subr.bf16.mxu0 %v4567
    %5851 = vmatpush2.bf16.msra.mxu0 %v4566
    %5852 = vmatprep.subr.bf16.mxu0 %v4559
    %5853 = vmatpush2.bf16.msra.mxu0 %v4558
    %5854 = vmatprep.subr.bf16.mxu0 %v4551
    %5855 = vmatpush2.bf16.msra.mxu0 %v4550
    %5856 = vmatprep.subr.bf16.mxu0 %v4543
    %5857 = vmatpush2.bf16.msra.mxu0 %v4542
    %5858 = vmatprep.mubr.bf16.mxu0 %v2419
    %5859 = vmatmul.mubr.bf16.gmra.mxu0 %v2418
    %v5860 = vpop.f32.mrf.mxu0
    %v5861 = vadd.f32 0.0, %v5860
    %v5862 = vpop.f32.mrf.mxu0
    %v5863 = vadd.f32 0.0, %v5862
    %v5864 = vpop.f32.mrf.mxu0
    %v5865 = vpop.f32.mrf.mxu0
    %5866 = vdwg.mxu0
    %5867 = vmatprep.subr.bf16.mxu0 %v4663
    %5868 = vmatpush1.bf16.msra.mxu0 %v4662
    %5869 = vmatprep.subr.bf16.mxu0 %v4655
    %5870 = vmatpush1.bf16.msra.mxu0 %v4654
    %5871 = vmatprep.subr.bf16.mxu0 %v4647
    %5872 = vmatpush1.bf16.msra.mxu0 %v4646
    %5873 = vmatprep.subr.bf16.mxu0 %v4639
    %5874 = vmatpush1.bf16.msra.mxu0 %v4638
    %5875 = vmatprep.subr.bf16.mxu0 %v4631
    %5876 = vmatpush1.bf16.msra.mxu0 %v4630
    %5877 = vmatprep.subr.bf16.mxu0 %v4623
    %5878 = vmatpush1.bf16.msra.mxu0 %v4622
    %5879 = vmatprep.subr.bf16.mxu0 %v4615
    %5880 = vmatpush1.bf16.msra.mxu0 %v4614
    %5881 = vmatprep.subr.bf16.mxu0 %v4607
    %5882 = vmatpush1.bf16.msra.mxu0 %v4606
    %5883 = vmatprep.subr.bf16.mxu0 %v4727
    %5884 = vmatpush2.bf16.msra.mxu0 %v4726
    %5885 = vmatprep.subr.bf16.mxu0 %v4719
    %5886 = vmatpush2.bf16.msra.mxu0 %v4718
    %5887 = vmatprep.subr.bf16.mxu0 %v4711
    %5888 = vmatpush2.bf16.msra.mxu0 %v4710
    %5889 = vmatprep.subr.bf16.mxu0 %v4703
    %5890 = vmatpush2.bf16.msra.mxu0 %v4702
    %5891 = vmatprep.subr.bf16.mxu0 %v4695
    %5892 = vmatpush2.bf16.msra.mxu0 %v4694
    %5893 = vmatprep.subr.bf16.mxu0 %v4687
    %5894 = vmatpush2.bf16.msra.mxu0 %v4686
    %5895 = vmatprep.subr.bf16.mxu0 %v4679
    %5896 = vmatpush2.bf16.msra.mxu0 %v4678
    %5897 = vmatprep.subr.bf16.mxu0 %v4671
    %5898 = vmatpush2.bf16.msra.mxu0 %v4670
    %5899 = vmatprep.mubr.bf16.mxu0 %v2421
    %5900 = vmatmul.mubr.bf16.gmra.mxu0 %v2420
    %v5901 = vpop.f32.mrf.mxu0
    %v5902 = vadd.f32 %v5861, %v5901
    %v5903 = vpop.f32.mrf.mxu0
    %v5904 = vadd.f32 %v5863, %v5903
    %v5905 = vpop.f32.mrf.mxu0
    %v5906 = vpop.f32.mrf.mxu0
    %5907 = vdwg.mxu0
    %5908 = vmatprep.subr.bf16.mxu0 %v4791
    %5909 = vmatpush1.bf16.msra.mxu0 %v4790
    %5910 = vmatprep.subr.bf16.mxu0 %v4783
    %5911 = vmatpush1.bf16.msra.mxu0 %v4782
    %5912 = vmatprep.subr.bf16.mxu0 %v4775
    %5913 = vmatpush1.bf16.msra.mxu0 %v4774
    %5914 = vmatprep.subr.bf16.mxu0 %v4767
    %5915 = vmatpush1.bf16.msra.mxu0 %v4766
    %5916 = vmatprep.subr.bf16.mxu0 %v4759
    %5917 = vmatpush1.bf16.msra.mxu0 %v4758
    %5918 = vmatprep.subr.bf16.mxu0 %v4751
    %5919 = vmatpush1.bf16.msra.mxu0 %v4750
    %5920 = vmatprep.subr.bf16.mxu0 %v4743
    %5921 = vmatpush1.bf16.msra.mxu0 %v4742
    %5922 = vmatprep.subr.bf16.mxu0 %v4735
    %5923 = vmatpush1.bf16.msra.mxu0 %v4734
    %5924 = vmatprep.subr.bf16.mxu0 %v4855
    %5925 = vmatpush2.bf16.msra.mxu0 %v4854
    %5926 = vmatprep.subr.bf16.mxu0 %v4847
    %5927 = vmatpush2.bf16.msra.mxu0 %v4846
    %5928 = vmatprep.subr.bf16.mxu0 %v4839
    %5929 = vmatpush2.bf16.msra.mxu0 %v4838
    %5930 = vmatprep.subr.bf16.mxu0 %v4831
    %5931 = vmatpush2.bf16.msra.mxu0 %v4830
    %5932 = vmatprep.subr.bf16.mxu0 %v4823
    %5933 = vmatpush2.bf16.msra.mxu0 %v4822
    %5934 = vmatprep.subr.bf16.mxu0 %v4815
    %5935 = vmatpush2.bf16.msra.mxu0 %v4814
    %5936 = vmatprep.subr.bf16.mxu0 %v4807
    %5937 = vmatpush2.bf16.msra.mxu0 %v4806
    %5938 = vmatprep.subr.bf16.mxu0 %v4799
    %5939 = vmatpush2.bf16.msra.mxu0 %v4798
    %5940 = vmatprep.mubr.bf16.mxu0 %v2423
    %5941 = vmatmul.mubr.bf16.gmra.mxu0 %v2422
    %v5942 = vpop.f32.mrf.mxu0
    %v5943 = vadd.f32 %v5902, %v5942
    %v5944 = vpop.f32.mrf.mxu0
    %v5945 = vadd.f32 %v5904, %v5944
    %v5946 = vpop.f32.mrf.mxu0
    %v5947 = vpop.f32.mrf.mxu0
    %5948 = vdwg.mxu0
    %5949 = vmatprep.subr.bf16.mxu0 %v4919
    %5950 = vmatpush1.bf16.msra.mxu0 %v4918
    %5951 = vmatprep.subr.bf16.mxu0 %v4911
    %5952 = vmatpush1.bf16.msra.mxu0 %v4910
    %5953 = vmatprep.subr.bf16.mxu0 %v4903
    %5954 = vmatpush1.bf16.msra.mxu0 %v4902
    %5955 = vmatprep.subr.bf16.mxu0 %v4895
    %5956 = vmatpush1.bf16.msra.mxu0 %v4894
    %5957 = vmatprep.subr.bf16.mxu0 %v4887
    %5958 = vmatpush1.bf16.msra.mxu0 %v4886
    %5959 = vmatprep.subr.bf16.mxu0 %v4879
    %5960 = vmatpush1.bf16.msra.mxu0 %v4878
    %5961 = vmatprep.subr.bf16.mxu0 %v4871
    %5962 = vmatpush1.bf16.msra.mxu0 %v4870
    %5963 = vmatprep.subr.bf16.mxu0 %v4863
    %5964 = vmatpush1.bf16.msra.mxu0 %v4862
    %5965 = vmatprep.subr.bf16.mxu0 %v4983
    %5966 = vmatpush2.bf16.msra.mxu0 %v4982
    %5967 = vmatprep.subr.bf16.mxu0 %v4975
    %5968 = vmatpush2.bf16.msra.mxu0 %v4974
    %5969 = vmatprep.subr.bf16.mxu0 %v4967
    %5970 = vmatpush2.bf16.msra.mxu0 %v4966
    %5971 = vmatprep.subr.bf16.mxu0 %v4959
    %5972 = vmatpush2.bf16.msra.mxu0 %v4958
    %5973 = vmatprep.subr.bf16.mxu0 %v4951
    %5974 = vmatpush2.bf16.msra.mxu0 %v4950
    %5975 = vmatprep.subr.bf16.mxu0 %v4943
    %5976 = vmatpush2.bf16.msra.mxu0 %v4942
    %5977 = vmatprep.subr.bf16.mxu0 %v4935
    %5978 = vmatpush2.bf16.msra.mxu0 %v4934
    %5979 = vmatprep.subr.bf16.mxu0 %v4927
    %5980 = vmatpush2.bf16.msra.mxu0 %v4926
    %5981 = vmatprep.mubr.bf16.mxu0 %v2425
    %5982 = vmatmul.mubr.bf16.gmra.mxu0 %v2424
    %v5983 = vpop.f32.mrf.mxu0
    %v5984 = vadd.f32 %v5943, %v5983
    %v5985 = vpop.f32.mrf.mxu0
    %v5986 = vadd.f32 %v5945, %v5985
    %v5987 = vpop.f32.mrf.mxu0
    %v5988 = vpop.f32.mrf.mxu0
    %5989 = vdwg.mxu0
    %5990 = vmatprep.subr.bf16.mxu0 %v4537
    %5991 = vmatpush1.bf16.msra.mxu0 %v4536
    %5992 = vmatprep.subr.bf16.mxu0 %v4529
    %5993 = vmatpush1.bf16.msra.mxu0 %v4528
    %5994 = vmatprep.subr.bf16.mxu0 %v4521
    %5995 = vmatpush1.bf16.msra.mxu0 %v4520
    %5996 = vmatprep.subr.bf16.mxu0 %v4513
    %5997 = vmatpush1.bf16.msra.mxu0 %v4512
    %5998 = vmatprep.subr.bf16.mxu0 %v4505
    %5999 = vmatpush1.bf16.msra.mxu0 %v4504
    %6000 = vmatprep.subr.bf16.mxu0 %v4497
    %6001 = vmatpush1.bf16.msra.mxu0 %v4496
    %6002 = vmatprep.subr.bf16.mxu0 %v4489
    %6003 = vmatpush1.bf16.msra.mxu0 %v4488
    %6004 = vmatprep.subr.bf16.mxu0 %v4481
    %6005 = vmatpush1.bf16.msra.mxu0 %v4480
    %6006 = vmatprep.subr.bf16.mxu0 %v4601
    %6007 = vmatpush2.bf16.msra.mxu0 %v4600
    %6008 = vmatprep.subr.bf16.mxu0 %v4593
    %6009 = vmatpush2.bf16.msra.mxu0 %v4592
    %6010 = vmatprep.subr.bf16.mxu0 %v4585
    %6011 = vmatpush2.bf16.msra.mxu0 %v4584
    %6012 = vmatprep.subr.bf16.mxu0 %v4577
    %6013 = vmatpush2.bf16.msra.mxu0 %v4576
    %6014 = vmatprep.subr.bf16.mxu0 %v4569
    %6015 = vmatpush2.bf16.msra.mxu0 %v4568
    %6016 = vmatprep.subr.bf16.mxu0 %v4561
    %6017 = vmatpush2.bf16.msra.mxu0 %v4560
    %6018 = vmatprep.subr.bf16.mxu0 %v4553
    %6019 = vmatpush2.bf16.msra.mxu0 %v4552
    %6020 = vmatprep.subr.bf16.mxu0 %v4545
    %6021 = vmatpush2.bf16.msra.mxu0 %v4544
    %6022 = vmatprep.mubr.bf16.mxu0 %v2419
    %6023 = vmatmul.mubr.bf16.gmra.mxu0 %v2418
    %v6024 = vpop.f32.mrf.mxu0
    %v6025 = vadd.f32 0.0, %v6024
    %v6026 = vpop.f32.mrf.mxu0
    %v6027 = vadd.f32 0.0, %v6026
    %v6028 = vpop.f32.mrf.mxu0
    %v6029 = vpop.f32.mrf.mxu0
    %6030 = vdwg.mxu0
    %6031 = vmatprep.subr.bf16.mxu0 %v4665
    %6032 = vmatpush1.bf16.msra.mxu0 %v4664
    %6033 = vmatprep.subr.bf16.mxu0 %v4657
    %6034 = vmatpush1.bf16.msra.mxu0 %v4656
    %6035 = vmatprep.subr.bf16.mxu0 %v4649
    %6036 = vmatpush1.bf16.msra.mxu0 %v4648
    %6037 = vmatprep.subr.bf16.mxu0 %v4641
    %6038 = vmatpush1.bf16.msra.mxu0 %v4640
    %6039 = vmatprep.subr.bf16.mxu0 %v4633
    %6040 = vmatpush1.bf16.msra.mxu0 %v4632
    %6041 = vmatprep.subr.bf16.mxu0 %v4625
    %6042 = vmatpush1.bf16.msra.mxu0 %v4624
    %6043 = vmatprep.subr.bf16.mxu0 %v4617
    %6044 = vmatpush1.bf16.msra.mxu0 %v4616
    %6045 = vmatprep.subr.bf16.mxu0 %v4609
    %6046 = vmatpush1.bf16.msra.mxu0 %v4608
    %6047 = vmatprep.subr.bf16.mxu0 %v4729
    %6048 = vmatpush2.bf16.msra.mxu0 %v4728
    %6049 = vmatprep.subr.bf16.mxu0 %v4721
    %6050 = vmatpush2.bf16.msra.mxu0 %v4720
    %6051 = vmatprep.subr.bf16.mxu0 %v4713
    %6052 = vmatpush2.bf16.msra.mxu0 %v4712
    %6053 = vmatprep.subr.bf16.mxu0 %v4705
    %6054 = vmatpush2.bf16.msra.mxu0 %v4704
    %6055 = vmatprep.subr.bf16.mxu0 %v4697
    %6056 = vmatpush2.bf16.msra.mxu0 %v4696
    %6057 = vmatprep.subr.bf16.mxu0 %v4689
    %6058 = vmatpush2.bf16.msra.mxu0 %v4688
    %6059 = vmatprep.subr.bf16.mxu0 %v4681
    %6060 = vmatpush2.bf16.msra.mxu0 %v4680
    %6061 = vmatprep.subr.bf16.mxu0 %v4673
    %6062 = vmatpush2.bf16.msra.mxu0 %v4672
    %6063 = vmatprep.mubr.bf16.mxu0 %v2421
    %6064 = vmatmul.mubr.bf16.gmra.mxu0 %v2420
    %v6065 = vpop.f32.mrf.mxu0
    %v6066 = vadd.f32 %v6025, %v6065
    %v6067 = vpop.f32.mrf.mxu0
    %v6068 = vadd.f32 %v6027, %v6067
    %v6069 = vpop.f32.mrf.mxu0
    %v6070 = vpop.f32.mrf.mxu0
    %6071 = vdwg.mxu0
    %6072 = vmatprep.subr.bf16.mxu0 %v4793
    %6073 = vmatpush1.bf16.msra.mxu0 %v4792
    %6074 = vmatprep.subr.bf16.mxu0 %v4785
    %6075 = vmatpush1.bf16.msra.mxu0 %v4784
    %6076 = vmatprep.subr.bf16.mxu0 %v4777
    %6077 = vmatpush1.bf16.msra.mxu0 %v4776
    %6078 = vmatprep.subr.bf16.mxu0 %v4769
    %6079 = vmatpush1.bf16.msra.mxu0 %v4768
    %6080 = vmatprep.subr.bf16.mxu0 %v4761
    %6081 = vmatpush1.bf16.msra.mxu0 %v4760
    %6082 = vmatprep.subr.bf16.mxu0 %v4753
    %6083 = vmatpush1.bf16.msra.mxu0 %v4752
    %6084 = vmatprep.subr.bf16.mxu0 %v4745
    %6085 = vmatpush1.bf16.msra.mxu0 %v4744
    %6086 = vmatprep.subr.bf16.mxu0 %v4737
    %6087 = vmatpush1.bf16.msra.mxu0 %v4736
    %6088 = vmatprep.subr.bf16.mxu0 %v4857
    %6089 = vmatpush2.bf16.msra.mxu0 %v4856
    %6090 = vmatprep.subr.bf16.mxu0 %v4849
    %6091 = vmatpush2.bf16.msra.mxu0 %v4848
    %6092 = vmatprep.subr.bf16.mxu0 %v4841
    %6093 = vmatpush2.bf16.msra.mxu0 %v4840
    %6094 = vmatprep.subr.bf16.mxu0 %v4833
    %6095 = vmatpush2.bf16.msra.mxu0 %v4832
    %6096 = vmatprep.subr.bf16.mxu0 %v4825
    %6097 = vmatpush2.bf16.msra.mxu0 %v4824
    %6098 = vmatprep.subr.bf16.mxu0 %v4817
    %6099 = vmatpush2.bf16.msra.mxu0 %v4816
    %6100 = vmatprep.subr.bf16.mxu0 %v4809
    %6101 = vmatpush2.bf16.msra.mxu0 %v4808
    %6102 = vmatprep.subr.bf16.mxu0 %v4801
    %6103 = vmatpush2.bf16.msra.mxu0 %v4800
    %6104 = vmatprep.mubr.bf16.mxu0 %v2423
    %6105 = vmatmul.mubr.bf16.gmra.mxu0 %v2422
    %v6106 = vpop.f32.mrf.mxu0
    %v6107 = vadd.f32 %v6066, %v6106
    %v6108 = vpop.f32.mrf.mxu0
    %v6109 = vadd.f32 %v6068, %v6108
    %v6110 = vpop.f32.mrf.mxu0
    %v6111 = vpop.f32.mrf.mxu0
    %6112 = vdwg.mxu0
    %6113 = vmatprep.subr.bf16.mxu0 %v4921
    %6114 = vmatpush1.bf16.msra.mxu0 %v4920
    %6115 = vmatprep.subr.bf16.mxu0 %v4913
    %6116 = vmatpush1.bf16.msra.mxu0 %v4912
    %6117 = vmatprep.subr.bf16.mxu0 %v4905
    %6118 = vmatpush1.bf16.msra.mxu0 %v4904
    %6119 = vmatprep.subr.bf16.mxu0 %v4897
    %6120 = vmatpush1.bf16.msra.mxu0 %v4896
    %6121 = vmatprep.subr.bf16.mxu0 %v4889
    %6122 = vmatpush1.bf16.msra.mxu0 %v4888
    %6123 = vmatprep.subr.bf16.mxu0 %v4881
    %6124 = vmatpush1.bf16.msra.mxu0 %v4880
    %6125 = vmatprep.subr.bf16.mxu0 %v4873
    %6126 = vmatpush1.bf16.msra.mxu0 %v4872
    %6127 = vmatprep.subr.bf16.mxu0 %v4865
    %6128 = vmatpush1.bf16.msra.mxu0 %v4864
    %6129 = vmatprep.subr.bf16.mxu0 %v4985
    %6130 = vmatpush2.bf16.msra.mxu0 %v4984
    %6131 = vmatprep.subr.bf16.mxu0 %v4977
    %6132 = vmatpush2.bf16.msra.mxu0 %v4976
    %6133 = vmatprep.subr.bf16.mxu0 %v4969
    %6134 = vmatpush2.bf16.msra.mxu0 %v4968
    %6135 = vmatprep.subr.bf16.mxu0 %v4961
    %6136 = vmatpush2.bf16.msra.mxu0 %v4960
    %6137 = vmatprep.subr.bf16.mxu0 %v4953
    %6138 = vmatpush2.bf16.msra.mxu0 %v4952
    %6139 = vmatprep.subr.bf16.mxu0 %v4945
    %6140 = vmatpush2.bf16.msra.mxu0 %v4944
    %6141 = vmatprep.subr.bf16.mxu0 %v4937
    %6142 = vmatpush2.bf16.msra.mxu0 %v4936
    %6143 = vmatprep.subr.bf16.mxu0 %v4929
    %6144 = vmatpush2.bf16.msra.mxu0 %v4928
    %6145 = vmatprep.mubr.bf16.mxu0 %v2425
    %6146 = vmatmul.mubr.bf16.gmra.mxu0 %v2424
    %v6147 = vpop.f32.mrf.mxu0
    %v6148 = vadd.f32 %v6107, %v6147
    %v6149 = vpop.f32.mrf.mxu0
    %v6150 = vadd.f32 %v6109, %v6149
    %v6151 = vpop.f32.mrf.mxu0
    %v6152 = vpop.f32.mrf.mxu0
    %6153 = vdwg.mxu0
    %v6155 = vlaneseq
    %v6156 = vshrl.u32 %v6155, 7
    %v6157 = vsub.s32 0, %v6156
    %v6158 = vrot.slane %v2371, %v6157
    %v6159 = vlaneseq
    %v6160 = vshrl.u32 %v6159, 7
    %v6161 = vsub.s32 1, %v6160
    %v6162 = vrot.slane %v2371, %v6161
    %v6163 = vlaneseq
    %v6164 = vshrl.u32 %v6163, 7
    %v6165 = vsub.s32 2, %v6164
    %v6166 = vrot.slane %v2371, %v6165
    %v6167 = vlaneseq
    %v6168 = vshrl.u32 %v6167, 7
    %v6169 = vsub.s32 3, %v6168
    %v6170 = vrot.slane %v2371, %v6169
    %v6171 = vlaneseq
    %v6172 = vshrl.u32 %v6171, 7
    %v6173 = vsub.s32 4, %v6172
    %v6174 = vrot.slane %v2371, %v6173
    %v6175 = vlaneseq
    %v6176 = vshrl.u32 %v6175, 7
    %v6177 = vsub.s32 5, %v6176
    %v6178 = vrot.slane %v2371, %v6177
    %v6179 = vlaneseq
    %v6180 = vshrl.u32 %v6179, 7
    %v6181 = vsub.s32 6, %v6180
    %v6182 = vrot.slane %v2371, %v6181
    %v6183 = vlaneseq
    %v6184 = vshrl.u32 %v6183, 7
    %v6185 = vsub.s32 7, %v6184
    %v6186 = vrot.slane %v2371, %v6185
    %v6195 = vsub.f32 %v5656, %v6158
    %v6196 = vsub.f32 %v5658, %v6162
    %v6197 = vsub.f32 %v5820, %v6166
    %v6198 = vsub.f32 %v5822, %v6170
    %v6199 = vsub.f32 %v5984, %v6174
    %v6200 = vsub.f32 %v5986, %v6178
    %v6201 = vsub.f32 %v6148, %v6182
    %v6202 = vsub.f32 %v6150, %v6186
    %v6203 = vsel %vm1976, %v6195, 0.0
    %v6204 = vsel %vm1976, %v6196, 0.0
    %v6205 = vadd.f32 %v6203, %v6204
    %6206 = vadd.xlane.f32.xlu0 %v6205
    %v6207 = vpop.xlane.xlu0 %6206
    %v6208 = vrot.slane %v6207, 4
    %v6209 = vadd.f32 %v6207, %v6208
    %v6210 = vrot.slane %v6209, 2
    %v6211 = vadd.f32 %v6209, %v6210
    %v6212 = vrot.slane %v6211, 1
    %v6213 = vadd.f32 %v6211, %v6212
    %s6214 = vtos %v6213
    %v6215 = vstv %s6214
    %v6216 = vmul.f32 %v6215, %v2085
    %v6217 = vsub.f32 %v6195, %v6216
    %v6218 = vsub.f32 %v6196, %v6216
    %v6219 = vmul.f32 %v6217, %v6217
    %v6220 = vmul.f32 %v6218, %v6218
    %v6221 = vsel %vm1976, %v6219, 0.0
    %v6222 = vsel %vm1976, %v6220, 0.0
    %v6223 = vadd.f32 %v6221, %v6222
    %6224 = vadd.xlane.f32.xlu0 %v6223
    %v6225 = vpop.xlane.xlu0 %6224
    %v6226 = vrot.slane %v6225, 4
    %v6227 = vadd.f32 %v6225, %v6226
    %v6228 = vrot.slane %v6227, 2
    %v6229 = vadd.f32 %v6227, %v6228
    %v6230 = vrot.slane %v6229, 1
    %v6231 = vadd.f32 %v6229, %v6230
    %s6232 = vtos %v6231
    %v6233 = vstv %s6232
    %v6234 = vmul.f32 %v6233, %v2085
    %s6235 = sld [smem:[#allocation11 + $0x100]]
    %v6236 = vadd.f32 %v6234, 1e-05
    %v6237 = vrsqrt.pop %v6236
    %v6238 = vstv %s6235
    %v6239 = vmul.f32 %v6238, %v6237
    %v6240 = vmul.f32 %v6217, %v6239
    %v6241 = vmul.f32 %v6218, %v6239
    %s6242 = sld [smem:[#allocation11 + $0x180]]
    %v6243 = vstv %s6242
    %v6244 = vadd.f32 %v6240, %v6243
    %v6245 = vadd.f32 %v6241, %v6243
    %v6246 = vmax.f32 %v6244, 0.0
    %v6247 = vmax.f32 %v6245, 0.0
    %v6250 = vcombine.low %v6246, %v6247
    %v6252 = vunpack.c.l.s4 1983009808
    %v6253 = vunpack.c.0.s8 %v6252
    %v6254 = vlaneseq
    %v6255 = vshrl.u32 %v6254, 7
    %v6256 = vsub.s32 %v6253, %v6255
    %v6257 = vrot.slane %v6250, %v6256
    %6259 = vst [vmem:[%s6] sm:$0xf] %v6257
    %v6260 = vsel %vm1976, %v6197, 0.0
    %v6261 = vsel %vm1976, %v6198, 0.0
    %v6262 = vadd.f32 %v6260, %v6261
    %6263 = vadd.xlane.f32.xlu0 %v6262
    %v6264 = vpop.xlane.xlu0 %6263
    %v6265 = vrot.slane %v6264, 4
    %v6266 = vadd.f32 %v6264, %v6265
    %v6267 = vrot.slane %v6266, 2
    %v6268 = vadd.f32 %v6266, %v6267
    %v6269 = vrot.slane %v6268, 1
    %v6270 = vadd.f32 %v6268, %v6269
    %s6271 = vtos %v6270
    %v6272 = vstv %s6271
    %v6273 = vmul.f32 %v6272, %v2085
    %v6274 = vsub.f32 %v6197, %v6273
    %v6275 = vsub.f32 %v6198, %v6273
    %v6276 = vmul.f32 %v6274, %v6274
    %v6277 = vmul.f32 %v6275, %v6275
    %v6278 = vsel %vm1976, %v6276, 0.0
    %v6279 = vsel %vm1976, %v6277, 0.0
    %v6280 = vadd.f32 %v6278, %v6279
    %6281 = vadd.xlane.f32.xlu0 %v6280
    %v6282 = vpop.xlane.xlu0 %6281
    %v6283 = vrot.slane %v6282, 4
    %v6284 = vadd.f32 %v6282, %v6283
    %v6285 = vrot.slane %v6284, 2
    %v6286 = vadd.f32 %v6284, %v6285
    %v6287 = vrot.slane %v6286, 1
    %v6288 = vadd.f32 %v6286, %v6287
    %s6289 = vtos %v6288
    %v6290 = vstv %s6289
    %v6291 = vmul.f32 %v6290, %v2085
    %s6292 = sld [smem:[#allocation11 + $0x101]]
    %v6293 = vadd.f32 %v6291, 1e-05
    %v6294 = vrsqrt.pop %v6293
    %v6295 = vstv %s6292
    %v6296 = vmul.f32 %v6295, %v6294
    %v6297 = vmul.f32 %v6274, %v6296
    %v6298 = vmul.f32 %v6275, %v6296
    %s6299 = sld [smem:[#allocation11 + $0x181]]
    %v6300 = vstv %s6299
    %v6301 = vadd.f32 %v6297, %v6300
    %v6302 = vadd.f32 %v6298, %v6300
    %v6303 = vadd.f32 %v6301, %v94
    %v6304 = vadd.f32 %v6302, %v102
    %v6305 = vmax.f32 %v6303, 0.0
    %v6306 = vmax.f32 %v6304, 0.0
    %v6309 = vcombine.low %v6305, %v6306
    %v6311 = vunpack.c.l.s4 1983009808
    %v6312 = vunpack.c.0.s8 %v6311
    %v6313 = vlaneseq
    %v6314 = vshrl.u32 %v6313, 7
    %v6315 = vsub.s32 %v6312, %v6314
    %v6316 = vrot.slane %v6309, %v6315
    %6318 = vst [vmem:[%s6 + $0x4] sm:$0xf] %v6316
    %v6319 = vsel %vm1976, %v6199, 0.0
    %v6320 = vsel %vm1976, %v6200, 0.0
    %v6321 = vadd.f32 %v6319, %v6320
    %6322 = vadd.xlane.f32.xlu0 %v6321
    %v6323 = vpop.xlane.xlu0 %6322
    %v6324 = vrot.slane %v6323, 4
    %v6325 = vadd.f32 %v6323, %v6324
    %v6326 = vrot.slane %v6325, 2
    %v6327 = vadd.f32 %v6325, %v6326
    %v6328 = vrot.slane %v6327, 1
    %v6329 = vadd.f32 %v6327, %v6328
    %s6330 = vtos %v6329
    %v6331 = vstv %s6330
    %v6332 = vmul.f32 %v6331, %v2085
    %v6333 = vsub.f32 %v6199, %v6332
    %v6334 = vsub.f32 %v6200, %v6332
    %v6335 = vmul.f32 %v6333, %v6333
    %v6336 = vmul.f32 %v6334, %v6334
    %v6337 = vsel %vm1976, %v6335, 0.0
    %v6338 = vsel %vm1976, %v6336, 0.0
    %v6339 = vadd.f32 %v6337, %v6338
    %6340 = vadd.xlane.f32.xlu0 %v6339
    %v6341 = vpop.xlane.xlu0 %6340
    %v6342 = vrot.slane %v6341, 4
    %v6343 = vadd.f32 %v6341, %v6342
    %v6344 = vrot.slane %v6343, 2
    %v6345 = vadd.f32 %v6343, %v6344
    %v6346 = vrot.slane %v6345, 1
    %v6347 = vadd.f32 %v6345, %v6346
    %s6348 = vtos %v6347
    %v6349 = vstv %s6348
    %v6350 = vmul.f32 %v6349, %v2085
    %s6351 = sld [smem:[#allocation11 + $0x102]]
    %v6352 = vadd.f32 %v6350, 1e-05
    %v6353 = vrsqrt.pop %v6352
    %v6354 = vstv %s6351
    %v6355 = vmul.f32 %v6354, %v6353
    %v6356 = vmul.f32 %v6333, %v6355
    %v6357 = vmul.f32 %v6334, %v6355
    %s6358 = sld [smem:[#allocation11 + $0x182]]
    %v6359 = vstv %s6358
    %v6360 = vadd.f32 %v6356, %v6359
    %v6361 = vadd.f32 %v6357, %v6359
    %v6362 = vadd.f32 %v6360, %v101
    %v6363 = vadd.f32 %v6361, %v103
    %v6364 = vmax.f32 %v6362, 0.0
    %v6365 = vmax.f32 %v6363, 0.0
    %v6368 = vcombine.low %v6364, %v6365
    %v6370 = vunpack.c.l.s4 1983009808
    %v6371 = vunpack.c.0.s8 %v6370
    %v6372 = vlaneseq
    %v6373 = vshrl.u32 %v6372, 7
    %v6374 = vsub.s32 %v6371, %v6373
    %v6375 = vrot.slane %v6368, %v6374
    %6377 = vst [vmem:[%s6 + $0x8] sm:$0xf] %v6375
    %v6378 = vsel %vm1976, %v6201, 0.0
    %v6379 = vsel %vm1976, %v6202, 0.0
    %v6380 = vadd.f32 %v6378, %v6379
    %6381 = vadd.xlane.f32.xlu0 %v6380
    %v6382 = vpop.xlane.xlu0 %6381
    %v6383 = vrot.slane %v6382, 4
    %v6384 = vadd.f32 %v6382, %v6383
    %v6385 = vrot.slane %v6384, 2
    %v6386 = vadd.f32 %v6384, %v6385
    %v6387 = vrot.slane %v6386, 1
    %v6388 = vadd.f32 %v6386, %v6387
    %s6389 = vtos %v6388
    %v6390 = vstv %s6389
    %v6391 = vmul.f32 %v6390, %v2085
    %v6392 = vsub.f32 %v6201, %v6391
    %v6393 = vsub.f32 %v6202, %v6391
    %v6394 = vmul.f32 %v6392, %v6392
    %v6395 = vmul.f32 %v6393, %v6393
    %v6396 = vsel %vm1976, %v6394, 0.0
    %v6397 = vsel %vm1976, %v6395, 0.0
    %v6398 = vadd.f32 %v6396, %v6397
    %6399 = vadd.xlane.f32.xlu0 %v6398
    %v6400 = vpop.xlane.xlu0 %6399
    %v6401 = vrot.slane %v6400, 4
    %v6402 = vadd.f32 %v6400, %v6401
    %v6403 = vrot.slane %v6402, 2
    %v6404 = vadd.f32 %v6402, %v6403
    %v6405 = vrot.slane %v6404, 1
    %v6406 = vadd.f32 %v6404, %v6405
    %s6407 = vtos %v6406
    %v6408 = vstv %s6407
    %v6409 = vmul.f32 %v6408, %v2085
    %s6410 = sld [smem:[#allocation11 + $0x103]]
    %v6411 = vadd.f32 %v6409, 1e-05
    %v6412 = vrsqrt.pop %v6411
    %v6413 = vstv %s6410
    %v6414 = vmul.f32 %v6413, %v6412
    %v6415 = vmul.f32 %v6392, %v6414
    %v6416 = vmul.f32 %v6393, %v6414
    %s6417 = sld [smem:[#allocation11 + $0x183]]
    %v6418 = vstv %s6417
    %v6419 = vadd.f32 %v6415, %v6418
    %v6420 = vadd.f32 %v6416, %v6418
    %v6421 = vmax.f32 %v6419, 0.0
    %v6422 = vmax.f32 %v6420, 0.0
    %v6425 = vcombine.low %v6421, %v6422
    %v6427 = vunpack.c.l.s4 1983009808
    %v6428 = vunpack.c.0.s8 %v6427
    %v6429 = vlaneseq
    %v6430 = vshrl.u32 %v6429, 7
    %v6431 = vsub.s32 %v6428, %v6430
    %v6432 = vrot.slane %v6425, %v6431
    %6434 = vst [vmem:[%s6 + $0xc] sm:$0xf] %v6432
    // Predicated region
    $region46: #{poisson_basic_block.1} parent=1 // pred_check
      _
    $region47: #{poisson_basic_block.1} parent=1 // pred_check_branch
      %6436 = sbr.rel (0) target = $region49
    $region48: #{poisson_basic_block.1} parent=1 // pred_region
      _
    $region49: #{poisson_basic_block.1} parent=1 // pred_fallthru
      _
    // Predicated region
    $region50: #{poisson_basic_block.1} parent=1 // pred_check
      _
    $region51: #{poisson_basic_block.1} parent=1 // pred_check_branch
      %6438 = sbr.rel (0) target = $region53
    $region52: #{poisson_basic_block.1} parent=1 // pred_region
      _
    $region53: #{poisson_basic_block.1} parent=1 // pred_fallthru
      _
    %6439 = vsyncpa [#allocation4], 1
    %6440 = vsyncpa [#allocation7], 1
    %6441 = vsyncpa [#allocation10], 1
    %6442 = vsyncpa [#allocation5], 1

</llo_original>
